<compile_context>
chip_gen: v6e
topology: v6e:2x2x1
jax: 0.10.0
libtpu: 0.0.40
codegen_flags: <defaults>
</compile_context>

<pallas_src>
import functools

import jax
import jax.numpy as jnp
from jax.experimental import pallas as pl
from jax.experimental.pallas import tpu as pltpu


def _softmax_lanes(x):
    """Softmax over the last (lane) axis; denominator reciprocal on the EUP."""
    m = jnp.max(x, axis=-1, keepdims=True)
    e = jnp.exp(x - m)
    s = jnp.sum(e, axis=-1, keepdims=True)
    # numerics-visible micro-opt (feedback): approx reciprocal runs on the EUP slot.
    return e * pl.reciprocal(s, approx=True)


# ----------------------------------------------------------------------------
# Fused kernel: encoders + multi-head co-attention + layernorm + flatten +
# classifier head + log_softmax.  Single grid step; batch folded into sublane
# rows for every shared-weight matmul; (b, h) attention is a tiny static unroll.
# ----------------------------------------------------------------------------
def _fused_kernel(x_ref, y_ref,
                  mW_ref, mb_ref, sW_ref, sb_ref,
                  xpW_ref, xpb_ref, ypW_ref, ypb_ref,
                  g_ref, beta_ref,
                  w3_ref, b3_ref, w4_ref, b4_ref,
                  o_ref,
                  *, B, Sq, Sk, U, num_heads, head_dim):
    f32 = jnp.float32
    c = head_dim

    # --- encoders (batch folded into rows, one matmul per branch) ---
    xe = jnp.maximum(
        jnp.dot(x_ref[...], mW_ref[...], preferred_element_type=f32) + mb_ref[...],
        0.0)                                                             # (B*Sq, E)
    ye = jnp.maximum(
        jnp.dot(y_ref[...], sW_ref[...], preferred_element_type=f32) + sb_ref[...],
        0.0)                                                             # (B*Sk, E)

    # --- packed projections: xp = [Q | res_k](xe),  yp = [K*s | V | res_q](ye) ---
    # (the 1/sqrt(head_dim) score scale is folded into the K block host-side)
    xp = jnp.maximum(
        jnp.dot(xe, xpW_ref[...], preferred_element_type=f32) + xpb_ref[...], 0.0)  # (B*Sq, 2U)
    yp = jnp.maximum(
        jnp.dot(ye, ypW_ref[...], preferred_element_type=f32) + ypb_ref[...], 0.0)  # (B*Sk, 3U)

    # Hoisted transposes: exactly two XLU transposes in the whole kernel.
    qT = xp[:, 0:U].T                                   # (U, B*Sq)
    kT = yp[:, 0:U].T                                   # (U, B*Sk)

    z_blocks = []
    for b in range(B):                                  # B and num_heads tiny -> static unroll
        rq = slice(b * Sq, (b + 1) * Sq)
        rk = slice(b * Sk, (b + 1) * Sk)
        res_k = xp[rq, U:2 * U]                         # (Sq, U)  from the x/query branch
        res_q = yp[rk, 2 * U:3 * U]                     # (Sk, U)  from the y/value branch

        v_heads, q_heads = [], []
        for h in range(num_heads):
            hc = slice(h * c, (h + 1) * c)
            Qh  = xp[rq, hc]                            # (Sq, c)  unscaled (torch reuses Q_ in q_out)
            Kh  = yp[rk, hc]                            # (Sk, c)  pre-scaled by 1/sqrt(c)
            Vh  = yp[rk, U + h * c:U + (h + 1) * c]     # (Sk, c)
            KhT = kT[hc, rk]                            # (c, Sk)
            QhT = qT[hc, rq]                            # (c, Sq)

            w  = jnp.dot(Qh, KhT, preferred_element_type=f32)   # (Sq, Sk) scaled scores
            wT = jnp.dot(Kh, QhT, preferred_element_type=f32)   # (Sk, Sq) == w.T (canonical matmul)

            wk  = _softmax_lanes(w)    # torch softmax_k (dim=2, over keys)
            wqT = _softmax_lanes(wT)   # torch softmax_q (dim=1, over queries), already transposed

            v_heads.append(jnp.dot(wk,  Vh, preferred_element_type=f32))   # (Sq, c)
            q_heads.append(jnp.dot(wqT, Qh, preferred_element_type=f32))   # (Sk, c)

        v_out = jnp.concatenate(v_heads, axis=-1) + res_k       # (Sq, U)
        q_out = jnp.concatenate(q_heads, axis=-1) + res_q       # (Sk, U)  (Sq == Sk required)
        outputs = jnp.maximum(v_out + q_out, 0.0)

        # LayerNorm over num_units, eps = 1e-5
        mean = jnp.mean(outputs, axis=-1, keepdims=True)
        var = jnp.mean((outputs - mean) ** 2, axis=-1, keepdims=True)
        z_b = (outputs - mean) * jax.lax.rsqrt(var + 1e-5) * g_ref[...] + beta_ref[...]
        z_blocks.append(z_b)                                     # (Sq, U)

    z_all = jnp.concatenate(z_blocks, axis=0)                    # (B*Sq, U), row b*Sq+i == z[b,i,:]

    # --- torch z.reshape(B, Sq*U) with values only (no masked stores, no scratch) ---
    # zbig[r, ip*U + u] = z_all[r, u] if (r mod Sq) == ip else 0   (block-diagonal spread)
    # zflat = pool @ zbig sums the Sq rows of each batch -> exact torch row-major flatten.
    i_idx = jnp.concatenate(
        [jax.lax.broadcasted_iota(jnp.int32, (Sq, U), 0)] * B, axis=0)      # (B*Sq, U), value i
    zbig = jnp.concatenate(
        [jnp.where(i_idx == ip, z_all, 0.0) for ip in range(Sq)], axis=1)   # (B*Sq, Sq*U)
    colr = jax.lax.broadcasted_iota(jnp.int32, (B, B * Sq), 1)
    rowr = jax.lax.broadcasted_iota(jnp.int32, (B, B * Sq), 0)
    pool = jnp.where((colr >= rowr * Sq) & (colr < (rowr + 1) * Sq), 1.0, 0.0)  # (B, B*Sq) 0/1
    zflat = jnp.dot(pool, zbig, preferred_element_type=f32)                 # (B, Sq*U)

    # --- classifier head (nn.Dropout(0.2) is identity in eval mode) ---
    h1 = jnp.maximum(
        jnp.dot(zflat, w3_ref[...], preferred_element_type=f32) + b3_ref[...], 0.0)  # (B, hidden)
    logits = jnp.dot(h1, w4_ref[...], preferred_element_type=f32) + b4_ref[...]      # (B, out_dim)
    m = jnp.max(logits, axis=-1, keepdims=True)
    lse = m + jnp.log(jnp.sum(jnp.exp(logits - m), axis=-1, keepdims=True))
    o_ref[...] = logits - lse                 # log_softmax(dim=1)


# ----------------------------------------------------------------------------
# Wrapper
# ----------------------------------------------------------------------------
def pack_params(params, *, num_heads):
    """One-time host-side weight packing: [Q|res_k], [K*s|V|res_q] (s = 1/sqrt(head_dim))."""
    U = params["Q_W"].shape[1]
    head_dim = U // num_heads
    s = 1.0 / float(head_dim) ** 0.5          # folded into K (NOT Q: Q_ is reused in q_out)
    return dict(
        meth_W=params["meth_W"], meth_b=params["meth_b"],
        spect_W=params["spect_W"], spect_b=params["spect_b"],
        xproj_W=jnp.concatenate([params["Q_W"], params["res_k_W"]], axis=1),
        xproj_b=jnp.concatenate([params["Q_b"], params["res_k_b"]], axis=1),
        yproj_W=jnp.concatenate([params["K_W"] * s, params["V_W"], params["res_q_W"]], axis=1),
        yproj_b=jnp.concatenate([params["K_b"] * s, params["V_b"], params["res_q_b"]], axis=1),
        ln_g=params["ln_g"], ln_b=params["ln_b"],
        h1_W=params["h1_W"], h1_b=params["h1_b"],
        out_W=params["out_W"], out_b=params["out_b"],
    )


def meth_spect_integrator(x_meth, y_spect, packed, *, num_heads):
    B, Sq, Dm = x_meth.shape
    _, Cin, D, H, W = y_spect.shape
    Sk = D * H * W
    assert Sk == Sq, "co-attention requires seq(x) == seq(y) for the residual add"
    E = packed["meth_W"].shape[1]
    U = packed["xproj_W"].shape[1] // 2
    hidden = packed["h1_W"].shape[1]
    out_dim = packed["out_W"].shape[1]
    head_dim = U // num_heads

    # Host-side glue only: contiguous reshapes + one tiny (2 KiB) transpose so the
    # pointwise Conv3d becomes a single batch-folded matmul inside the kernel.
    x2d = x_meth.reshape(B * Sq, Dm)                                          # (B*Sq, Dm)
    y2d = y_spect.reshape(B, Cin, Sk).transpose(0, 2, 1).reshape(B * Sk, Cin)  # (B*Sk, Cin)

    weight_order = ["meth_W", "meth_b", "spect_W", "spect_b",
                    "xproj_W", "xproj_b", "yproj_W", "yproj_b",
                    "ln_g", "ln_b", "h1_W", "h1_b", "out_W", "out_b"]
    args = [x2d, y2d] + [packed[k] for k in weight_order]

    def full_spec(a):
        nd = a.ndim
        return pl.BlockSpec(a.shape, lambda i, _nd=nd: (0,) * _nd)

    c = head_dim
    flops = (2 * B * (Sq * Dm * E + Sk * Cin * E + Sq * E * 2 * U + Sk * E * 3 * U)
             + 8 * B * num_heads * Sq * Sk * c
             + 2 * B * (B * Sq * Sq * U + Sq * U * hidden + hidden * out_dim))
    transcendentals = 2 * B * num_heads * Sq * Sk + B * (Sq + out_dim)
    bytes_accessed = sum(int(a.size) * a.dtype.itemsize for a in args) + B * out_dim * 4

    kern = functools.partial(_fused_kernel, B=B, Sq=Sq, Sk=Sk, U=U,
                             num_heads=num_heads, head_dim=head_dim)

    return pl.pallas_call(
        kern,
        out_shape=jax.ShapeDtypeStruct((B, out_dim), jnp.float32),
        grid_spec=pltpu.PrefetchScalarGridSpec(
            num_scalar_prefetch=0,
            grid=(1,),                               # one fat invocation; everything fits in VMEM
            in_specs=[full_spec(a) for a in args],
            out_specs=pl.BlockSpec((B, out_dim), lambda i: (0, 0)),
        ),
        compiler_params=pltpu.CompilerParams(dimension_semantics=("arbitrary",)),
        cost_estimate=pl.CostEstimate(flops=flops, transcendentals=transcendentals,
                                      bytes_accessed=bytes_accessed),
    )(*args)


# ----------------------------------------------------------------------------
# Deterministic synthetic parameters (module-shaped; packed once before use)
# ----------------------------------------------------------------------------
def init_params(key, *, Dm, Cin, E, U, Sq, hidden, out_dim):
    ks = jax.random.split(key, 9)

    def w(k, shape):
        fan_in = shape[0]
        return (jax.random.normal(k, shape, jnp.float32) / jnp.sqrt(fan_in)).astype(jnp.float32)

    def b(shape):
        return jnp.full(shape, 0.01, jnp.float32)

    return dict(
        meth_W=w(ks[0], (Dm, E)),      meth_b=b((1, E)),
        spect_W=w(ks[1], (Cin, E)),    spect_b=b((1, E)),
        Q_W=w(ks[2], (E, U)),          Q_b=b((1, U)),
        K_W=w(ks[3], (E, U)),          K_b=b((1, U)),
        V_W=w(ks[4], (E, U)),          V_b=b((1, U)),
        res_k_W=w(ks[5], (E, U)),      res_k_b=b((1, U)),
        res_q_W=w(ks[6], (E, U)),      res_q_b=b((1, U)),
        ln_g=jnp.ones((1, U), jnp.float32),
        ln_b=jnp.zeros((1, U), jnp.float32),
        h1_W=w(ks[7], (Sq * U, hidden)), h1_b=b((1, hidden)),
        out_W=w(ks[8], (hidden, out_dim)), out_b=jnp.zeros((1, out_dim), jnp.float32),
    )


if __name__ == "__main__":
    # Shapes consistent with the module: feature_size=16, embedding_size=32,
    # block_shape(num_units)=32, num_heads=2, hidden_dim=32, classification -> output_dim=2.
    B, Sq, Dm = 2, 16, 8
    Cin, D, H, W = 4, 4, 2, 2                 # D*H*W = 16 = feature_size
    E, U, heads, hidden, out_dim = 32, 32, 2, 32, 2

    key = jax.random.PRNGKey(0)
    kx, ky, kp = jax.random.split(key, 3)
    x_meth = jax.random.normal(kx, (B, Sq, Dm), jnp.float32)
    y_spect = jax.random.normal(ky, (B, Cin, D, H, W), jnp.float32)
    params = init_params(kp, Dm=Dm, Cin=Cin, E=E, U=U, Sq=Sq,
                         hidden=hidden, out_dim=out_dim)
    packed = pack_params(params, num_heads=heads)     # one-time weight packing + scale fold

    fwd = jax.jit(functools.partial(meth_spect_integrator, num_heads=heads))
    out = fwd(x_meth, y_spect, packed)
    jax.block_until_ready(out)
    assert out.shape == (B, out_dim) and out.dtype == jnp.float32
    assert bool(jnp.all(jnp.isfinite(out)))
    print("KERNEL_OK")
</pallas_src>

<mosaic_0001>
module attributes {stable_mosaic.version = 11 : i64} {
  func.func @_fused_kernel(%arg0: i32, %arg1: memref<32x8xf32, #tpu.memory_space<vmem>>, %arg2: memref<32x4xf32, #tpu.memory_space<vmem>>, %arg3: memref<8x32xf32, #tpu.memory_space<vmem>>, %arg4: memref<1x32xf32, #tpu.memory_space<vmem>>, %arg5: memref<4x32xf32, #tpu.memory_space<vmem>>, %arg6: memref<1x32xf32, #tpu.memory_space<vmem>>, %arg7: memref<32x64xf32, #tpu.memory_space<vmem>>, %arg8: memref<1x64xf32, #tpu.memory_space<vmem>>, %arg9: memref<32x96xf32, #tpu.memory_space<vmem>>, %arg10: memref<1x96xf32, #tpu.memory_space<vmem>>, %arg11: memref<1x32xf32, #tpu.memory_space<vmem>>, %arg12: memref<1x32xf32, #tpu.memory_space<vmem>>, %arg13: memref<512x32xf32, #tpu.memory_space<vmem>>, %arg14: memref<1x32xf32, #tpu.memory_space<vmem>>, %arg15: memref<32x2xf32, #tpu.memory_space<vmem>>, %arg16: memref<1x2xf32, #tpu.memory_space<vmem>>, %arg17: memref<2x2xf32, #tpu.memory_space<vmem>>) attributes {dimension_semantics = [#tpu.dimension_semantics<arbitrary>], iteration_bounds = array<i64: 1>, scalar_prefetch = 0 : i64, scratch_operands = 0 : i64, tpu.core_type = #tpu.core_type<tc>, window_params = [{pipeline_mode = #tpu.pipeline_mode<synchronous>, transform_indices = @transform_0, window_bounds = array<i64: 32, 8>}, {pipeline_mode = #tpu.pipeline_mode<synchronous>, transform_indices = @transform_1, window_bounds = array<i64: 32, 4>}, {pipeline_mode = #tpu.pipeline_mode<synchronous>, transform_indices = @transform_2, window_bounds = array<i64: 8, 32>}, {pipeline_mode = #tpu.pipeline_mode<synchronous>, transform_indices = @transform_3, window_bounds = array<i64: 1, 32>}, {pipeline_mode = #tpu.pipeline_mode<synchronous>, transform_indices = @transform_4, window_bounds = array<i64: 4, 32>}, {pipeline_mode = #tpu.pipeline_mode<synchronous>, transform_indices = @transform_5, window_bounds = array<i64: 1, 32>}, {pipeline_mode = #tpu.pipeline_mode<synchronous>, transform_indices = @transform_6, window_bounds = array<i64: 32, 64>}, {pipeline_mode = #tpu.pipeline_mode<synchronous>, transform_indices = @transform_7, window_bounds = array<i64: 1, 64>}, {pipeline_mode = #tpu.pipeline_mode<synchronous>, transform_indices = @transform_8, window_bounds = array<i64: 32, 96>}, {pipeline_mode = #tpu.pipeline_mode<synchronous>, transform_indices = @transform_9, window_bounds = array<i64: 1, 96>}, {pipeline_mode = #tpu.pipeline_mode<synchronous>, transform_indices = @transform_10, window_bounds = array<i64: 1, 32>}, {pipeline_mode = #tpu.pipeline_mode<synchronous>, transform_indices = @transform_11, window_bounds = array<i64: 1, 32>}, {pipeline_mode = #tpu.pipeline_mode<synchronous>, transform_indices = @transform_12, window_bounds = array<i64: 512, 32>}, {pipeline_mode = #tpu.pipeline_mode<synchronous>, transform_indices = @transform_13, window_bounds = array<i64: 1, 32>}, {pipeline_mode = #tpu.pipeline_mode<synchronous>, transform_indices = @transform_14, window_bounds = array<i64: 32, 2>}, {pipeline_mode = #tpu.pipeline_mode<synchronous>, transform_indices = @transform_15, window_bounds = array<i64: 1, 2>}, {pipeline_mode = #tpu.pipeline_mode<synchronous>, transform_indices = @transform_16, window_bounds = array<i64: 2, 2>}]} {
    %c0 = arith.constant 0 : index
    %c0_0 = arith.constant 0 : index
    %0 = vector.load %arg1[%c0, %c0_0] : memref<32x8xf32, #tpu.memory_space<vmem>>, vector<32x8xf32>
    %c0_1 = arith.constant 0 : index
    %c0_2 = arith.constant 0 : index
    %1 = vector.load %arg3[%c0_1, %c0_2] : memref<8x32xf32, #tpu.memory_space<vmem>>, vector<8x32xf32>
    %cst = arith.constant dense<0.000000e+00> : vector<32x32xf32>
    %2 = tpu.matmul %0, %1, %cst {dimension_numbers = #tpu.dot_dimension_numbers<[1], [0], [0], [1], [0, 0, 1, 1], [], []>} : vector<32x8xf32>, vector<8x32xf32>, vector<32x32xf32> -> vector<32x32xf32>
    %c0_3 = arith.constant 0 : index
    %c0_4 = arith.constant 0 : index
    %3 = vector.load %arg4[%c0_3, %c0_4] : memref<1x32xf32, #tpu.memory_space<vmem>>, vector<1x32xf32>
    %4 = vector.broadcast %3 : vector<1x32xf32> to vector<32x32xf32>
    %5 = arith.addf %2, %4 : vector<32x32xf32>
    %cst_5 = arith.constant 0.000000e+00 : f32
    %6 = vector.broadcast %cst_5 : f32 to vector<32x32xf32>
    %7 = arith.maximumf %5, %6 : vector<32x32xf32>
    %c0_6 = arith.constant 0 : index
    %c0_7 = arith.constant 0 : index
    %8 = vector.load %arg2[%c0_6, %c0_7] : memref<32x4xf32, #tpu.memory_space<vmem>>, vector<32x4xf32>
    %c0_8 = arith.constant 0 : index
    %c0_9 = arith.constant 0 : index
    %9 = vector.load %arg5[%c0_8, %c0_9] : memref<4x32xf32, #tpu.memory_space<vmem>>, vector<4x32xf32>
    %cst_10 = arith.constant dense<0.000000e+00> : vector<32x32xf32>
    %10 = tpu.matmul %8, %9, %cst_10 {dimension_numbers = #tpu.dot_dimension_numbers<[1], [0], [0], [1], [0, 0, 1, 1], [], []>} : vector<32x4xf32>, vector<4x32xf32>, vector<32x32xf32> -> vector<32x32xf32>
    %c0_11 = arith.constant 0 : index
    %c0_12 = arith.constant 0 : index
    %11 = vector.load %arg6[%c0_11, %c0_12] : memref<1x32xf32, #tpu.memory_space<vmem>>, vector<1x32xf32>
    %12 = vector.broadcast %11 : vector<1x32xf32> to vector<32x32xf32>
    %13 = arith.addf %10, %12 : vector<32x32xf32>
    %cst_13 = arith.constant 0.000000e+00 : f32
    %14 = vector.broadcast %cst_13 : f32 to vector<32x32xf32>
    %15 = arith.maximumf %13, %14 : vector<32x32xf32>
    %c0_14 = arith.constant 0 : index
    %c0_15 = arith.constant 0 : index
    %16 = vector.load %arg7[%c0_14, %c0_15] : memref<32x64xf32, #tpu.memory_space<vmem>>, vector<32x64xf32>
    %cst_16 = arith.constant dense<0.000000e+00> : vector<32x64xf32>
    %17 = tpu.matmul %7, %16, %cst_16 {dimension_numbers = #tpu.dot_dimension_numbers<[1], [0], [0], [1], [0, 0, 1, 1], [], []>} : vector<32x32xf32>, vector<32x64xf32>, vector<32x64xf32> -> vector<32x64xf32>
    %c0_17 = arith.constant 0 : index
    %c0_18 = arith.constant 0 : index
    %18 = vector.load %arg8[%c0_17, %c0_18] : memref<1x64xf32, #tpu.memory_space<vmem>>, vector<1x64xf32>
    %19 = vector.broadcast %18 : vector<1x64xf32> to vector<32x64xf32>
    %20 = arith.addf %17, %19 : vector<32x64xf32>
    %cst_19 = arith.constant 0.000000e+00 : f32
    %21 = vector.broadcast %cst_19 : f32 to vector<32x64xf32>
    %22 = arith.maximumf %20, %21 : vector<32x64xf32>
    %c0_20 = arith.constant 0 : index
    %c0_21 = arith.constant 0 : index
    %23 = vector.load %arg9[%c0_20, %c0_21] : memref<32x96xf32, #tpu.memory_space<vmem>>, vector<32x96xf32>
    %cst_22 = arith.constant dense<0.000000e+00> : vector<32x96xf32>
    %24 = tpu.matmul %15, %23, %cst_22 {dimension_numbers = #tpu.dot_dimension_numbers<[1], [0], [0], [1], [0, 0, 1, 1], [], []>} : vector<32x32xf32>, vector<32x96xf32>, vector<32x96xf32> -> vector<32x96xf32>
    %c0_23 = arith.constant 0 : index
    %c0_24 = arith.constant 0 : index
    %25 = vector.load %arg10[%c0_23, %c0_24] : memref<1x96xf32, #tpu.memory_space<vmem>>, vector<1x96xf32>
    %26 = vector.broadcast %25 : vector<1x96xf32> to vector<32x96xf32>
    %27 = arith.addf %24, %26 : vector<32x96xf32>
    %cst_25 = arith.constant 0.000000e+00 : f32
    %28 = vector.broadcast %cst_25 : f32 to vector<32x96xf32>
    %29 = arith.maximumf %27, %28 : vector<32x96xf32>
    %30 = vector.extract_strided_slice %22 {offsets = [0, 0], sizes = [32, 32], strides = [1, 1]} : vector<32x64xf32> to vector<32x32xf32>
    %31 = tpu.transpose %30, [1, 0] : vector<32x32xf32> -> vector<32x32xf32>
    %32 = vector.extract_strided_slice %29 {offsets = [0, 0], sizes = [32, 32], strides = [1, 1]} : vector<32x96xf32> to vector<32x32xf32>
    %33 = tpu.transpose %32, [1, 0] : vector<32x32xf32> -> vector<32x32xf32>
    %34 = vector.extract_strided_slice %22 {offsets = [0, 32], sizes = [16, 32], strides = [1, 1]} : vector<32x64xf32> to vector<16x32xf32>
    %35 = vector.extract_strided_slice %29 {offsets = [0, 64], sizes = [16, 32], strides = [1, 1]} : vector<32x96xf32> to vector<16x32xf32>
    %36 = vector.extract_strided_slice %22 {offsets = [0, 0], sizes = [16, 16], strides = [1, 1]} : vector<32x64xf32> to vector<16x16xf32>
    %37 = vector.extract_strided_slice %29 {offsets = [0, 0], sizes = [16, 16], strides = [1, 1]} : vector<32x96xf32> to vector<16x16xf32>
    %38 = vector.extract_strided_slice %29 {offsets = [0, 32], sizes = [16, 16], strides = [1, 1]} : vector<32x96xf32> to vector<16x16xf32>
    %39 = vector.extract_strided_slice %33 {offsets = [0, 0], sizes = [16, 16], strides = [1, 1]} : vector<32x32xf32> to vector<16x16xf32>
    %40 = vector.extract_strided_slice %31 {offsets = [0, 0], sizes = [16, 16], strides = [1, 1]} : vector<32x32xf32> to vector<16x16xf32>
    %cst_26 = arith.constant dense<0.000000e+00> : vector<16x16xf32>
    %41 = tpu.matmul %36, %39, %cst_26 {dimension_numbers = #tpu.dot_dimension_numbers<[1], [0], [0], [1], [0, 0, 1, 1], [], []>} : vector<16x16xf32>, vector<16x16xf32>, vector<16x16xf32> -> vector<16x16xf32>
    %cst_27 = arith.constant dense<0.000000e+00> : vector<16x16xf32>
    %42 = tpu.matmul %37, %40, %cst_27 {dimension_numbers = #tpu.dot_dimension_numbers<[1], [0], [0], [1], [0, 0, 1, 1], [], []>} : vector<16x16xf32>, vector<16x16xf32>, vector<16x16xf32> -> vector<16x16xf32>
    %cst_28 = arith.constant dense<0xFF800000> : vector<16xf32>
    %43 = vector.multi_reduction <maximumf>, %41, %cst_28 [1] : vector<16x16xf32> to vector<16xf32>
    %44 = vector.shape_cast %43 : vector<16xf32> to vector<16x1xf32>
    %45 = vector.broadcast %44 : vector<16x1xf32> to vector<16x16xf32>
    %46 = arith.subf %41, %45 : vector<16x16xf32>
    %47 = math.exp %46 : vector<16x16xf32>
    %cst_29 = arith.constant dense<0.000000e+00> : vector<16xf32>
    %48 = vector.multi_reduction <add>, %47, %cst_29 [1] : vector<16x16xf32> to vector<16xf32>
    %49 = vector.shape_cast %48 : vector<16xf32> to vector<16x1xf32>
    %50 = tpu.reciprocal %49 {approx = true} : vector<16x1xf32> -> vector<16x1xf32>
    %51 = vector.broadcast %50 : vector<16x1xf32> to vector<16x16xf32>
    %52 = arith.mulf %47, %51 : vector<16x16xf32>
    %cst_30 = arith.constant dense<0xFF800000> : vector<16xf32>
    %53 = vector.multi_reduction <maximumf>, %42, %cst_30 [1] : vector<16x16xf32> to vector<16xf32>
    %54 = vector.shape_cast %53 : vector<16xf32> to vector<16x1xf32>
    %55 = vector.broadcast %54 : vector<16x1xf32> to vector<16x16xf32>
    %56 = arith.subf %42, %55 : vector<16x16xf32>
    %57 = math.exp %56 : vector<16x16xf32>
    %cst_31 = arith.constant dense<0.000000e+00> : vector<16xf32>
    %58 = vector.multi_reduction <add>, %57, %cst_31 [1] : vector<16x16xf32> to vector<16xf32>
    %59 = vector.shape_cast %58 : vector<16xf32> to vector<16x1xf32>
    %60 = tpu.reciprocal %59 {approx = true} : vector<16x1xf32> -> vector<16x1xf32>
    %61 = vector.broadcast %60 : vector<16x1xf32> to vector<16x16xf32>
    %62 = arith.mulf %57, %61 : vector<16x16xf32>
    %cst_32 = arith.constant dense<0.000000e+00> : vector<16x16xf32>
    %63 = tpu.matmul %52, %38, %cst_32 {dimension_numbers = #tpu.dot_dimension_numbers<[1], [0], [0], [1], [0, 0, 1, 1], [], []>} : vector<16x16xf32>, vector<16x16xf32>, vector<16x16xf32> -> vector<16x16xf32>
    %cst_33 = arith.constant dense<0.000000e+00> : vector<16x16xf32>
    %64 = tpu.matmul %62, %36, %cst_33 {dimension_numbers = #tpu.dot_dimension_numbers<[1], [0], [0], [1], [0, 0, 1, 1], [], []>} : vector<16x16xf32>, vector<16x16xf32>, vector<16x16xf32> -> vector<16x16xf32>
    %65 = vector.extract_strided_slice %22 {offsets = [0, 16], sizes = [16, 16], strides = [1, 1]} : vector<32x64xf32> to vector<16x16xf32>
    %66 = vector.extract_strided_slice %29 {offsets = [0, 16], sizes = [16, 16], strides = [1, 1]} : vector<32x96xf32> to vector<16x16xf32>
    %67 = vector.extract_strided_slice %29 {offsets = [0, 48], sizes = [16, 16], strides = [1, 1]} : vector<32x96xf32> to vector<16x16xf32>
    %68 = vector.extract_strided_slice %33 {offsets = [16, 0], sizes = [16, 16], strides = [1, 1]} : vector<32x32xf32> to vector<16x16xf32>
    %69 = vector.extract_strided_slice %31 {offsets = [16, 0], sizes = [16, 16], strides = [1, 1]} : vector<32x32xf32> to vector<16x16xf32>
    %cst_34 = arith.constant dense<0.000000e+00> : vector<16x16xf32>
    %70 = tpu.matmul %65, %68, %cst_34 {dimension_numbers = #tpu.dot_dimension_numbers<[1], [0], [0], [1], [0, 0, 1, 1], [], []>} : vector<16x16xf32>, vector<16x16xf32>, vector<16x16xf32> -> vector<16x16xf32>
    %cst_35 = arith.constant dense<0.000000e+00> : vector<16x16xf32>
    %71 = tpu.matmul %66, %69, %cst_35 {dimension_numbers = #tpu.dot_dimension_numbers<[1], [0], [0], [1], [0, 0, 1, 1], [], []>} : vector<16x16xf32>, vector<16x16xf32>, vector<16x16xf32> -> vector<16x16xf32>
    %cst_36 = arith.constant dense<0xFF800000> : vector<16xf32>
    %72 = vector.multi_reduction <maximumf>, %70, %cst_36 [1] : vector<16x16xf32> to vector<16xf32>
    %73 = vector.shape_cast %72 : vector<16xf32> to vector<16x1xf32>
    %74 = vector.broadcast %73 : vector<16x1xf32> to vector<16x16xf32>
    %75 = arith.subf %70, %74 : vector<16x16xf32>
    %76 = math.exp %75 : vector<16x16xf32>
    %cst_37 = arith.constant dense<0.000000e+00> : vector<16xf32>
    %77 = vector.multi_reduction <add>, %76, %cst_37 [1] : vector<16x16xf32> to vector<16xf32>
    %78 = vector.shape_cast %77 : vector<16xf32> to vector<16x1xf32>
    %79 = tpu.reciprocal %78 {approx = true} : vector<16x1xf32> -> vector<16x1xf32>
    %80 = vector.broadcast %79 : vector<16x1xf32> to vector<16x16xf32>
    %81 = arith.mulf %76, %80 : vector<16x16xf32>
    %cst_38 = arith.constant dense<0xFF800000> : vector<16xf32>
    %82 = vector.multi_reduction <maximumf>, %71, %cst_38 [1] : vector<16x16xf32> to vector<16xf32>
    %83 = vector.shape_cast %82 : vector<16xf32> to vector<16x1xf32>
    %84 = vector.broadcast %83 : vector<16x1xf32> to vector<16x16xf32>
    %85 = arith.subf %71, %84 : vector<16x16xf32>
    %86 = math.exp %85 : vector<16x16xf32>
    %cst_39 = arith.constant dense<0.000000e+00> : vector<16xf32>
    %87 = vector.multi_reduction <add>, %86, %cst_39 [1] : vector<16x16xf32> to vector<16xf32>
    %88 = vector.shape_cast %87 : vector<16xf32> to vector<16x1xf32>
    %89 = tpu.reciprocal %88 {approx = true} : vector<16x1xf32> -> vector<16x1xf32>
    %90 = vector.broadcast %89 : vector<16x1xf32> to vector<16x16xf32>
    %91 = arith.mulf %86, %90 : vector<16x16xf32>
    %cst_40 = arith.constant dense<0.000000e+00> : vector<16x16xf32>
    %92 = tpu.matmul %81, %67, %cst_40 {dimension_numbers = #tpu.dot_dimension_numbers<[1], [0], [0], [1], [0, 0, 1, 1], [], []>} : vector<16x16xf32>, vector<16x16xf32>, vector<16x16xf32> -> vector<16x16xf32>
    %cst_41 = arith.constant dense<0.000000e+00> : vector<16x16xf32>
    %93 = tpu.matmul %91, %65, %cst_41 {dimension_numbers = #tpu.dot_dimension_numbers<[1], [0], [0], [1], [0, 0, 1, 1], [], []>} : vector<16x16xf32>, vector<16x16xf32>, vector<16x16xf32> -> vector<16x16xf32>
    %94 = tpu.concatenate %63, %92 in 1 : vector<16x16xf32>, vector<16x16xf32> -> vector<16x32xf32>
    %95 = arith.addf %94, %34 : vector<16x32xf32>
    %96 = tpu.concatenate %64, %93 in 1 : vector<16x16xf32>, vector<16x16xf32> -> vector<16x32xf32>
    %97 = arith.addf %96, %35 : vector<16x32xf32>
    %98 = arith.addf %95, %97 : vector<16x32xf32>
    %cst_42 = arith.constant 0.000000e+00 : f32
    %99 = vector.broadcast %cst_42 : f32 to vector<16x32xf32>
    %100 = arith.maximumf %98, %99 : vector<16x32xf32>
    %cst_43 = arith.constant dense<0.000000e+00> : vector<16xf32>
    %101 = vector.multi_reduction <add>, %100, %cst_43 [1] : vector<16x32xf32> to vector<16xf32>
    %102 = vector.shape_cast %101 : vector<16xf32> to vector<16x1xf32>
    %cst_44 = arith.constant 3.200000e+01 : f32
    %103 = vector.broadcast %cst_44 : f32 to vector<16x1xf32>
    %104 = arith.divf %102, %103 : vector<16x1xf32>
    %105 = vector.broadcast %104 : vector<16x1xf32> to vector<16x32xf32>
    %106 = arith.subf %100, %105 : vector<16x32xf32>
    %107 = arith.mulf %106, %106 : vector<16x32xf32>
    %cst_45 = arith.constant dense<0.000000e+00> : vector<16xf32>
    %108 = vector.multi_reduction <add>, %107, %cst_45 [1] : vector<16x32xf32> to vector<16xf32>
    %109 = vector.shape_cast %108 : vector<16xf32> to vector<16x1xf32>
    %cst_46 = arith.constant 3.200000e+01 : f32
    %110 = vector.broadcast %cst_46 : f32 to vector<16x1xf32>
    %111 = arith.divf %109, %110 : vector<16x1xf32>
    %112 = vector.broadcast %104 : vector<16x1xf32> to vector<16x32xf32>
    %113 = arith.subf %100, %112 : vector<16x32xf32>
    %cst_47 = arith.constant 9.99999974E-6 : f32
    %114 = vector.broadcast %cst_47 : f32 to vector<16x1xf32>
    %115 = arith.addf %111, %114 : vector<16x1xf32>
    %116 = math.rsqrt %115 : vector<16x1xf32>
    %117 = vector.broadcast %116 : vector<16x1xf32> to vector<16x32xf32>
    %118 = arith.mulf %113, %117 : vector<16x32xf32>
    %c0_48 = arith.constant 0 : index
    %c0_49 = arith.constant 0 : index
    %119 = vector.load %arg11[%c0_48, %c0_49] : memref<1x32xf32, #tpu.memory_space<vmem>>, vector<1x32xf32>
    %120 = vector.broadcast %119 : vector<1x32xf32> to vector<16x32xf32>
    %121 = arith.mulf %118, %120 : vector<16x32xf32>
    %c0_50 = arith.constant 0 : index
    %c0_51 = arith.constant 0 : index
    %122 = vector.load %arg12[%c0_50, %c0_51] : memref<1x32xf32, #tpu.memory_space<vmem>>, vector<1x32xf32>
    %123 = vector.broadcast %122 : vector<1x32xf32> to vector<16x32xf32>
    %124 = arith.addf %121, %123 : vector<16x32xf32>
    %125 = vector.extract_strided_slice %22 {offsets = [16, 32], sizes = [16, 32], strides = [1, 1]} : vector<32x64xf32> to vector<16x32xf32>
    %126 = vector.extract_strided_slice %29 {offsets = [16, 64], sizes = [16, 32], strides = [1, 1]} : vector<32x96xf32> to vector<16x32xf32>
    %127 = vector.extract_strided_slice %22 {offsets = [16, 0], sizes = [16, 16], strides = [1, 1]} : vector<32x64xf32> to vector<16x16xf32>
    %128 = vector.extract_strided_slice %29 {offsets = [16, 0], sizes = [16, 16], strides = [1, 1]} : vector<32x96xf32> to vector<16x16xf32>
    %129 = vector.extract_strided_slice %29 {offsets = [16, 32], sizes = [16, 16], strides = [1, 1]} : vector<32x96xf32> to vector<16x16xf32>
    %130 = vector.extract_strided_slice %33 {offsets = [0, 16], sizes = [16, 16], strides = [1, 1]} : vector<32x32xf32> to vector<16x16xf32>
    %131 = vector.extract_strided_slice %31 {offsets = [0, 16], sizes = [16, 16], strides = [1, 1]} : vector<32x32xf32> to vector<16x16xf32>
    %cst_52 = arith.constant dense<0.000000e+00> : vector<16x16xf32>
    %132 = tpu.matmul %127, %130, %cst_52 {dimension_numbers = #tpu.dot_dimension_numbers<[1], [0], [0], [1], [0, 0, 1, 1], [], []>} : vector<16x16xf32>, vector<16x16xf32>, vector<16x16xf32> -> vector<16x16xf32>
    %cst_53 = arith.constant dense<0.000000e+00> : vector<16x16xf32>
    %133 = tpu.matmul %128, %131, %cst_53 {dimension_numbers = #tpu.dot_dimension_numbers<[1], [0], [0], [1], [0, 0, 1, 1], [], []>} : vector<16x16xf32>, vector<16x16xf32>, vector<16x16xf32> -> vector<16x16xf32>
    %cst_54 = arith.constant dense<0xFF800000> : vector<16xf32>
    %134 = vector.multi_reduction <maximumf>, %132, %cst_54 [1] : vector<16x16xf32> to vector<16xf32>
    %135 = vector.shape_cast %134 : vector<16xf32> to vector<16x1xf32>
    %136 = vector.broadcast %135 : vector<16x1xf32> to vector<16x16xf32>
    %137 = arith.subf %132, %136 : vector<16x16xf32>
    %138 = math.exp %137 : vector<16x16xf32>
    %cst_55 = arith.constant dense<0.000000e+00> : vector<16xf32>
    %139 = vector.multi_reduction <add>, %138, %cst_55 [1] : vector<16x16xf32> to vector<16xf32>
    %140 = vector.shape_cast %139 : vector<16xf32> to vector<16x1xf32>
    %141 = tpu.reciprocal %140 {approx = true} : vector<16x1xf32> -> vector<16x1xf32>
    %142 = vector.broadcast %141 : vector<16x1xf32> to vector<16x16xf32>
    %143 = arith.mulf %138, %142 : vector<16x16xf32>
    %cst_56 = arith.constant dense<0xFF800000> : vector<16xf32>
    %144 = vector.multi_reduction <maximumf>, %133, %cst_56 [1] : vector<16x16xf32> to vector<16xf32>
    %145 = vector.shape_cast %144 : vector<16xf32> to vector<16x1xf32>
    %146 = vector.broadcast %145 : vector<16x1xf32> to vector<16x16xf32>
    %147 = arith.subf %133, %146 : vector<16x16xf32>
    %148 = math.exp %147 : vector<16x16xf32>
    %cst_57 = arith.constant dense<0.000000e+00> : vector<16xf32>
    %149 = vector.multi_reduction <add>, %148, %cst_57 [1] : vector<16x16xf32> to vector<16xf32>
    %150 = vector.shape_cast %149 : vector<16xf32> to vector<16x1xf32>
    %151 = tpu.reciprocal %150 {approx = true} : vector<16x1xf32> -> vector<16x1xf32>
    %152 = vector.broadcast %151 : vector<16x1xf32> to vector<16x16xf32>
    %153 = arith.mulf %148, %152 : vector<16x16xf32>
    %cst_58 = arith.constant dense<0.000000e+00> : vector<16x16xf32>
    %154 = tpu.matmul %143, %129, %cst_58 {dimension_numbers = #tpu.dot_dimension_numbers<[1], [0], [0], [1], [0, 0, 1, 1], [], []>} : vector<16x16xf32>, vector<16x16xf32>, vector<16x16xf32> -> vector<16x16xf32>
    %cst_59 = arith.constant dense<0.000000e+00> : vector<16x16xf32>
    %155 = tpu.matmul %153, %127, %cst_59 {dimension_numbers = #tpu.dot_dimension_numbers<[1], [0], [0], [1], [0, 0, 1, 1], [], []>} : vector<16x16xf32>, vector<16x16xf32>, vector<16x16xf32> -> vector<16x16xf32>
    %156 = vector.extract_strided_slice %22 {offsets = [16, 16], sizes = [16, 16], strides = [1, 1]} : vector<32x64xf32> to vector<16x16xf32>
    %157 = vector.extract_strided_slice %29 {offsets = [16, 16], sizes = [16, 16], strides = [1, 1]} : vector<32x96xf32> to vector<16x16xf32>
    %158 = vector.extract_strided_slice %29 {offsets = [16, 48], sizes = [16, 16], strides = [1, 1]} : vector<32x96xf32> to vector<16x16xf32>
    %159 = vector.extract_strided_slice %33 {offsets = [16, 16], sizes = [16, 16], strides = [1, 1]} : vector<32x32xf32> to vector<16x16xf32>
    %160 = vector.extract_strided_slice %31 {offsets = [16, 16], sizes = [16, 16], strides = [1, 1]} : vector<32x32xf32> to vector<16x16xf32>
    %cst_60 = arith.constant dense<0.000000e+00> : vector<16x16xf32>
    %161 = tpu.matmul %156, %159, %cst_60 {dimension_numbers = #tpu.dot_dimension_numbers<[1], [0], [0], [1], [0, 0, 1, 1], [], []>} : vector<16x16xf32>, vector<16x16xf32>, vector<16x16xf32> -> vector<16x16xf32>
    %cst_61 = arith.constant dense<0.000000e+00> : vector<16x16xf32>
    %162 = tpu.matmul %157, %160, %cst_61 {dimension_numbers = #tpu.dot_dimension_numbers<[1], [0], [0], [1], [0, 0, 1, 1], [], []>} : vector<16x16xf32>, vector<16x16xf32>, vector<16x16xf32> -> vector<16x16xf32>
    %cst_62 = arith.constant dense<0xFF800000> : vector<16xf32>
    %163 = vector.multi_reduction <maximumf>, %161, %cst_62 [1] : vector<16x16xf32> to vector<16xf32>
    %164 = vector.shape_cast %163 : vector<16xf32> to vector<16x1xf32>
    %165 = vector.broadcast %164 : vector<16x1xf32> to vector<16x16xf32>
    %166 = arith.subf %161, %165 : vector<16x16xf32>
    %167 = math.exp %166 : vector<16x16xf32>
    %cst_63 = arith.constant dense<0.000000e+00> : vector<16xf32>
    %168 = vector.multi_reduction <add>, %167, %cst_63 [1] : vector<16x16xf32> to vector<16xf32>
    %169 = vector.shape_cast %168 : vector<16xf32> to vector<16x1xf32>
    %170 = tpu.reciprocal %169 {approx = true} : vector<16x1xf32> -> vector<16x1xf32>
    %171 = vector.broadcast %170 : vector<16x1xf32> to vector<16x16xf32>
    %172 = arith.mulf %167, %171 : vector<16x16xf32>
    %cst_64 = arith.constant dense<0xFF800000> : vector<16xf32>
    %173 = vector.multi_reduction <maximumf>, %162, %cst_64 [1] : vector<16x16xf32> to vector<16xf32>
    %174 = vector.shape_cast %173 : vector<16xf32> to vector<16x1xf32>
    %175 = vector.broadcast %174 : vector<16x1xf32> to vector<16x16xf32>
    %176 = arith.subf %162, %175 : vector<16x16xf32>
    %177 = math.exp %176 : vector<16x16xf32>
    %cst_65 = arith.constant dense<0.000000e+00> : vector<16xf32>
    %178 = vector.multi_reduction <add>, %177, %cst_65 [1] : vector<16x16xf32> to vector<16xf32>
    %179 = vector.shape_cast %178 : vector<16xf32> to vector<16x1xf32>
    %180 = tpu.reciprocal %179 {approx = true} : vector<16x1xf32> -> vector<16x1xf32>
    %181 = vector.broadcast %180 : vector<16x1xf32> to vector<16x16xf32>
    %182 = arith.mulf %177, %181 : vector<16x16xf32>
    %cst_66 = arith.constant dense<0.000000e+00> : vector<16x16xf32>
    %183 = tpu.matmul %172, %158, %cst_66 {dimension_numbers = #tpu.dot_dimension_numbers<[1], [0], [0], [1], [0, 0, 1, 1], [], []>} : vector<16x16xf32>, vector<16x16xf32>, vector<16x16xf32> -> vector<16x16xf32>
    %cst_67 = arith.constant dense<0.000000e+00> : vector<16x16xf32>
    %184 = tpu.matmul %182, %156, %cst_67 {dimension_numbers = #tpu.dot_dimension_numbers<[1], [0], [0], [1], [0, 0, 1, 1], [], []>} : vector<16x16xf32>, vector<16x16xf32>, vector<16x16xf32> -> vector<16x16xf32>
    %185 = tpu.concatenate %154, %183 in 1 : vector<16x16xf32>, vector<16x16xf32> -> vector<16x32xf32>
    %186 = arith.addf %185, %125 : vector<16x32xf32>
    %187 = tpu.concatenate %155, %184 in 1 : vector<16x16xf32>, vector<16x16xf32> -> vector<16x32xf32>
    %188 = arith.addf %187, %126 : vector<16x32xf32>
    %189 = arith.addf %186, %188 : vector<16x32xf32>
    %cst_68 = arith.constant 0.000000e+00 : f32
    %190 = vector.broadcast %cst_68 : f32 to vector<16x32xf32>
    %191 = arith.maximumf %189, %190 : vector<16x32xf32>
    %cst_69 = arith.constant dense<0.000000e+00> : vector<16xf32>
    %192 = vector.multi_reduction <add>, %191, %cst_69 [1] : vector<16x32xf32> to vector<16xf32>
    %193 = vector.shape_cast %192 : vector<16xf32> to vector<16x1xf32>
    %cst_70 = arith.constant 3.200000e+01 : f32
    %194 = vector.broadcast %cst_70 : f32 to vector<16x1xf32>
    %195 = arith.divf %193, %194 : vector<16x1xf32>
    %196 = vector.broadcast %195 : vector<16x1xf32> to vector<16x32xf32>
    %197 = arith.subf %191, %196 : vector<16x32xf32>
    %198 = arith.mulf %197, %197 : vector<16x32xf32>
    %cst_71 = arith.constant dense<0.000000e+00> : vector<16xf32>
    %199 = vector.multi_reduction <add>, %198, %cst_71 [1] : vector<16x32xf32> to vector<16xf32>
    %200 = vector.shape_cast %199 : vector<16xf32> to vector<16x1xf32>
    %cst_72 = arith.constant 3.200000e+01 : f32
    %201 = vector.broadcast %cst_72 : f32 to vector<16x1xf32>
    %202 = arith.divf %200, %201 : vector<16x1xf32>
    %203 = vector.broadcast %195 : vector<16x1xf32> to vector<16x32xf32>
    %204 = arith.subf %191, %203 : vector<16x32xf32>
    %cst_73 = arith.constant 9.99999974E-6 : f32
    %205 = vector.broadcast %cst_73 : f32 to vector<16x1xf32>
    %206 = arith.addf %202, %205 : vector<16x1xf32>
    %207 = math.rsqrt %206 : vector<16x1xf32>
    %208 = vector.broadcast %207 : vector<16x1xf32> to vector<16x32xf32>
    %209 = arith.mulf %204, %208 : vector<16x32xf32>
    %c0_74 = arith.constant 0 : index
    %c0_75 = arith.constant 0 : index
    %210 = vector.load %arg11[%c0_74, %c0_75] : memref<1x32xf32, #tpu.memory_space<vmem>>, vector<1x32xf32>
    %211 = vector.broadcast %210 : vector<1x32xf32> to vector<16x32xf32>
    %212 = arith.mulf %209, %211 : vector<16x32xf32>
    %c0_76 = arith.constant 0 : index
    %c0_77 = arith.constant 0 : index
    %213 = vector.load %arg12[%c0_76, %c0_77] : memref<1x32xf32, #tpu.memory_space<vmem>>, vector<1x32xf32>
    %214 = vector.broadcast %213 : vector<1x32xf32> to vector<16x32xf32>
    %215 = arith.addf %212, %214 : vector<16x32xf32>
    %216 = tpu.concatenate %124, %215 in 0 : vector<16x32xf32>, vector<16x32xf32> -> vector<32x32xf32>
    %217 = tpu.iota {dimensions = array<i32: 0>} : vector<16x32xi32>
    %218 = tpu.concatenate %217, %217 in 0 : vector<16x32xi32>, vector<16x32xi32> -> vector<32x32xi32>
    %c0_i32 = arith.constant 0 : i32
    %219 = vector.broadcast %c0_i32 : i32 to vector<32x32xi32>
    %220 = arith.cmpi eq, %218, %219 : vector<32x32xi32>
    %cst_78 = arith.constant 0.000000e+00 : f32
    %221 = vector.broadcast %cst_78 : f32 to vector<32x32xf32>
    %222 = arith.select %220, %216, %221 : vector<32x32xi1>, vector<32x32xf32>
    %c1_i32 = arith.constant 1 : i32
    %223 = vector.broadcast %c1_i32 : i32 to vector<32x32xi32>
    %224 = arith.cmpi eq, %218, %223 : vector<32x32xi32>
    %cst_79 = arith.constant 0.000000e+00 : f32
    %225 = vector.broadcast %cst_79 : f32 to vector<32x32xf32>
    %226 = arith.select %224, %216, %225 : vector<32x32xi1>, vector<32x32xf32>
    %c2_i32 = arith.constant 2 : i32
    %227 = vector.broadcast %c2_i32 : i32 to vector<32x32xi32>
    %228 = arith.cmpi eq, %218, %227 : vector<32x32xi32>
    %cst_80 = arith.constant 0.000000e+00 : f32
    %229 = vector.broadcast %cst_80 : f32 to vector<32x32xf32>
    %230 = arith.select %228, %216, %229 : vector<32x32xi1>, vector<32x32xf32>
    %c3_i32 = arith.constant 3 : i32
    %231 = vector.broadcast %c3_i32 : i32 to vector<32x32xi32>
    %232 = arith.cmpi eq, %218, %231 : vector<32x32xi32>
    %cst_81 = arith.constant 0.000000e+00 : f32
    %233 = vector.broadcast %cst_81 : f32 to vector<32x32xf32>
    %234 = arith.select %232, %216, %233 : vector<32x32xi1>, vector<32x32xf32>
    %c4_i32 = arith.constant 4 : i32
    %235 = vector.broadcast %c4_i32 : i32 to vector<32x32xi32>
    %236 = arith.cmpi eq, %218, %235 : vector<32x32xi32>
    %cst_82 = arith.constant 0.000000e+00 : f32
    %237 = vector.broadcast %cst_82 : f32 to vector<32x32xf32>
    %238 = arith.select %236, %216, %237 : vector<32x32xi1>, vector<32x32xf32>
    %c5_i32 = arith.constant 5 : i32
    %239 = vector.broadcast %c5_i32 : i32 to vector<32x32xi32>
    %240 = arith.cmpi eq, %218, %239 : vector<32x32xi32>
    %cst_83 = arith.constant 0.000000e+00 : f32
    %241 = vector.broadcast %cst_83 : f32 to vector<32x32xf32>
    %242 = arith.select %240, %216, %241 : vector<32x32xi1>, vector<32x32xf32>
    %c6_i32 = arith.constant 6 : i32
    %243 = vector.broadcast %c6_i32 : i32 to vector<32x32xi32>
    %244 = arith.cmpi eq, %218, %243 : vector<32x32xi32>
    %cst_84 = arith.constant 0.000000e+00 : f32
    %245 = vector.broadcast %cst_84 : f32 to vector<32x32xf32>
    %246 = arith.select %244, %216, %245 : vector<32x32xi1>, vector<32x32xf32>
    %c7_i32 = arith.constant 7 : i32
    %247 = vector.broadcast %c7_i32 : i32 to vector<32x32xi32>
    %248 = arith.cmpi eq, %218, %247 : vector<32x32xi32>
    %cst_85 = arith.constant 0.000000e+00 : f32
    %249 = vector.broadcast %cst_85 : f32 to vector<32x32xf32>
    %250 = arith.select %248, %216, %249 : vector<32x32xi1>, vector<32x32xf32>
    %c8_i32 = arith.constant 8 : i32
    %251 = vector.broadcast %c8_i32 : i32 to vector<32x32xi32>
    %252 = arith.cmpi eq, %218, %251 : vector<32x32xi32>
    %cst_86 = arith.constant 0.000000e+00 : f32
    %253 = vector.broadcast %cst_86 : f32 to vector<32x32xf32>
    %254 = arith.select %252, %216, %253 : vector<32x32xi1>, vector<32x32xf32>
    %c9_i32 = arith.constant 9 : i32
    %255 = vector.broadcast %c9_i32 : i32 to vector<32x32xi32>
    %256 = arith.cmpi eq, %218, %255 : vector<32x32xi32>
    %cst_87 = arith.constant 0.000000e+00 : f32
    %257 = vector.broadcast %cst_87 : f32 to vector<32x32xf32>
    %258 = arith.select %256, %216, %257 : vector<32x32xi1>, vector<32x32xf32>
    %c10_i32 = arith.constant 10 : i32
    %259 = vector.broadcast %c10_i32 : i32 to vector<32x32xi32>
    %260 = arith.cmpi eq, %218, %259 : vector<32x32xi32>
    %cst_88 = arith.constant 0.000000e+00 : f32
    %261 = vector.broadcast %cst_88 : f32 to vector<32x32xf32>
    %262 = arith.select %260, %216, %261 : vector<32x32xi1>, vector<32x32xf32>
    %c11_i32 = arith.constant 11 : i32
    %263 = vector.broadcast %c11_i32 : i32 to vector<32x32xi32>
    %264 = arith.cmpi eq, %218, %263 : vector<32x32xi32>
    %cst_89 = arith.constant 0.000000e+00 : f32
    %265 = vector.broadcast %cst_89 : f32 to vector<32x32xf32>
    %266 = arith.select %264, %216, %265 : vector<32x32xi1>, vector<32x32xf32>
    %c12_i32 = arith.constant 12 : i32
    %267 = vector.broadcast %c12_i32 : i32 to vector<32x32xi32>
    %268 = arith.cmpi eq, %218, %267 : vector<32x32xi32>
    %cst_90 = arith.constant 0.000000e+00 : f32
    %269 = vector.broadcast %cst_90 : f32 to vector<32x32xf32>
    %270 = arith.select %268, %216, %269 : vector<32x32xi1>, vector<32x32xf32>
    %c13_i32 = arith.constant 13 : i32
    %271 = vector.broadcast %c13_i32 : i32 to vector<32x32xi32>
    %272 = arith.cmpi eq, %218, %271 : vector<32x32xi32>
    %cst_91 = arith.constant 0.000000e+00 : f32
    %273 = vector.broadcast %cst_91 : f32 to vector<32x32xf32>
    %274 = arith.select %272, %216, %273 : vector<32x32xi1>, vector<32x32xf32>
    %c14_i32 = arith.constant 14 : i32
    %275 = vector.broadcast %c14_i32 : i32 to vector<32x32xi32>
    %276 = arith.cmpi eq, %218, %275 : vector<32x32xi32>
    %cst_92 = arith.constant 0.000000e+00 : f32
    %277 = vector.broadcast %cst_92 : f32 to vector<32x32xf32>
    %278 = arith.select %276, %216, %277 : vector<32x32xi1>, vector<32x32xf32>
    %c15_i32 = arith.constant 15 : i32
    %279 = vector.broadcast %c15_i32 : i32 to vector<32x32xi32>
    %280 = arith.cmpi eq, %218, %279 : vector<32x32xi32>
    %cst_93 = arith.constant 0.000000e+00 : f32
    %281 = vector.broadcast %cst_93 : f32 to vector<32x32xf32>
    %282 = arith.select %280, %216, %281 : vector<32x32xi1>, vector<32x32xf32>
    %283 = tpu.concatenate %222, %226, %230, %234, %238, %242, %246, %250, %254, %258, %262, %266, %270, %274, %278, %282 in 1 : vector<32x32xf32>, vector<32x32xf32>, vector<32x32xf32>, vector<32x32xf32>, vector<32x32xf32>, vector<32x32xf32>, vector<32x32xf32>, vector<32x32xf32>, vector<32x32xf32>, vector<32x32xf32>, vector<32x32xf32>, vector<32x32xf32>, vector<32x32xf32>, vector<32x32xf32>, vector<32x32xf32>, vector<32x32xf32> -> vector<32x512xf32>
    %284 = tpu.iota {dimensions = array<i32: 1>} : vector<2x32xi32>
    %285 = tpu.iota {dimensions = array<i32: 0>} : vector<2x32xi32>
    %c16_i32 = arith.constant 16 : i32
    %286 = vector.broadcast %c16_i32 : i32 to vector<2x32xi32>
    %287 = arith.muli %285, %286 : vector<2x32xi32>
    %288 = arith.cmpi sge, %284, %287 : vector<2x32xi32>
    %c1_i32_94 = arith.constant 1 : i32
    %289 = vector.broadcast %c1_i32_94 : i32 to vector<2x32xi32>
    %290 = arith.addi %285, %289 : vector<2x32xi32>
    %c16_i32_95 = arith.constant 16 : i32
    %291 = vector.broadcast %c16_i32_95 : i32 to vector<2x32xi32>
    %292 = arith.muli %290, %291 : vector<2x32xi32>
    %293 = arith.cmpi slt, %284, %292 : vector<2x32xi32>
    %294 = arith.andi %288, %293 : vector<2x32xi1>
    %cst_96 = arith.constant 1.000000e+00 : f32
    %cst_97 = arith.constant 0.000000e+00 : f32
    %295 = vector.broadcast %cst_96 : f32 to vector<2x32xf32>
    %296 = vector.broadcast %cst_97 : f32 to vector<2x32xf32>
    %297 = arith.select %294, %295, %296 : vector<2x32xi1>, vector<2x32xf32>
    %cst_98 = arith.constant dense<0.000000e+00> : vector<2x512xf32>
    %298 = tpu.matmul %297, %283, %cst_98 {dimension_numbers = #tpu.dot_dimension_numbers<[1], [0], [0], [1], [0, 0, 1, 1], [], []>} : vector<2x32xf32>, vector<32x512xf32>, vector<2x512xf32> -> vector<2x512xf32>
    %c0_99 = arith.constant 0 : index
    %c0_100 = arith.constant 0 : index
    %299 = vector.load %arg13[%c0_99, %c0_100] : memref<512x32xf32, #tpu.memory_space<vmem>>, vector<512x32xf32>
    %cst_101 = arith.constant dense<0.000000e+00> : vector<2x32xf32>
    %300 = tpu.matmul %298, %299, %cst_101 {dimension_numbers = #tpu.dot_dimension_numbers<[1], [0], [0], [1], [0, 0, 1, 1], [], []>} : vector<2x512xf32>, vector<512x32xf32>, vector<2x32xf32> -> vector<2x32xf32>
    %c0_102 = arith.constant 0 : index
    %c0_103 = arith.constant 0 : index
    %301 = vector.load %arg14[%c0_102, %c0_103] : memref<1x32xf32, #tpu.memory_space<vmem>>, vector<1x32xf32>
    %302 = vector.broadcast %301 : vector<1x32xf32> to vector<2x32xf32>
    %303 = arith.addf %300, %302 : vector<2x32xf32>
    %cst_104 = arith.constant 0.000000e+00 : f32
    %304 = vector.broadcast %cst_104 : f32 to vector<2x32xf32>
    %305 = arith.maximumf %303, %304 : vector<2x32xf32>
    %c0_105 = arith.constant 0 : index
    %c0_106 = arith.constant 0 : index
    %306 = vector.load %arg15[%c0_105, %c0_106] : memref<32x2xf32, #tpu.memory_space<vmem>>, vector<32x2xf32>
    %cst_107 = arith.constant dense<0.000000e+00> : vector<2x2xf32>
    %307 = tpu.matmul %305, %306, %cst_107 {dimension_numbers = #tpu.dot_dimension_numbers<[1], [0], [0], [1], [0, 0, 1, 1], [], []>} : vector<2x32xf32>, vector<32x2xf32>, vector<2x2xf32> -> vector<2x2xf32>
    %c0_108 = arith.constant 0 : index
    %c0_109 = arith.constant 0 : index
    %308 = vector.load %arg16[%c0_108, %c0_109] : memref<1x2xf32, #tpu.memory_space<vmem>>, vector<1x2xf32>
    %309 = vector.broadcast %308 : vector<1x2xf32> to vector<2x2xf32>
    %310 = arith.addf %307, %309 : vector<2x2xf32>
    %cst_110 = arith.constant dense<0xFF800000> : vector<2xf32>
    %311 = vector.multi_reduction <maximumf>, %310, %cst_110 [1] : vector<2x2xf32> to vector<2xf32>
    %312 = vector.shape_cast %311 : vector<2xf32> to vector<2x1xf32>
    %313 = vector.broadcast %312 : vector<2x1xf32> to vector<2x2xf32>
    %314 = arith.subf %310, %313 : vector<2x2xf32>
    %315 = math.exp %314 : vector<2x2xf32>
    %cst_111 = arith.constant dense<0.000000e+00> : vector<2xf32>
    %316 = vector.multi_reduction <add>, %315, %cst_111 [1] : vector<2x2xf32> to vector<2xf32>
    %317 = vector.shape_cast %316 : vector<2xf32> to vector<2x1xf32>
    %318 = math.log %317 : vector<2x1xf32>
    %319 = arith.addf %312, %318 : vector<2x1xf32>
    %320 = vector.broadcast %319 : vector<2x1xf32> to vector<2x2xf32>
    %321 = arith.subf %310, %320 : vector<2x2xf32>
    %c0_112 = arith.constant 0 : index
    %c0_113 = arith.constant 0 : index
    %322 = vector.load %arg17[%c0_112, %c0_113] : memref<2x2xf32, #tpu.memory_space<vmem>>, vector<2x2xf32>
    tpu.vector_store %arg17[%c0_112, %c0_113], %321 {strides = array<i32>} : memref<2x2xf32, #tpu.memory_space<vmem>>, vector<2x2xf32>,
    return
  }
  func.func @transform_0(%arg0: i32) -> (i32, i32) {
    %c0_i32 = arith.constant 0 : i32
    %c0_i32_0 = arith.constant 0 : i32
    %c0_i32_1 = arith.constant 0 : i32
    return %c0_i32, %c0_i32_0 : i32, i32
  }
  func.func @transform_1(%arg0: i32) -> (i32, i32) {
    %c0_i32 = arith.constant 0 : i32
    %c0_i32_0 = arith.constant 0 : i32
    %c0_i32_1 = arith.constant 0 : i32
    return %c0_i32, %c0_i32_0 : i32, i32
  }
  func.func @transform_2(%arg0: i32) -> (i32, i32) {
    %c0_i32 = arith.constant 0 : i32
    %c0_i32_0 = arith.constant 0 : i32
    %c0_i32_1 = arith.constant 0 : i32
    return %c0_i32, %c0_i32_0 : i32, i32
  }
  func.func @transform_3(%arg0: i32) -> (i32, i32) {
    %c0_i32 = arith.constant 0 : i32
    %c0_i32_0 = arith.constant 0 : i32
    %c0_i32_1 = arith.constant 0 : i32
    return %c0_i32, %c0_i32_0 : i32, i32
  }
  func.func @transform_4(%arg0: i32) -> (i32, i32) {
    %c0_i32 = arith.constant 0 : i32
    %c0_i32_0 = arith.constant 0 : i32
    %c0_i32_1 = arith.constant 0 : i32
    return %c0_i32, %c0_i32_0 : i32, i32
  }
  func.func @transform_5(%arg0: i32) -> (i32, i32) {
    %c0_i32 = arith.constant 0 : i32
    %c0_i32_0 = arith.constant 0 : i32
    %c0_i32_1 = arith.constant 0 : i32
    return %c0_i32, %c0_i32_0 : i32, i32
  }
  func.func @transform_6(%arg0: i32) -> (i32, i32) {
    %c0_i32 = arith.constant 0 : i32
    %c0_i32_0 = arith.constant 0 : i32
    %c0_i32_1 = arith.constant 0 : i32
    return %c0_i32, %c0_i32_0 : i32, i32
  }
  func.func @transform_7(%arg0: i32) -> (i32, i32) {
    %c0_i32 = arith.constant 0 : i32
    %c0_i32_0 = arith.constant 0 : i32
    %c0_i32_1 = arith.constant 0 : i32
    return %c0_i32, %c0_i32_0 : i32, i32
  }
  func.func @transform_8(%arg0: i32) -> (i32, i32) {
    %c0_i32 = arith.constant 0 : i32
    %c0_i32_0 = arith.constant 0 : i32
    %c0_i32_1 = arith.constant 0 : i32
    return %c0_i32, %c0_i32_0 : i32, i32
  }
  func.func @transform_9(%arg0: i32) -> (i32, i32) {
    %c0_i32 = arith.constant 0 : i32
    %c0_i32_0 = arith.constant 0 : i32
    %c0_i32_1 = arith.constant 0 : i32
    return %c0_i32, %c0_i32_0 : i32, i32
  }
  func.func @transform_10(%arg0: i32) -> (i32, i32) {
    %c0_i32 = arith.constant 0 : i32
    %c0_i32_0 = arith.constant 0 : i32
    %c0_i32_1 = arith.constant 0 : i32
    return %c0_i32, %c0_i32_0 : i32, i32
  }
  func.func @transform_11(%arg0: i32) -> (i32, i32) {
    %c0_i32 = arith.constant 0 : i32
    %c0_i32_0 = arith.constant 0 : i32
    %c0_i32_1 = arith.constant 0 : i32
    return %c0_i32, %c0_i32_0 : i32, i32
  }
  func.func @transform_12(%arg0: i32) -> (i32, i32) {
    %c0_i32 = arith.constant 0 : i32
    %c0_i32_0 = arith.constant 0 : i32
    %c0_i32_1 = arith.constant 0 : i32
    return %c0_i32, %c0_i32_0 : i32, i32
  }
  func.func @transform_13(%arg0: i32) -> (i32, i32) {
    %c0_i32 = arith.constant 0 : i32
    %c0_i32_0 = arith.constant 0 : i32
    %c0_i32_1 = arith.constant 0 : i32
    return %c0_i32, %c0_i32_0 : i32, i32
  }
  func.func @transform_14(%arg0: i32) -> (i32, i32) {
    %c0_i32 = arith.constant 0 : i32
    %c0_i32_0 = arith.constant 0 : i32
    %c0_i32_1 = arith.constant 0 : i32
    return %c0_i32, %c0_i32_0 : i32, i32
  }
  func.func @transform_15(%arg0: i32) -> (i32, i32) {
    %c0_i32 = arith.constant 0 : i32
    %c0_i32_0 = arith.constant 0 : i32
    %c0_i32_1 = arith.constant 0 : i32
    return %c0_i32, %c0_i32_0 : i32, i32
  }
  func.func @transform_16(%arg0: i32) -> (i32, i32) {
    %c0_i32 = arith.constant 0 : i32
    %c0_i32_0 = arith.constant 0 : i32
    %c0_i32_1 = arith.constant 0 : i32
    return %c0_i32, %c0_i32_0 : i32, i32
  }
}

</mosaic_0001>

<llo_original>
// kernel: meth_spect_integrator.1
$region0: #{meth_spect_integrator.1}
  #allocation0 [shape = 'u32[]', space=smem, size = 0x4, offset = 0x4, fixed_abs, tag = 'smem constant byte address 0x4 - core index']
  #allocation1 [shape = 'u32[144,128]{1,0:T(1,128)}', space=vmem, size = 0x12000, scoped, tag = 'internal scratch']
  %s0 = inlined_call_operand.vmem [shape: f32[32,8], index: 0, kind: input, shape index: {}]
  %s1 = inlined_call_operand.vmem [shape: f32[32,4], index: 1, kind: input, shape index: {}]
  %s2 = inlined_call_operand.vmem [shape: f32[8,32], index: 2, kind: input, shape index: {}]
  %s3 = inlined_call_operand.vmem [shape: f32[1,32], index: 3, kind: input, shape index: {}]
  %s4 = inlined_call_operand.vmem [shape: f32[4,32], index: 4, kind: input, shape index: {}]
  %s5 = inlined_call_operand.vmem [shape: f32[1,32], index: 5, kind: input, shape index: {}]
  %s6 = inlined_call_operand.vmem [shape: f32[32,64], index: 6, kind: input, shape index: {}]
  %s7 = inlined_call_operand.vmem [shape: f32[1,64], index: 7, kind: input, shape index: {}]
  %s8 = inlined_call_operand.vmem [shape: f32[32,96], index: 8, kind: input, shape index: {}]
  %s9 = inlined_call_operand.vmem [shape: f32[1,96], index: 9, kind: input, shape index: {}]
  %s10 = inlined_call_operand.vmem [shape: f32[1,32], index: 10, kind: input, shape index: {}]
  %s11 = inlined_call_operand.vmem [shape: f32[1,32], index: 11, kind: input, shape index: {}]
  %s12 = inlined_call_operand.vmem [shape: f32[512,32], index: 12, kind: input, shape index: {}]
  %s13 = inlined_call_operand.vmem [shape: f32[1,32], index: 13, kind: input, shape index: {}]
  %s14 = inlined_call_operand.vmem [shape: f32[32,2], index: 14, kind: input, shape index: {}]
  %s15 = inlined_call_operand.vmem [shape: f32[1,2], index: 15, kind: input, shape index: {}]
  %s16 = inlined_call_operand.hbm [shape: f32[2,2], index: 16, kind: output, shape index: {}]
  %s17 = sld [smem:[#allocation0]]
  $region74: #{meth_spect_integrator.1} parent=0
    _
  %s19 = ssub.s32 1, %s17
  %s20 = scalar_select 0, %s19, %s17
  $region1: #{meth_spect_integrator.1} parent=0
    #allocation2 [shape = 'u8[1024]{0}', space=vmem, size = 0x400, scoped, tag = 'output window, operand 0, single buffered']
    #allocation3 [shape = 's32[1]{0}', space=sflag, size = 0x4, scoped, tag = 'scoped memory for meth_spect_integrator.1']
    %21 = vsyncpa [#allocation3], 0
    // Predicated region
    $region2: #{meth_spect_integrator.1} parent=1 // pred_check
      _
    $region3: #{meth_spect_integrator.1} parent=1 // pred_check_branch
      %23 = sbr.rel (0) target = $region5
    $region4: #{meth_spect_integrator.1} parent=1 // pred_region
      _
    $region5: #{meth_spect_integrator.1} parent=1 // pred_fallthru
      _
    // Predicated region
    $region6: #{meth_spect_integrator.1} parent=1 // pred_check
      _
    $region7: #{meth_spect_integrator.1} parent=1 // pred_check_branch
      %25 = sbr.rel (0) target = $region9
    $region8: #{meth_spect_integrator.1} parent=1 // pred_region
      _
    $region9: #{meth_spect_integrator.1} parent=1 // pred_fallthru
      _
    // Predicated region
    $region10: #{meth_spect_integrator.1} parent=1 // pred_check
      _
    $region11: #{meth_spect_integrator.1} parent=1 // pred_check_branch
      %27 = sbr.rel (0) target = $region13
    $region12: #{meth_spect_integrator.1} parent=1 // pred_region
      _
    $region13: #{meth_spect_integrator.1} parent=1 // pred_fallthru
      _
    // Predicated region
    $region14: #{meth_spect_integrator.1} parent=1 // pred_check
      _
    $region15: #{meth_spect_integrator.1} parent=1 // pred_check_branch
      %29 = sbr.rel (0) target = $region17
    $region16: #{meth_spect_integrator.1} parent=1 // pred_region
      _
    $region17: #{meth_spect_integrator.1} parent=1 // pred_fallthru
      _
    // Predicated region
    $region18: #{meth_spect_integrator.1} parent=1 // pred_check
      _
    $region19: #{meth_spect_integrator.1} parent=1 // pred_check_branch
      %31 = sbr.rel (0) target = $region21
    $region20: #{meth_spect_integrator.1} parent=1 // pred_region
      _
    $region21: #{meth_spect_integrator.1} parent=1 // pred_fallthru
      _
    // Predicated region
    $region22: #{meth_spect_integrator.1} parent=1 // pred_check
      _
    $region23: #{meth_spect_integrator.1} parent=1 // pred_check_branch
      %33 = sbr.rel (0) target = $region25
    $region24: #{meth_spect_integrator.1} parent=1 // pred_region
      _
    $region25: #{meth_spect_integrator.1} parent=1 // pred_fallthru
      _
    // Predicated region
    $region26: #{meth_spect_integrator.1} parent=1 // pred_check
      _
    $region27: #{meth_spect_integrator.1} parent=1 // pred_check_branch
      %35 = sbr.rel (0) target = $region29
    $region28: #{meth_spect_integrator.1} parent=1 // pred_region
      _
    $region29: #{meth_spect_integrator.1} parent=1 // pred_fallthru
      _
    // Predicated region
    $region30: #{meth_spect_integrator.1} parent=1 // pred_check
      _
    $region31: #{meth_spect_integrator.1} parent=1 // pred_check_branch
      %37 = sbr.rel (0) target = $region33
    $region32: #{meth_spect_integrator.1} parent=1 // pred_region
      _
    $region33: #{meth_spect_integrator.1} parent=1 // pred_fallthru
      _
    // Predicated region
    $region34: #{meth_spect_integrator.1} parent=1 // pred_check
      _
    $region35: #{meth_spect_integrator.1} parent=1 // pred_check_branch
      %39 = sbr.rel (0) target = $region37
    $region36: #{meth_spect_integrator.1} parent=1 // pred_region
      _
    $region37: #{meth_spect_integrator.1} parent=1 // pred_fallthru
      _
    // Predicated region
    $region38: #{meth_spect_integrator.1} parent=1 // pred_check
      _
    $region39: #{meth_spect_integrator.1} parent=1 // pred_check_branch
      %41 = sbr.rel (0) target = $region41
    $region40: #{meth_spect_integrator.1} parent=1 // pred_region
      _
    $region41: #{meth_spect_integrator.1} parent=1 // pred_fallthru
      _
    // Predicated region
    $region42: #{meth_spect_integrator.1} parent=1 // pred_check
      _
    $region43: #{meth_spect_integrator.1} parent=1 // pred_check_branch
      %43 = sbr.rel (0) target = $region45
    $region44: #{meth_spect_integrator.1} parent=1 // pred_region
      _
    $region45: #{meth_spect_integrator.1} parent=1 // pred_fallthru
      _
    // Predicated region
    $region46: #{meth_spect_integrator.1} parent=1 // pred_check
      _
    $region47: #{meth_spect_integrator.1} parent=1 // pred_check_branch
      %45 = sbr.rel (0) target = $region49
    $region48: #{meth_spect_integrator.1} parent=1 // pred_region
      _
    $region49: #{meth_spect_integrator.1} parent=1 // pred_fallthru
      _
    // Predicated region
    $region50: #{meth_spect_integrator.1} parent=1 // pred_check
      _
    $region51: #{meth_spect_integrator.1} parent=1 // pred_check_branch
      %47 = sbr.rel (0) target = $region53
    $region52: #{meth_spect_integrator.1} parent=1 // pred_region
      _
    $region53: #{meth_spect_integrator.1} parent=1 // pred_fallthru
      _
    // Predicated region
    $region54: #{meth_spect_integrator.1} parent=1 // pred_check
      _
    $region55: #{meth_spect_integrator.1} parent=1 // pred_check_branch
      %49 = sbr.rel (0) target = $region57
    $region56: #{meth_spect_integrator.1} parent=1 // pred_region
      _
    $region57: #{meth_spect_integrator.1} parent=1 // pred_fallthru
      _
    // Predicated region
    $region58: #{meth_spect_integrator.1} parent=1 // pred_check
      _
    $region59: #{meth_spect_integrator.1} parent=1 // pred_check_branch
      %51 = sbr.rel (0) target = $region61
    $region60: #{meth_spect_integrator.1} parent=1 // pred_region
      _
    $region61: #{meth_spect_integrator.1} parent=1 // pred_fallthru
      _
    // Predicated region
    $region62: #{meth_spect_integrator.1} parent=1 // pred_check
      _
    $region63: #{meth_spect_integrator.1} parent=1 // pred_check_branch
      %53 = sbr.rel (0) target = $region65
    $region64: #{meth_spect_integrator.1} parent=1 // pred_region
      _
    $region65: #{meth_spect_integrator.1} parent=1 // pred_fallthru
      _
    %v54 = vld [vmem:[%s0] sm:$0xff]
    %v55 = vld [vmem:[%s0 + $0x8] sm:$0xff]
    %v56 = vld [vmem:[%s0 + $0x10] sm:$0xff]
    %v57 = vld [vmem:[%s0 + $0x18] sm:$0xff]
    %v58 = vld [vmem:[%s2] sm:$0xff]
    %v59 = vld [vmem:[%s3] sm:$0x1]
    %v61 = vlaneseq
    %v62 = vshrl.u32 %v61, 7
    %v63 = vsub.s32 0, %v62
    %v64 = vrot.slane %v59, %v63
    %vm66 = vcmask 64512
    %v68 = vsel %vm66, %v54, 0
    %v71 = vsel %vm66, %v55, 0
    %v74 = vsel %vm66, %v56, 0
    %v77 = vsel %vm66, %v57, 0
    %79 = vmatprep.subr.mxu0 0.0
    %80 = vmatpush1.msra.mxu0 0.0
    %81 = vmatprep.subr.mxu0 0.0
    %82 = vmatpush1.msra.mxu0 0.0
    %83 = vmatprep.subr.mxu0 0.0
    %84 = vmatpush1.msra.mxu0 0.0
    %85 = vmatprep.subr.mxu0 0.0
    %86 = vmatpush1.msra.mxu0 0.0
    %87 = vmatprep.subr.mxu0 0.0
    %88 = vmatpush1.msra.mxu0 0.0
    %89 = vmatprep.subr.mxu0 0.0
    %90 = vmatpush1.msra.mxu0 0.0
    %91 = vmatprep.subr.mxu0 0.0
    %92 = vmatpush1.msra.mxu0 0.0
    %93 = vmatprep.subr.mxu0 0.0
    %94 = vmatpush1.msra.mxu0 0.0
    %95 = vmatprep.subr.mxu0 0.0
    %96 = vmatpush1.msra.mxu0 0.0
    %97 = vmatprep.subr.mxu0 0.0
    %98 = vmatpush1.msra.mxu0 0.0
    %99 = vmatprep.subr.mxu0 0.0
    %100 = vmatpush1.msra.mxu0 0.0
    %101 = vmatprep.subr.mxu0 0.0
    %102 = vmatpush1.msra.mxu0 0.0
    %103 = vmatprep.subr.mxu0 0.0
    %104 = vmatpush1.msra.mxu0 0.0
    %105 = vmatprep.subr.mxu0 0.0
    %106 = vmatpush1.msra.mxu0 0.0
    %107 = vmatprep.subr.mxu0 0.0
    %108 = vmatpush1.msra.mxu0 0.0
    %109 = vmatprep.subr.mxu0 0.0
    %110 = vmatpush1.msra.mxu0 %v58
    %111 = vmatprep.subr.mxu0 0.0
    %112 = vmatpush2.msra.mxu0 0.0
    %113 = vmatprep.subr.mxu0 0.0
    %114 = vmatpush2.msra.mxu0 0.0
    %115 = vmatprep.subr.mxu0 0.0
    %116 = vmatpush2.msra.mxu0 0.0
    %117 = vmatprep.subr.mxu0 0.0
    %118 = vmatpush2.msra.mxu0 0.0
    %119 = vmatprep.subr.mxu0 0.0
    %120 = vmatpush2.msra.mxu0 0.0
    %121 = vmatprep.subr.mxu0 0.0
    %122 = vmatpush2.msra.mxu0 0.0
    %123 = vmatprep.subr.mxu0 0.0
    %124 = vmatpush2.msra.mxu0 0.0
    %125 = vmatprep.subr.mxu0 0.0
    %126 = vmatpush2.msra.mxu0 0.0
    %127 = vmatprep.subr.mxu0 0.0
    %128 = vmatpush2.msra.mxu0 0.0
    %129 = vmatprep.subr.mxu0 0.0
    %130 = vmatpush2.msra.mxu0 0.0
    %131 = vmatprep.subr.mxu0 0.0
    %132 = vmatpush2.msra.mxu0 0.0
    %133 = vmatprep.subr.mxu0 0.0
    %134 = vmatpush2.msra.mxu0 0.0
    %135 = vmatprep.subr.mxu0 0.0
    %136 = vmatpush2.msra.mxu0 0.0
    %137 = vmatprep.subr.mxu0 0.0
    %138 = vmatpush2.msra.mxu0 0.0
    %139 = vmatprep.subr.mxu0 0.0
    %140 = vmatpush2.msra.mxu0 0.0
    %141 = vmatprep.subr.mxu0 0.0
    %142 = vmatpush2.msra.mxu0 0.0
    %143 = vmatprep.mubr.f32.mxu0 0.0
    %144 = vmatmul.mubr.f32.gmra.mxu0 %v68
    %v145 = vpop.f32.mrf.mxu0
    %v146 = vadd.f32 %v64, %v145
    %v147 = vpop.f32.mrf.mxu0
    %148 = vmatprep.mubr.f32.mxu0 0.0
    %149 = vmatmul.mubr.f32.gmra.mxu0 %v71
    %v150 = vpop.f32.mrf.mxu0
    %v151 = vadd.f32 %v64, %v150
    %v152 = vpop.f32.mrf.mxu0
    %153 = vmatprep.mubr.f32.mxu0 0.0
    %154 = vmatmul.mubr.f32.gmra.mxu0 %v74
    %v155 = vpop.f32.mrf.mxu0
    %v156 = vadd.f32 %v64, %v155
    %v157 = vpop.f32.mrf.mxu0
    %158 = vmatprep.mubr.f32.mxu0 0.0
    %159 = vmatmul.mubr.f32.gmra.mxu0 %v77
    %v160 = vpop.f32.mrf.mxu0
    %v161 = vadd.f32 %v64, %v160
    %v162 = vpop.f32.mrf.mxu0
    %163 = vdwg.mxu0
    %v164 = vmax.f32 %v146, 0.0
    %v165 = vmax.f32 %v151, 0.0
    %v166 = vmax.f32 %v156, 0.0
    %v167 = vmax.f32 %v161, 0.0
    %v168 = vld [vmem:[%s1] sm:$0xff]
    %v169 = vld [vmem:[%s1 + $0x8] sm:$0xff]
    %v170 = vld [vmem:[%s1 + $0x10] sm:$0xff]
    %v171 = vld [vmem:[%s1 + $0x18] sm:$0xff]
    %v172 = vld [vmem:[%s4] sm:$0xf]
    %v173 = vld [vmem:[%s5] sm:$0x1]
    %v175 = vlaneseq
    %v176 = vshrl.u32 %v175, 7
    %v177 = vsub.s32 0, %v176
    %v178 = vrot.slane %v173, %v177
    %vm180 = vcmask 31744
    %v182 = vsel %vm180, %v168, 0
    %v185 = vsel %vm180, %v169, 0
    %v188 = vsel %vm180, %v170, 0
    %v191 = vsel %vm180, %v171, 0
    %vm193 = vcmask 1043456
    %v195 = vsel %vm193, %v172, 0
    %197 = vmatprep.subr.mxu0 0.0
    %198 = vmatpush1.msra.mxu0 0.0
    %199 = vmatprep.subr.mxu0 0.0
    %200 = vmatpush1.msra.mxu0 0.0
    %201 = vmatprep.subr.mxu0 0.0
    %202 = vmatpush1.msra.mxu0 0.0
    %203 = vmatprep.subr.mxu0 0.0
    %204 = vmatpush1.msra.mxu0 0.0
    %205 = vmatprep.subr.mxu0 0.0
    %206 = vmatpush1.msra.mxu0 0.0
    %207 = vmatprep.subr.mxu0 0.0
    %208 = vmatpush1.msra.mxu0 0.0
    %209 = vmatprep.subr.mxu0 0.0
    %210 = vmatpush1.msra.mxu0 0.0
    %211 = vmatprep.subr.mxu0 0.0
    %212 = vmatpush1.msra.mxu0 0.0
    %213 = vmatprep.subr.mxu0 0.0
    %214 = vmatpush1.msra.mxu0 0.0
    %215 = vmatprep.subr.mxu0 0.0
    %216 = vmatpush1.msra.mxu0 0.0
    %217 = vmatprep.subr.mxu0 0.0
    %218 = vmatpush1.msra.mxu0 0.0
    %219 = vmatprep.subr.mxu0 0.0
    %220 = vmatpush1.msra.mxu0 0.0
    %221 = vmatprep.subr.mxu0 0.0
    %222 = vmatpush1.msra.mxu0 0.0
    %223 = vmatprep.subr.mxu0 0.0
    %224 = vmatpush1.msra.mxu0 0.0
    %225 = vmatprep.subr.mxu0 0.0
    %226 = vmatpush1.msra.mxu0 0.0
    %227 = vmatprep.subr.mxu0 0.0
    %228 = vmatpush1.msra.mxu0 %v195
    %229 = vmatprep.subr.mxu0 0.0
    %230 = vmatpush2.msra.mxu0 0.0
    %231 = vmatprep.subr.mxu0 0.0
    %232 = vmatpush2.msra.mxu0 0.0
    %233 = vmatprep.subr.mxu0 0.0
    %234 = vmatpush2.msra.mxu0 0.0
    %235 = vmatprep.subr.mxu0 0.0
    %236 = vmatpush2.msra.mxu0 0.0
    %237 = vmatprep.subr.mxu0 0.0
    %238 = vmatpush2.msra.mxu0 0.0
    %239 = vmatprep.subr.mxu0 0.0
    %240 = vmatpush2.msra.mxu0 0.0
    %241 = vmatprep.subr.mxu0 0.0
    %242 = vmatpush2.msra.mxu0 0.0
    %243 = vmatprep.subr.mxu0 0.0
    %244 = vmatpush2.msra.mxu0 0.0
    %245 = vmatprep.subr.mxu0 0.0
    %246 = vmatpush2.msra.mxu0 0.0
    %247 = vmatprep.subr.mxu0 0.0
    %248 = vmatpush2.msra.mxu0 0.0
    %249 = vmatprep.subr.mxu0 0.0
    %250 = vmatpush2.msra.mxu0 0.0
    %251 = vmatprep.subr.mxu0 0.0
    %252 = vmatpush2.msra.mxu0 0.0
    %253 = vmatprep.subr.mxu0 0.0
    %254 = vmatpush2.msra.mxu0 0.0
    %255 = vmatprep.subr.mxu0 0.0
    %256 = vmatpush2.msra.mxu0 0.0
    %257 = vmatprep.subr.mxu0 0.0
    %258 = vmatpush2.msra.mxu0 0.0
    %259 = vmatprep.subr.mxu0 0.0
    %260 = vmatpush2.msra.mxu0 0.0
    %261 = vmatprep.mubr.f32.mxu0 0.0
    %262 = vmatmul.mubr.f32.gmra.mxu0 %v182
    %v263 = vpop.f32.mrf.mxu0
    %v264 = vadd.f32 %v178, %v263
    %v265 = vpop.f32.mrf.mxu0
    %266 = vmatprep.mubr.f32.mxu0 0.0
    %267 = vmatmul.mubr.f32.gmra.mxu0 %v185
    %v268 = vpop.f32.mrf.mxu0
    %v269 = vadd.f32 %v178, %v268
    %v270 = vpop.f32.mrf.mxu0
    %271 = vmatprep.mubr.f32.mxu0 0.0
    %272 = vmatmul.mubr.f32.gmra.mxu0 %v188
    %v273 = vpop.f32.mrf.mxu0
    %v274 = vadd.f32 %v178, %v273
    %v275 = vpop.f32.mrf.mxu0
    %276 = vmatprep.mubr.f32.mxu0 0.0
    %277 = vmatmul.mubr.f32.gmra.mxu0 %v191
    %v278 = vpop.f32.mrf.mxu0
    %v279 = vadd.f32 %v178, %v278
    %v280 = vpop.f32.mrf.mxu0
    %281 = vdwg.mxu0
    %v282 = vmax.f32 %v264, 0.0
    %v283 = vmax.f32 %v269, 0.0
    %v284 = vmax.f32 %v274, 0.0
    %v285 = vmax.f32 %v279, 0.0
    %v286 = vld [vmem:[%s6] sm:$0xff]
    %v287 = vld [vmem:[%s6 + $0x8] sm:$0xff]
    %v288 = vld [vmem:[%s6 + $0x10] sm:$0xff]
    %v289 = vld [vmem:[%s6 + $0x18] sm:$0xff]
    %v290 = vld [vmem:[%s7] sm:$0x1]
    %v292 = vlaneseq
    %v293 = vshrl.u32 %v292, 7
    %v294 = vsub.s32 0, %v293
    %v295 = vrot.slane %v290, %v294
    %vm297 = vcmask 261120
    %v299 = vsel %vm297, %v164, 0
    %v302 = vsel %vm297, %v165, 0
    %v305 = vsel %vm297, %v166, 0
    %v308 = vsel %vm297, %v167, 0
    %310 = vmatprep.subr.mxu0 0.0
    %311 = vmatpush1.msra.mxu0 0.0
    %312 = vmatprep.subr.mxu0 0.0
    %313 = vmatpush1.msra.mxu0 0.0
    %314 = vmatprep.subr.mxu0 0.0
    %315 = vmatpush1.msra.mxu0 0.0
    %316 = vmatprep.subr.mxu0 0.0
    %317 = vmatpush1.msra.mxu0 0.0
    %318 = vmatprep.subr.mxu0 0.0
    %319 = vmatpush1.msra.mxu0 0.0
    %320 = vmatprep.subr.mxu0 0.0
    %321 = vmatpush1.msra.mxu0 0.0
    %322 = vmatprep.subr.mxu0 0.0
    %323 = vmatpush1.msra.mxu0 0.0
    %324 = vmatprep.subr.mxu0 0.0
    %325 = vmatpush1.msra.mxu0 0.0
    %326 = vmatprep.subr.mxu0 0.0
    %327 = vmatpush1.msra.mxu0 0.0
    %328 = vmatprep.subr.mxu0 0.0
    %329 = vmatpush1.msra.mxu0 0.0
    %330 = vmatprep.subr.mxu0 0.0
    %331 = vmatpush1.msra.mxu0 0.0
    %332 = vmatprep.subr.mxu0 0.0
    %333 = vmatpush1.msra.mxu0 0.0
    %334 = vmatprep.subr.mxu0 0.0
    %335 = vmatpush1.msra.mxu0 %v289
    %336 = vmatprep.subr.mxu0 0.0
    %337 = vmatpush1.msra.mxu0 %v288
    %338 = vmatprep.subr.mxu0 0.0
    %339 = vmatpush1.msra.mxu0 %v287
    %340 = vmatprep.subr.mxu0 0.0
    %341 = vmatpush1.msra.mxu0 %v286
    %342 = vmatprep.subr.mxu0 0.0
    %343 = vmatpush2.msra.mxu0 0.0
    %344 = vmatprep.subr.mxu0 0.0
    %345 = vmatpush2.msra.mxu0 0.0
    %346 = vmatprep.subr.mxu0 0.0
    %347 = vmatpush2.msra.mxu0 0.0
    %348 = vmatprep.subr.mxu0 0.0
    %349 = vmatpush2.msra.mxu0 0.0
    %350 = vmatprep.subr.mxu0 0.0
    %351 = vmatpush2.msra.mxu0 0.0
    %352 = vmatprep.subr.mxu0 0.0
    %353 = vmatpush2.msra.mxu0 0.0
    %354 = vmatprep.subr.mxu0 0.0
    %355 = vmatpush2.msra.mxu0 0.0
    %356 = vmatprep.subr.mxu0 0.0
    %357 = vmatpush2.msra.mxu0 0.0
    %358 = vmatprep.subr.mxu0 0.0
    %359 = vmatpush2.msra.mxu0 0.0
    %360 = vmatprep.subr.mxu0 0.0
    %361 = vmatpush2.msra.mxu0 0.0
    %362 = vmatprep.subr.mxu0 0.0
    %363 = vmatpush2.msra.mxu0 0.0
    %364 = vmatprep.subr.mxu0 0.0
    %365 = vmatpush2.msra.mxu0 0.0
    %366 = vmatprep.subr.mxu0 0.0
    %367 = vmatpush2.msra.mxu0 0.0
    %368 = vmatprep.subr.mxu0 0.0
    %369 = vmatpush2.msra.mxu0 0.0
    %370 = vmatprep.subr.mxu0 0.0
    %371 = vmatpush2.msra.mxu0 0.0
    %372 = vmatprep.subr.mxu0 0.0
    %373 = vmatpush2.msra.mxu0 0.0
    %374 = vmatprep.mubr.f32.mxu0 0.0
    %375 = vmatmul.mubr.f32.gmra.mxu0 %v299
    %v376 = vpop.f32.mrf.mxu0
    %v377 = vadd.f32 %v295, %v376
    %v378 = vpop.f32.mrf.mxu0
    %379 = vmatprep.mubr.f32.mxu0 0.0
    %380 = vmatmul.mubr.f32.gmra.mxu0 %v302
    %v381 = vpop.f32.mrf.mxu0
    %v382 = vadd.f32 %v295, %v381
    %v383 = vpop.f32.mrf.mxu0
    %384 = vmatprep.mubr.f32.mxu0 0.0
    %385 = vmatmul.mubr.f32.gmra.mxu0 %v305
    %v386 = vpop.f32.mrf.mxu0
    %v387 = vadd.f32 %v295, %v386
    %v388 = vpop.f32.mrf.mxu0
    %389 = vmatprep.mubr.f32.mxu0 0.0
    %390 = vmatmul.mubr.f32.gmra.mxu0 %v308
    %v391 = vpop.f32.mrf.mxu0
    %v392 = vadd.f32 %v295, %v391
    %v393 = vpop.f32.mrf.mxu0
    %394 = vdwg.mxu0
    %v395 = vmax.f32 %v377, 0.0
    %v396 = vmax.f32 %v382, 0.0
    %v397 = vmax.f32 %v387, 0.0
    %v398 = vmax.f32 %v392, 0.0
    %v399 = vld [vmem:[%s8] sm:$0xff]
    %v400 = vld [vmem:[%s8 + $0x8] sm:$0xff]
    %v401 = vld [vmem:[%s8 + $0x10] sm:$0xff]
    %v402 = vld [vmem:[%s8 + $0x18] sm:$0xff]
    %v403 = vld [vmem:[%s9] sm:$0x1]
    %v405 = vlaneseq
    %v406 = vshrl.u32 %v405, 7
    %v407 = vsub.s32 0, %v406
    %v408 = vrot.slane %v403, %v407
    %v411 = vsel %vm297, %v282, 0
    %v414 = vsel %vm297, %v283, 0
    %v417 = vsel %vm297, %v284, 0
    %v420 = vsel %vm297, %v285, 0
    %422 = vmatprep.subr.mxu0 0.0
    %423 = vmatpush1.msra.mxu0 0.0
    %424 = vmatprep.subr.mxu0 0.0
    %425 = vmatpush1.msra.mxu0 0.0
    %426 = vmatprep.subr.mxu0 0.0
    %427 = vmatpush1.msra.mxu0 0.0
    %428 = vmatprep.subr.mxu0 0.0
    %429 = vmatpush1.msra.mxu0 0.0
    %430 = vmatprep.subr.mxu0 0.0
    %431 = vmatpush1.msra.mxu0 0.0
    %432 = vmatprep.subr.mxu0 0.0
    %433 = vmatpush1.msra.mxu0 0.0
    %434 = vmatprep.subr.mxu0 0.0
    %435 = vmatpush1.msra.mxu0 0.0
    %436 = vmatprep.subr.mxu0 0.0
    %437 = vmatpush1.msra.mxu0 0.0
    %438 = vmatprep.subr.mxu0 0.0
    %439 = vmatpush1.msra.mxu0 0.0
    %440 = vmatprep.subr.mxu0 0.0
    %441 = vmatpush1.msra.mxu0 0.0
    %442 = vmatprep.subr.mxu0 0.0
    %443 = vmatpush1.msra.mxu0 0.0
    %444 = vmatprep.subr.mxu0 0.0
    %445 = vmatpush1.msra.mxu0 0.0
    %446 = vmatprep.subr.mxu0 0.0
    %447 = vmatpush1.msra.mxu0 %v402
    %448 = vmatprep.subr.mxu0 0.0
    %449 = vmatpush1.msra.mxu0 %v401
    %450 = vmatprep.subr.mxu0 0.0
    %451 = vmatpush1.msra.mxu0 %v400
    %452 = vmatprep.subr.mxu0 0.0
    %453 = vmatpush1.msra.mxu0 %v399
    %454 = vmatprep.subr.mxu0 0.0
    %455 = vmatpush2.msra.mxu0 0.0
    %456 = vmatprep.subr.mxu0 0.0
    %457 = vmatpush2.msra.mxu0 0.0
    %458 = vmatprep.subr.mxu0 0.0
    %459 = vmatpush2.msra.mxu0 0.0
    %460 = vmatprep.subr.mxu0 0.0
    %461 = vmatpush2.msra.mxu0 0.0
    %462 = vmatprep.subr.mxu0 0.0
    %463 = vmatpush2.msra.mxu0 0.0
    %464 = vmatprep.subr.mxu0 0.0
    %465 = vmatpush2.msra.mxu0 0.0
    %466 = vmatprep.subr.mxu0 0.0
    %467 = vmatpush2.msra.mxu0 0.0
    %468 = vmatprep.subr.mxu0 0.0
    %469 = vmatpush2.msra.mxu0 0.0
    %470 = vmatprep.subr.mxu0 0.0
    %471 = vmatpush2.msra.mxu0 0.0
    %472 = vmatprep.subr.mxu0 0.0
    %473 = vmatpush2.msra.mxu0 0.0
    %474 = vmatprep.subr.mxu0 0.0
    %475 = vmatpush2.msra.mxu0 0.0
    %476 = vmatprep.subr.mxu0 0.0
    %477 = vmatpush2.msra.mxu0 0.0
    %478 = vmatprep.subr.mxu0 0.0
    %479 = vmatpush2.msra.mxu0 0.0
    %480 = vmatprep.subr.mxu0 0.0
    %481 = vmatpush2.msra.mxu0 0.0
    %482 = vmatprep.subr.mxu0 0.0
    %483 = vmatpush2.msra.mxu0 0.0
    %484 = vmatprep.subr.mxu0 0.0
    %485 = vmatpush2.msra.mxu0 0.0
    %486 = vmatprep.mubr.f32.mxu0 0.0
    %487 = vmatmul.mubr.f32.gmra.mxu0 %v411
    %v488 = vpop.f32.mrf.mxu0
    %v489 = vadd.f32 %v408, %v488
    %v490 = vpop.f32.mrf.mxu0
    %491 = vmatprep.mubr.f32.mxu0 0.0
    %492 = vmatmul.mubr.f32.gmra.mxu0 %v414
    %v493 = vpop.f32.mrf.mxu0
    %v494 = vadd.f32 %v408, %v493
    %v495 = vpop.f32.mrf.mxu0
    %496 = vmatprep.mubr.f32.mxu0 0.0
    %497 = vmatmul.mubr.f32.gmra.mxu0 %v417
    %v498 = vpop.f32.mrf.mxu0
    %v499 = vadd.f32 %v408, %v498
    %v500 = vpop.f32.mrf.mxu0
    %501 = vmatprep.mubr.f32.mxu0 0.0
    %502 = vmatmul.mubr.f32.gmra.mxu0 %v420
    %v503 = vpop.f32.mrf.mxu0
    %v504 = vadd.f32 %v408, %v503
    %v505 = vpop.f32.mrf.mxu0
    %506 = vdwg.mxu0
    %v507 = vmax.f32 %v489, 0.0
    %v508 = vmax.f32 %v494, 0.0
    %v509 = vmax.f32 %v499, 0.0
    %v510 = vmax.f32 %v504, 0.0
    %vm511 = vcmask 130048
    %v513 = vsel %vm511, %v395, 0
    %v516 = vsel %vm511, %v396, 0
    %v519 = vsel %vm511, %v507, 0
    %v522 = vsel %vm511, %v508, 0
    %524 = vmatprep.subr.mxu0 0.0
    %525 = vmatpush1.xpose.msra.mxu0 0.0
    %526 = vmatprep.subr.mxu0 0.0
    %527 = vmatpush1.xpose.msra.mxu0 0.0
    %528 = vmatprep.subr.mxu0 0.0
    %529 = vmatpush1.xpose.msra.mxu0 0.0
    %530 = vmatprep.subr.mxu0 0.0
    %531 = vmatpush1.xpose.msra.mxu0 0.0
    %532 = vmatprep.subr.mxu0 0.0
    %533 = vmatpush1.xpose.msra.mxu0 0.0
    %534 = vmatprep.subr.mxu0 0.0
    %535 = vmatpush1.xpose.msra.mxu0 0.0
    %536 = vmatprep.subr.mxu0 0.0
    %537 = vmatpush1.xpose.msra.mxu0 0.0
    %538 = vmatprep.subr.mxu0 0.0
    %539 = vmatpush1.xpose.msra.mxu0 0.0
    %540 = vmatprep.subr.mxu0 0.0
    %541 = vmatpush1.xpose.msra.mxu0 0.0
    %542 = vmatprep.subr.mxu0 0.0
    %543 = vmatpush1.xpose.msra.mxu0 0.0
    %544 = vmatprep.subr.mxu0 0.0
    %545 = vmatpush1.xpose.msra.mxu0 0.0
    %546 = vmatprep.subr.mxu0 0.0
    %547 = vmatpush1.xpose.msra.mxu0 0.0
    %548 = vmatprep.subr.mxu0 0.0
    %549 = vmatpush1.xpose.msra.mxu0 0.0
    %550 = vmatprep.subr.mxu0 0.0
    %551 = vmatpush1.xpose.msra.mxu0 0.0
    %552 = vmatprep.subr.mxu0 0.0
    %553 = vmatpush1.xpose.msra.mxu0 %v522
    %554 = vmatprep.subr.mxu0 0.0
    %555 = vmatpush1.xpose.msra.mxu0 %v519
    %556 = vmatprep.subr.mxu0 0.0
    %557 = vmatpush2.xpose.msra.mxu0 0.0
    %558 = vmatprep.subr.mxu0 0.0
    %559 = vmatpush2.xpose.msra.mxu0 0.0
    %560 = vmatprep.subr.mxu0 0.0
    %561 = vmatpush2.xpose.msra.mxu0 0.0
    %562 = vmatprep.subr.mxu0 0.0
    %563 = vmatpush2.xpose.msra.mxu0 0.0
    %564 = vmatprep.subr.mxu0 0.0
    %565 = vmatpush2.xpose.msra.mxu0 0.0
    %566 = vmatprep.subr.mxu0 0.0
    %567 = vmatpush2.xpose.msra.mxu0 0.0
    %568 = vmatprep.subr.mxu0 0.0
    %569 = vmatpush2.xpose.msra.mxu0 0.0
    %570 = vmatprep.subr.mxu0 0.0
    %571 = vmatpush2.xpose.msra.mxu0 0.0
    %572 = vmatprep.subr.mxu0 0.0
    %573 = vmatpush2.xpose.msra.mxu0 0.0
    %574 = vmatprep.subr.mxu0 0.0
    %575 = vmatpush2.xpose.msra.mxu0 0.0
    %576 = vmatprep.subr.mxu0 0.0
    %577 = vmatpush2.xpose.msra.mxu0 0.0
    %578 = vmatprep.subr.mxu0 0.0
    %579 = vmatpush2.xpose.msra.mxu0 0.0
    %580 = vmatprep.subr.mxu0 0.0
    %581 = vmatpush2.xpose.msra.mxu0 0.0
    %582 = vmatprep.subr.mxu0 0.0
    %583 = vmatpush2.xpose.msra.mxu0 0.0
    %584 = vmatprep.subr.mxu0 0.0
    %585 = vmatpush2.xpose.msra.mxu0 0.0
    %586 = vmatprep.subr.mxu0 0.0
    %587 = vmatpush2.xpose.msra.mxu0 0.0
    %588 = vmatprep.mubr.f32.mxu0 0.0
    %589 = vmatmul.mubr.f32.gmra.mxu0 %v513
    %v590 = vpop.f32.mrf.mxu0
    %v591 = vadd.f32 0.0, %v590
    %v592 = vpop.f32.mrf.mxu0
    %593 = vmatprep.mubr.f32.mxu0 0.0
    %594 = vmatmul.mubr.f32.gmra.mxu0 %v516
    %v595 = vpop.f32.mrf.mxu0
    %v596 = vadd.f32 0.0, %v595
    %v597 = vpop.f32.mrf.mxu0
    %598 = vdwg.mxu0
    %599 = vmatprep.subr.mxu0 0.0
    %600 = vmatpush1.xpose.msra.mxu0 0.0
    %601 = vmatprep.subr.mxu0 0.0
    %602 = vmatpush1.xpose.msra.mxu0 0.0
    %603 = vmatprep.subr.mxu0 0.0
    %604 = vmatpush1.xpose.msra.mxu0 0.0
    %605 = vmatprep.subr.mxu0 0.0
    %606 = vmatpush1.xpose.msra.mxu0 0.0
    %607 = vmatprep.subr.mxu0 0.0
    %608 = vmatpush1.xpose.msra.mxu0 0.0
    %609 = vmatprep.subr.mxu0 0.0
    %610 = vmatpush1.xpose.msra.mxu0 0.0
    %611 = vmatprep.subr.mxu0 0.0
    %612 = vmatpush1.xpose.msra.mxu0 0.0
    %613 = vmatprep.subr.mxu0 0.0
    %614 = vmatpush1.xpose.msra.mxu0 0.0
    %615 = vmatprep.subr.mxu0 0.0
    %616 = vmatpush1.xpose.msra.mxu0 0.0
    %617 = vmatprep.subr.mxu0 0.0
    %618 = vmatpush1.xpose.msra.mxu0 0.0
    %619 = vmatprep.subr.mxu0 0.0
    %620 = vmatpush1.xpose.msra.mxu0 0.0
    %621 = vmatprep.subr.mxu0 0.0
    %622 = vmatpush1.xpose.msra.mxu0 0.0
    %623 = vmatprep.subr.mxu0 0.0
    %624 = vmatpush1.xpose.msra.mxu0 0.0
    %625 = vmatprep.subr.mxu0 0.0
    %626 = vmatpush1.xpose.msra.mxu0 0.0
    %627 = vmatprep.subr.mxu0 0.0
    %628 = vmatpush1.xpose.msra.mxu0 %v516
    %629 = vmatprep.subr.mxu0 0.0
    %630 = vmatpush1.xpose.msra.mxu0 %v513
    %631 = vmatprep.subr.mxu0 0.0
    %632 = vmatpush2.xpose.msra.mxu0 0.0
    %633 = vmatprep.subr.mxu0 0.0
    %634 = vmatpush2.xpose.msra.mxu0 0.0
    %635 = vmatprep.subr.mxu0 0.0
    %636 = vmatpush2.xpose.msra.mxu0 0.0
    %637 = vmatprep.subr.mxu0 0.0
    %638 = vmatpush2.xpose.msra.mxu0 0.0
    %639 = vmatprep.subr.mxu0 0.0
    %640 = vmatpush2.xpose.msra.mxu0 0.0
    %641 = vmatprep.subr.mxu0 0.0
    %642 = vmatpush2.xpose.msra.mxu0 0.0
    %643 = vmatprep.subr.mxu0 0.0
    %644 = vmatpush2.xpose.msra.mxu0 0.0
    %645 = vmatprep.subr.mxu0 0.0
    %646 = vmatpush2.xpose.msra.mxu0 0.0
    %647 = vmatprep.subr.mxu0 0.0
    %648 = vmatpush2.xpose.msra.mxu0 0.0
    %649 = vmatprep.subr.mxu0 0.0
    %650 = vmatpush2.xpose.msra.mxu0 0.0
    %651 = vmatprep.subr.mxu0 0.0
    %652 = vmatpush2.xpose.msra.mxu0 0.0
    %653 = vmatprep.subr.mxu0 0.0
    %654 = vmatpush2.xpose.msra.mxu0 0.0
    %655 = vmatprep.subr.mxu0 0.0
    %656 = vmatpush2.xpose.msra.mxu0 0.0
    %657 = vmatprep.subr.mxu0 0.0
    %658 = vmatpush2.xpose.msra.mxu0 0.0
    %659 = vmatprep.subr.mxu0 0.0
    %660 = vmatpush2.xpose.msra.mxu0 0.0
    %661 = vmatprep.subr.mxu0 0.0
    %662 = vmatpush2.xpose.msra.mxu0 0.0
    %663 = vmatprep.mubr.f32.mxu0 0.0
    %664 = vmatmul.mubr.f32.gmra.mxu0 %v519
    %v665 = vpop.f32.mrf.mxu0
    %v666 = vadd.f32 0.0, %v665
    %v667 = vpop.f32.mrf.mxu0
    %668 = vmatprep.mubr.f32.mxu0 0.0
    %669 = vmatmul.mubr.f32.gmra.mxu0 %v522
    %v670 = vpop.f32.mrf.mxu0
    %v671 = vadd.f32 0.0, %v670
    %v672 = vpop.f32.mrf.mxu0
    %673 = vdwg.mxu0
    %v674 = vsel %vm511, %v591, -inf
    %675 = vmax.xlane.f32.xlu0 %v674
    %v676 = vpop.xlane.xlu0 %675
    %v677 = vsel %vm511, %v596, -inf
    %678 = vmax.xlane.f32.xlu0 %v677
    %v679 = vpop.xlane.xlu0 %678
    %v680 = vsub.f32 %v591, %v676
    %v681 = vsub.f32 %v596, %v679
    %v682 = vmul.f32 %v680, 1.442695
    %v683 = vpow.pop %v682
    %v684 = vmul.f32 %v681, 1.442695
    %v685 = vpow.pop %v684
    %v686 = vsel %vm511, %v683, 0.0
    %687 = vadd.xlane.f32.xlu0 %v686
    %v688 = vpop.xlane.xlu0 %687
    %v689 = vsel %vm511, %v685, 0.0
    %690 = vadd.xlane.f32.xlu0 %v689
    %v691 = vpop.xlane.xlu0 %690
    %v692 = vrcp.pop %v688
    %v693 = vrcp.pop %v691
    %v694 = vmul.f32 %v683, %v692
    %v695 = vmul.f32 %v685, %v693
    %v696 = vsel %vm511, %v666, -inf
    %697 = vmax.xlane.f32.xlu0 %v696
    %v698 = vpop.xlane.xlu0 %697
    %v699 = vsel %vm511, %v671, -inf
    %700 = vmax.xlane.f32.xlu0 %v699
    %v701 = vpop.xlane.xlu0 %700
    %v702 = vsub.f32 %v666, %v698
    %v703 = vsub.f32 %v671, %v701
    %v704 = vmul.f32 %v702, 1.442695
    %v705 = vpow.pop %v704
    %v706 = vmul.f32 %v703, 1.442695
    %v707 = vpow.pop %v706
    %v708 = vsel %vm511, %v705, 0.0
    %709 = vadd.xlane.f32.xlu0 %v708
    %v710 = vpop.xlane.xlu0 %709
    %v711 = vsel %vm511, %v707, 0.0
    %712 = vadd.xlane.f32.xlu0 %v711
    %v713 = vpop.xlane.xlu0 %712
    %v714 = vrcp.pop %v710
    %v715 = vrcp.pop %v713
    %v716 = vmul.f32 %v705, %v714
    %v717 = vmul.f32 %v707, %v715
    %718 = vrot.lane.b32.xlu0 %v507, 96
    %v719 = vpop.permute.xlu0 %718
    %720 = vrot.lane.b32.xlu0 %v508, 96
    %v721 = vpop.permute.xlu0 %720
    %v725 = vsel %vm511, %v694, 0
    %v728 = vsel %vm511, %v695, 0
    %730 = vmatprep.subr.mxu0 0.0
    %731 = vmatpush1.msra.mxu0 0.0
    %732 = vmatprep.subr.mxu0 0.0
    %733 = vmatpush1.msra.mxu0 0.0
    %734 = vmatprep.subr.mxu0 0.0
    %735 = vmatpush1.msra.mxu0 0.0
    %736 = vmatprep.subr.mxu0 0.0
    %737 = vmatpush1.msra.mxu0 0.0
    %738 = vmatprep.subr.mxu0 0.0
    %739 = vmatpush1.msra.mxu0 0.0
    %740 = vmatprep.subr.mxu0 0.0
    %741 = vmatpush1.msra.mxu0 0.0
    %742 = vmatprep.subr.mxu0 0.0
    %743 = vmatpush1.msra.mxu0 0.0
    %744 = vmatprep.subr.mxu0 0.0
    %745 = vmatpush1.msra.mxu0 0.0
    %746 = vmatprep.subr.mxu0 0.0
    %747 = vmatpush1.msra.mxu0 0.0
    %748 = vmatprep.subr.mxu0 0.0
    %749 = vmatpush1.msra.mxu0 0.0
    %750 = vmatprep.subr.mxu0 0.0
    %751 = vmatpush1.msra.mxu0 0.0
    %752 = vmatprep.subr.mxu0 0.0
    %753 = vmatpush1.msra.mxu0 0.0
    %754 = vmatprep.subr.mxu0 0.0
    %755 = vmatpush1.msra.mxu0 0.0
    %756 = vmatprep.subr.mxu0 0.0
    %757 = vmatpush1.msra.mxu0 0.0
    %758 = vmatprep.subr.mxu0 0.0
    %759 = vmatpush1.msra.mxu0 %v721
    %760 = vmatprep.subr.mxu0 0.0
    %761 = vmatpush1.msra.mxu0 %v719
    %762 = vmatprep.subr.mxu0 0.0
    %763 = vmatpush2.msra.mxu0 0.0
    %764 = vmatprep.subr.mxu0 0.0
    %765 = vmatpush2.msra.mxu0 0.0
    %766 = vmatprep.subr.mxu0 0.0
    %767 = vmatpush2.msra.mxu0 0.0
    %768 = vmatprep.subr.mxu0 0.0
    %769 = vmatpush2.msra.mxu0 0.0
    %770 = vmatprep.subr.mxu0 0.0
    %771 = vmatpush2.msra.mxu0 0.0
    %772 = vmatprep.subr.mxu0 0.0
    %773 = vmatpush2.msra.mxu0 0.0
    %774 = vmatprep.subr.mxu0 0.0
    %775 = vmatpush2.msra.mxu0 0.0
    %776 = vmatprep.subr.mxu0 0.0
    %777 = vmatpush2.msra.mxu0 0.0
    %778 = vmatprep.subr.mxu0 0.0
    %779 = vmatpush2.msra.mxu0 0.0
    %780 = vmatprep.subr.mxu0 0.0
    %781 = vmatpush2.msra.mxu0 0.0
    %782 = vmatprep.subr.mxu0 0.0
    %783 = vmatpush2.msra.mxu0 0.0
    %784 = vmatprep.subr.mxu0 0.0
    %785 = vmatpush2.msra.mxu0 0.0
    %786 = vmatprep.subr.mxu0 0.0
    %787 = vmatpush2.msra.mxu0 0.0
    %788 = vmatprep.subr.mxu0 0.0
    %789 = vmatpush2.msra.mxu0 0.0
    %790 = vmatprep.subr.mxu0 0.0
    %791 = vmatpush2.msra.mxu0 0.0
    %792 = vmatprep.subr.mxu0 0.0
    %793 = vmatpush2.msra.mxu0 0.0
    %794 = vmatprep.mubr.f32.mxu0 0.0
    %795 = vmatmul.mubr.f32.gmra.mxu0 %v725
    %v796 = vpop.f32.mrf.mxu0
    %v797 = vadd.f32 0.0, %v796
    %v798 = vpop.f32.mrf.mxu0
    %799 = vmatprep.mubr.f32.mxu0 0.0
    %800 = vmatmul.mubr.f32.gmra.mxu0 %v728
    %v801 = vpop.f32.mrf.mxu0
    %v802 = vadd.f32 0.0, %v801
    %v803 = vpop.f32.mrf.mxu0
    %804 = vdwg.mxu0
    %v806 = vsel %vm511, %v716, 0
    %v809 = vsel %vm511, %v717, 0
    %811 = vmatprep.subr.mxu0 0.0
    %812 = vmatpush1.msra.mxu0 0.0
    %813 = vmatprep.subr.mxu0 0.0
    %814 = vmatpush1.msra.mxu0 0.0
    %815 = vmatprep.subr.mxu0 0.0
    %816 = vmatpush1.msra.mxu0 0.0
    %817 = vmatprep.subr.mxu0 0.0
    %818 = vmatpush1.msra.mxu0 0.0
    %819 = vmatprep.subr.mxu0 0.0
    %820 = vmatpush1.msra.mxu0 0.0
    %821 = vmatprep.subr.mxu0 0.0
    %822 = vmatpush1.msra.mxu0 0.0
    %823 = vmatprep.subr.mxu0 0.0
    %824 = vmatpush1.msra.mxu0 0.0
    %825 = vmatprep.subr.mxu0 0.0
    %826 = vmatpush1.msra.mxu0 0.0
    %827 = vmatprep.subr.mxu0 0.0
    %828 = vmatpush1.msra.mxu0 0.0
    %829 = vmatprep.subr.mxu0 0.0
    %830 = vmatpush1.msra.mxu0 0.0
    %831 = vmatprep.subr.mxu0 0.0
    %832 = vmatpush1.msra.mxu0 0.0
    %833 = vmatprep.subr.mxu0 0.0
    %834 = vmatpush1.msra.mxu0 0.0
    %835 = vmatprep.subr.mxu0 0.0
    %836 = vmatpush1.msra.mxu0 0.0
    %837 = vmatprep.subr.mxu0 0.0
    %838 = vmatpush1.msra.mxu0 0.0
    %839 = vmatprep.subr.mxu0 0.0
    %840 = vmatpush1.msra.mxu0 %v396
    %841 = vmatprep.subr.mxu0 0.0
    %842 = vmatpush1.msra.mxu0 %v395
    %843 = vmatprep.subr.mxu0 0.0
    %844 = vmatpush2.msra.mxu0 0.0
    %845 = vmatprep.subr.mxu0 0.0
    %846 = vmatpush2.msra.mxu0 0.0
    %847 = vmatprep.subr.mxu0 0.0
    %848 = vmatpush2.msra.mxu0 0.0
    %849 = vmatprep.subr.mxu0 0.0
    %850 = vmatpush2.msra.mxu0 0.0
    %851 = vmatprep.subr.mxu0 0.0
    %852 = vmatpush2.msra.mxu0 0.0
    %853 = vmatprep.subr.mxu0 0.0
    %854 = vmatpush2.msra.mxu0 0.0
    %855 = vmatprep.subr.mxu0 0.0
    %856 = vmatpush2.msra.mxu0 0.0
    %857 = vmatprep.subr.mxu0 0.0
    %858 = vmatpush2.msra.mxu0 0.0
    %859 = vmatprep.subr.mxu0 0.0
    %860 = vmatpush2.msra.mxu0 0.0
    %861 = vmatprep.subr.mxu0 0.0
    %862 = vmatpush2.msra.mxu0 0.0
    %863 = vmatprep.subr.mxu0 0.0
    %864 = vmatpush2.msra.mxu0 0.0
    %865 = vmatprep.subr.mxu0 0.0
    %866 = vmatpush2.msra.mxu0 0.0
    %867 = vmatprep.subr.mxu0 0.0
    %868 = vmatpush2.msra.mxu0 0.0
    %869 = vmatprep.subr.mxu0 0.0
    %870 = vmatpush2.msra.mxu0 0.0
    %871 = vmatprep.subr.mxu0 0.0
    %872 = vmatpush2.msra.mxu0 0.0
    %873 = vmatprep.subr.mxu0 0.0
    %874 = vmatpush2.msra.mxu0 0.0
    %875 = vmatprep.mubr.f32.mxu0 0.0
    %876 = vmatmul.mubr.f32.gmra.mxu0 %v806
    %v877 = vpop.f32.mrf.mxu0
    %v878 = vadd.f32 0.0, %v877
    %v879 = vpop.f32.mrf.mxu0
    %880 = vmatprep.mubr.f32.mxu0 0.0
    %881 = vmatmul.mubr.f32.gmra.mxu0 %v809
    %v882 = vpop.f32.mrf.mxu0
    %v883 = vadd.f32 0.0, %v882
    %v884 = vpop.f32.mrf.mxu0
    %885 = vdwg.mxu0
    %886 = vrot.lane.b32.xlu0 %v395, 112
    %v887 = vpop.permute.xlu0 %886
    %888 = vrot.lane.b32.xlu0 %v396, 112
    %v889 = vpop.permute.xlu0 %888
    %890 = vrot.lane.b32.xlu0 %v507, 112
    %v891 = vpop.permute.xlu0 %890
    %892 = vrot.lane.b32.xlu0 %v508, 112
    %v893 = vpop.permute.xlu0 %892
    %v894 = vsel %vm511, %v887, 0
    %v896 = vsel %vm511, %v889, 0
    %v898 = vsel %vm511, %v891, 0
    %v900 = vsel %vm511, %v893, 0
    %902 = vmatprep.subr.mxu0 0.0
    %903 = vmatpush1.xpose.msra.mxu0 0.0
    %904 = vmatprep.subr.mxu0 0.0
    %905 = vmatpush1.xpose.msra.mxu0 0.0
    %906 = vmatprep.subr.mxu0 0.0
    %907 = vmatpush1.xpose.msra.mxu0 0.0
    %908 = vmatprep.subr.mxu0 0.0
    %909 = vmatpush1.xpose.msra.mxu0 0.0
    %910 = vmatprep.subr.mxu0 0.0
    %911 = vmatpush1.xpose.msra.mxu0 0.0
    %912 = vmatprep.subr.mxu0 0.0
    %913 = vmatpush1.xpose.msra.mxu0 0.0
    %914 = vmatprep.subr.mxu0 0.0
    %915 = vmatpush1.xpose.msra.mxu0 0.0
    %916 = vmatprep.subr.mxu0 0.0
    %917 = vmatpush1.xpose.msra.mxu0 0.0
    %918 = vmatprep.subr.mxu0 0.0
    %919 = vmatpush1.xpose.msra.mxu0 0.0
    %920 = vmatprep.subr.mxu0 0.0
    %921 = vmatpush1.xpose.msra.mxu0 0.0
    %922 = vmatprep.subr.mxu0 0.0
    %923 = vmatpush1.xpose.msra.mxu0 0.0
    %924 = vmatprep.subr.mxu0 0.0
    %925 = vmatpush1.xpose.msra.mxu0 0.0
    %926 = vmatprep.subr.mxu0 0.0
    %927 = vmatpush1.xpose.msra.mxu0 0.0
    %928 = vmatprep.subr.mxu0 0.0
    %929 = vmatpush1.xpose.msra.mxu0 0.0
    %930 = vmatprep.subr.mxu0 0.0
    %931 = vmatpush1.xpose.msra.mxu0 %v900
    %932 = vmatprep.subr.mxu0 0.0
    %933 = vmatpush1.xpose.msra.mxu0 %v898
    %934 = vmatprep.subr.mxu0 0.0
    %935 = vmatpush2.xpose.msra.mxu0 0.0
    %936 = vmatprep.subr.mxu0 0.0
    %937 = vmatpush2.xpose.msra.mxu0 0.0
    %938 = vmatprep.subr.mxu0 0.0
    %939 = vmatpush2.xpose.msra.mxu0 0.0
    %940 = vmatprep.subr.mxu0 0.0
    %941 = vmatpush2.xpose.msra.mxu0 0.0
    %942 = vmatprep.subr.mxu0 0.0
    %943 = vmatpush2.xpose.msra.mxu0 0.0
    %944 = vmatprep.subr.mxu0 0.0
    %945 = vmatpush2.xpose.msra.mxu0 0.0
    %946 = vmatprep.subr.mxu0 0.0
    %947 = vmatpush2.xpose.msra.mxu0 0.0
    %948 = vmatprep.subr.mxu0 0.0
    %949 = vmatpush2.xpose.msra.mxu0 0.0
    %950 = vmatprep.subr.mxu0 0.0
    %951 = vmatpush2.xpose.msra.mxu0 0.0
    %952 = vmatprep.subr.mxu0 0.0
    %953 = vmatpush2.xpose.msra.mxu0 0.0
    %954 = vmatprep.subr.mxu0 0.0
    %955 = vmatpush2.xpose.msra.mxu0 0.0
    %956 = vmatprep.subr.mxu0 0.0
    %957 = vmatpush2.xpose.msra.mxu0 0.0
    %958 = vmatprep.subr.mxu0 0.0
    %959 = vmatpush2.xpose.msra.mxu0 0.0
    %960 = vmatprep.subr.mxu0 0.0
    %961 = vmatpush2.xpose.msra.mxu0 0.0
    %962 = vmatprep.subr.mxu0 0.0
    %963 = vmatpush2.xpose.msra.mxu0 0.0
    %964 = vmatprep.subr.mxu0 0.0
    %965 = vmatpush2.xpose.msra.mxu0 0.0
    %966 = vmatprep.mubr.f32.mxu0 0.0
    %967 = vmatmul.mubr.f32.gmra.mxu0 %v894
    %v968 = vpop.f32.mrf.mxu0
    %v969 = vadd.f32 0.0, %v968
    %v970 = vpop.f32.mrf.mxu0
    %971 = vmatprep.mubr.f32.mxu0 0.0
    %972 = vmatmul.mubr.f32.gmra.mxu0 %v896
    %v973 = vpop.f32.mrf.mxu0
    %v974 = vadd.f32 0.0, %v973
    %v975 = vpop.f32.mrf.mxu0
    %976 = vdwg.mxu0
    %977 = vmatprep.subr.mxu0 0.0
    %978 = vmatpush1.xpose.msra.mxu0 0.0
    %979 = vmatprep.subr.mxu0 0.0
    %980 = vmatpush1.xpose.msra.mxu0 0.0
    %981 = vmatprep.subr.mxu0 0.0
    %982 = vmatpush1.xpose.msra.mxu0 0.0
    %983 = vmatprep.subr.mxu0 0.0
    %984 = vmatpush1.xpose.msra.mxu0 0.0
    %985 = vmatprep.subr.mxu0 0.0
    %986 = vmatpush1.xpose.msra.mxu0 0.0
    %987 = vmatprep.subr.mxu0 0.0
    %988 = vmatpush1.xpose.msra.mxu0 0.0
    %989 = vmatprep.subr.mxu0 0.0
    %990 = vmatpush1.xpose.msra.mxu0 0.0
    %991 = vmatprep.subr.mxu0 0.0
    %992 = vmatpush1.xpose.msra.mxu0 0.0
    %993 = vmatprep.subr.mxu0 0.0
    %994 = vmatpush1.xpose.msra.mxu0 0.0
    %995 = vmatprep.subr.mxu0 0.0
    %996 = vmatpush1.xpose.msra.mxu0 0.0
    %997 = vmatprep.subr.mxu0 0.0
    %998 = vmatpush1.xpose.msra.mxu0 0.0
    %999 = vmatprep.subr.mxu0 0.0
    %1000 = vmatpush1.xpose.msra.mxu0 0.0
    %1001 = vmatprep.subr.mxu0 0.0
    %1002 = vmatpush1.xpose.msra.mxu0 0.0
    %1003 = vmatprep.subr.mxu0 0.0
    %1004 = vmatpush1.xpose.msra.mxu0 0.0
    %1005 = vmatprep.subr.mxu0 0.0
    %1006 = vmatpush1.xpose.msra.mxu0 %v896
    %1007 = vmatprep.subr.mxu0 0.0
    %1008 = vmatpush1.xpose.msra.mxu0 %v894
    %1009 = vmatprep.subr.mxu0 0.0
    %1010 = vmatpush2.xpose.msra.mxu0 0.0
    %1011 = vmatprep.subr.mxu0 0.0
    %1012 = vmatpush2.xpose.msra.mxu0 0.0
    %1013 = vmatprep.subr.mxu0 0.0
    %1014 = vmatpush2.xpose.msra.mxu0 0.0
    %1015 = vmatprep.subr.mxu0 0.0
    %1016 = vmatpush2.xpose.msra.mxu0 0.0
    %1017 = vmatprep.subr.mxu0 0.0
    %1018 = vmatpush2.xpose.msra.mxu0 0.0
    %1019 = vmatprep.subr.mxu0 0.0
    %1020 = vmatpush2.xpose.msra.mxu0 0.0
    %1021 = vmatprep.subr.mxu0 0.0
    %1022 = vmatpush2.xpose.msra.mxu0 0.0
    %1023 = vmatprep.subr.mxu0 0.0
    %1024 = vmatpush2.xpose.msra.mxu0 0.0
    %1025 = vmatprep.subr.mxu0 0.0
    %1026 = vmatpush2.xpose.msra.mxu0 0.0
    %1027 = vmatprep.subr.mxu0 0.0
    %1028 = vmatpush2.xpose.msra.mxu0 0.0
    %1029 = vmatprep.subr.mxu0 0.0
    %1030 = vmatpush2.xpose.msra.mxu0 0.0
    %1031 = vmatprep.subr.mxu0 0.0
    %1032 = vmatpush2.xpose.msra.mxu0 0.0
    %1033 = vmatprep.subr.mxu0 0.0
    %1034 = vmatpush2.xpose.msra.mxu0 0.0
    %1035 = vmatprep.subr.mxu0 0.0
    %1036 = vmatpush2.xpose.msra.mxu0 0.0
    %1037 = vmatprep.subr.mxu0 0.0
    %1038 = vmatpush2.xpose.msra.mxu0 0.0
    %1039 = vmatprep.subr.mxu0 0.0
    %1040 = vmatpush2.xpose.msra.mxu0 0.0
    %1041 = vmatprep.mubr.f32.mxu0 0.0
    %1042 = vmatmul.mubr.f32.gmra.mxu0 %v898
    %v1043 = vpop.f32.mrf.mxu0
    %v1044 = vadd.f32 0.0, %v1043
    %v1045 = vpop.f32.mrf.mxu0
    %1046 = vmatprep.mubr.f32.mxu0 0.0
    %1047 = vmatmul.mubr.f32.gmra.mxu0 %v900
    %v1048 = vpop.f32.mrf.mxu0
    %v1049 = vadd.f32 0.0, %v1048
    %v1050 = vpop.f32.mrf.mxu0
    %1051 = vdwg.mxu0
    %v1052 = vsel %vm511, %v969, -inf
    %1053 = vmax.xlane.f32.xlu0 %v1052
    %v1054 = vpop.xlane.xlu0 %1053
    %v1055 = vsel %vm511, %v974, -inf
    %1056 = vmax.xlane.f32.xlu0 %v1055
    %v1057 = vpop.xlane.xlu0 %1056
    %v1058 = vsub.f32 %v969, %v1054
    %v1059 = vsub.f32 %v974, %v1057
    %v1060 = vmul.f32 %v1058, 1.442695
    %v1061 = vpow.pop %v1060
    %v1062 = vmul.f32 %v1059, 1.442695
    %v1063 = vpow.pop %v1062
    %v1064 = vsel %vm511, %v1061, 0.0
    %1065 = vadd.xlane.f32.xlu0 %v1064
    %v1066 = vpop.xlane.xlu0 %1065
    %v1067 = vsel %vm511, %v1063, 0.0
    %1068 = vadd.xlane.f32.xlu0 %v1067
    %v1069 = vpop.xlane.xlu0 %1068
    %v1070 = vrcp.pop %v1066
    %v1071 = vrcp.pop %v1069
    %v1072 = vmul.f32 %v1061, %v1070
    %v1073 = vmul.f32 %v1063, %v1071
    %v1074 = vsel %vm511, %v1044, -inf
    %1075 = vmax.xlane.f32.xlu0 %v1074
    %v1076 = vpop.xlane.xlu0 %1075
    %v1077 = vsel %vm511, %v1049, -inf
    %1078 = vmax.xlane.f32.xlu0 %v1077
    %v1079 = vpop.xlane.xlu0 %1078
    %v1080 = vsub.f32 %v1044, %v1076
    %v1081 = vsub.f32 %v1049, %v1079
    %v1082 = vmul.f32 %v1080, 1.442695
    %v1083 = vpow.pop %v1082
    %v1084 = vmul.f32 %v1081, 1.442695
    %v1085 = vpow.pop %v1084
    %v1086 = vsel %vm511, %v1083, 0.0
    %1087 = vadd.xlane.f32.xlu0 %v1086
    %v1088 = vpop.xlane.xlu0 %1087
    %v1089 = vsel %vm511, %v1085, 0.0
    %1090 = vadd.xlane.f32.xlu0 %v1089
    %v1091 = vpop.xlane.xlu0 %1090
    %v1092 = vrcp.pop %v1088
    %v1093 = vrcp.pop %v1091
    %v1094 = vmul.f32 %v1083, %v1092
    %v1095 = vmul.f32 %v1085, %v1093
    %1096 = vrot.lane.b32.xlu0 %v507, 80
    %v1097 = vpop.permute.xlu0 %1096
    %1098 = vrot.lane.b32.xlu0 %v508, 80
    %v1099 = vpop.permute.xlu0 %1098
    %v1103 = vsel %vm511, %v1072, 0
    %v1106 = vsel %vm511, %v1073, 0
    %1108 = vmatprep.subr.mxu0 0.0
    %1109 = vmatpush1.msra.mxu0 0.0
    %1110 = vmatprep.subr.mxu0 0.0
    %1111 = vmatpush1.msra.mxu0 0.0
    %1112 = vmatprep.subr.mxu0 0.0
    %1113 = vmatpush1.msra.mxu0 0.0
    %1114 = vmatprep.subr.mxu0 0.0
    %1115 = vmatpush1.msra.mxu0 0.0
    %1116 = vmatprep.subr.mxu0 0.0
    %1117 = vmatpush1.msra.mxu0 0.0
    %1118 = vmatprep.subr.mxu0 0.0
    %1119 = vmatpush1.msra.mxu0 0.0
    %1120 = vmatprep.subr.mxu0 0.0
    %1121 = vmatpush1.msra.mxu0 0.0
    %1122 = vmatprep.subr.mxu0 0.0
    %1123 = vmatpush1.msra.mxu0 0.0
    %1124 = vmatprep.subr.mxu0 0.0
    %1125 = vmatpush1.msra.mxu0 0.0
    %1126 = vmatprep.subr.mxu0 0.0
    %1127 = vmatpush1.msra.mxu0 0.0
    %1128 = vmatprep.subr.mxu0 0.0
    %1129 = vmatpush1.msra.mxu0 0.0
    %1130 = vmatprep.subr.mxu0 0.0
    %1131 = vmatpush1.msra.mxu0 0.0
    %1132 = vmatprep.subr.mxu0 0.0
    %1133 = vmatpush1.msra.mxu0 0.0
    %1134 = vmatprep.subr.mxu0 0.0
    %1135 = vmatpush1.msra.mxu0 0.0
    %1136 = vmatprep.subr.mxu0 0.0
    %1137 = vmatpush1.msra.mxu0 %v1099
    %1138 = vmatprep.subr.mxu0 0.0
    %1139 = vmatpush1.msra.mxu0 %v1097
    %1140 = vmatprep.subr.mxu0 0.0
    %1141 = vmatpush2.msra.mxu0 0.0
    %1142 = vmatprep.subr.mxu0 0.0
    %1143 = vmatpush2.msra.mxu0 0.0
    %1144 = vmatprep.subr.mxu0 0.0
    %1145 = vmatpush2.msra.mxu0 0.0
    %1146 = vmatprep.subr.mxu0 0.0
    %1147 = vmatpush2.msra.mxu0 0.0
    %1148 = vmatprep.subr.mxu0 0.0
    %1149 = vmatpush2.msra.mxu0 0.0
    %1150 = vmatprep.subr.mxu0 0.0
    %1151 = vmatpush2.msra.mxu0 0.0
    %1152 = vmatprep.subr.mxu0 0.0
    %1153 = vmatpush2.msra.mxu0 0.0
    %1154 = vmatprep.subr.mxu0 0.0
    %1155 = vmatpush2.msra.mxu0 0.0
    %1156 = vmatprep.subr.mxu0 0.0
    %1157 = vmatpush2.msra.mxu0 0.0
    %1158 = vmatprep.subr.mxu0 0.0
    %1159 = vmatpush2.msra.mxu0 0.0
    %1160 = vmatprep.subr.mxu0 0.0
    %1161 = vmatpush2.msra.mxu0 0.0
    %1162 = vmatprep.subr.mxu0 0.0
    %1163 = vmatpush2.msra.mxu0 0.0
    %1164 = vmatprep.subr.mxu0 0.0
    %1165 = vmatpush2.msra.mxu0 0.0
    %1166 = vmatprep.subr.mxu0 0.0
    %1167 = vmatpush2.msra.mxu0 0.0
    %1168 = vmatprep.subr.mxu0 0.0
    %1169 = vmatpush2.msra.mxu0 0.0
    %1170 = vmatprep.subr.mxu0 0.0
    %1171 = vmatpush2.msra.mxu0 0.0
    %1172 = vmatprep.mubr.f32.mxu0 0.0
    %1173 = vmatmul.mubr.f32.gmra.mxu0 %v1103
    %v1174 = vpop.f32.mrf.mxu0
    %v1175 = vadd.f32 0.0, %v1174
    %v1176 = vpop.f32.mrf.mxu0
    %1177 = vmatprep.mubr.f32.mxu0 0.0
    %1178 = vmatmul.mubr.f32.gmra.mxu0 %v1106
    %v1179 = vpop.f32.mrf.mxu0
    %v1180 = vadd.f32 0.0, %v1179
    %v1181 = vpop.f32.mrf.mxu0
    %1182 = vdwg.mxu0
    %v1186 = vsel %vm511, %v1094, 0
    %v1189 = vsel %vm511, %v1095, 0
    %1191 = vmatprep.subr.mxu0 0.0
    %1192 = vmatpush1.msra.mxu0 0.0
    %1193 = vmatprep.subr.mxu0 0.0
    %1194 = vmatpush1.msra.mxu0 0.0
    %1195 = vmatprep.subr.mxu0 0.0
    %1196 = vmatpush1.msra.mxu0 0.0
    %1197 = vmatprep.subr.mxu0 0.0
    %1198 = vmatpush1.msra.mxu0 0.0
    %1199 = vmatprep.subr.mxu0 0.0
    %1200 = vmatpush1.msra.mxu0 0.0
    %1201 = vmatprep.subr.mxu0 0.0
    %1202 = vmatpush1.msra.mxu0 0.0
    %1203 = vmatprep.subr.mxu0 0.0
    %1204 = vmatpush1.msra.mxu0 0.0
    %1205 = vmatprep.subr.mxu0 0.0
    %1206 = vmatpush1.msra.mxu0 0.0
    %1207 = vmatprep.subr.mxu0 0.0
    %1208 = vmatpush1.msra.mxu0 0.0
    %1209 = vmatprep.subr.mxu0 0.0
    %1210 = vmatpush1.msra.mxu0 0.0
    %1211 = vmatprep.subr.mxu0 0.0
    %1212 = vmatpush1.msra.mxu0 0.0
    %1213 = vmatprep.subr.mxu0 0.0
    %1214 = vmatpush1.msra.mxu0 0.0
    %1215 = vmatprep.subr.mxu0 0.0
    %1216 = vmatpush1.msra.mxu0 0.0
    %1217 = vmatprep.subr.mxu0 0.0
    %1218 = vmatpush1.msra.mxu0 0.0
    %1219 = vmatprep.subr.mxu0 0.0
    %1220 = vmatpush1.msra.mxu0 %v889
    %1221 = vmatprep.subr.mxu0 0.0
    %1222 = vmatpush1.msra.mxu0 %v887
    %1223 = vmatprep.subr.mxu0 0.0
    %1224 = vmatpush2.msra.mxu0 0.0
    %1225 = vmatprep.subr.mxu0 0.0
    %1226 = vmatpush2.msra.mxu0 0.0
    %1227 = vmatprep.subr.mxu0 0.0
    %1228 = vmatpush2.msra.mxu0 0.0
    %1229 = vmatprep.subr.mxu0 0.0
    %1230 = vmatpush2.msra.mxu0 0.0
    %1231 = vmatprep.subr.mxu0 0.0
    %1232 = vmatpush2.msra.mxu0 0.0
    %1233 = vmatprep.subr.mxu0 0.0
    %1234 = vmatpush2.msra.mxu0 0.0
    %1235 = vmatprep.subr.mxu0 0.0
    %1236 = vmatpush2.msra.mxu0 0.0
    %1237 = vmatprep.subr.mxu0 0.0
    %1238 = vmatpush2.msra.mxu0 0.0
    %1239 = vmatprep.subr.mxu0 0.0
    %1240 = vmatpush2.msra.mxu0 0.0
    %1241 = vmatprep.subr.mxu0 0.0
    %1242 = vmatpush2.msra.mxu0 0.0
    %1243 = vmatprep.subr.mxu0 0.0
    %1244 = vmatpush2.msra.mxu0 0.0
    %1245 = vmatprep.subr.mxu0 0.0
    %1246 = vmatpush2.msra.mxu0 0.0
    %1247 = vmatprep.subr.mxu0 0.0
    %1248 = vmatpush2.msra.mxu0 0.0
    %1249 = vmatprep.subr.mxu0 0.0
    %1250 = vmatpush2.msra.mxu0 0.0
    %1251 = vmatprep.subr.mxu0 0.0
    %1252 = vmatpush2.msra.mxu0 0.0
    %1253 = vmatprep.subr.mxu0 0.0
    %1254 = vmatpush2.msra.mxu0 0.0
    %1255 = vmatprep.mubr.f32.mxu0 0.0
    %1256 = vmatmul.mubr.f32.gmra.mxu0 %v1186
    %v1257 = vpop.f32.mrf.mxu0
    %v1258 = vadd.f32 0.0, %v1257
    %v1259 = vpop.f32.mrf.mxu0
    %1260 = vmatprep.mubr.f32.mxu0 0.0
    %1261 = vmatmul.mubr.f32.gmra.mxu0 %v1189
    %v1262 = vpop.f32.mrf.mxu0
    %v1263 = vadd.f32 0.0, %v1262
    %v1264 = vpop.f32.mrf.mxu0
    %1265 = vdwg.mxu0
    %1268 = vrot.lane.b32.xlu0 %v1175, 16
    %v1269 = vpop.permute.xlu0 %1268
    %1270 = vrot.lane.b32.xlu0 %v1180, 16
    %v1271 = vpop.permute.xlu0 %1270
    %v1274 = vsel %vm511, %v797, %v1269
    %v1275 = vsel %vm511, %v802, %v1271
    %1276 = vrot.lane.b32.xlu0 %v395, 96
    %v1277 = vpop.permute.xlu0 %1276
    %1278 = vrot.lane.b32.xlu0 %v396, 96
    %v1279 = vpop.permute.xlu0 %1278
    %v1282 = vadd.f32 %v1274, %v1277
    %v1283 = vadd.f32 %v1275, %v1279
    %1286 = vrot.lane.b32.xlu0 %v1258, 16
    %v1287 = vpop.permute.xlu0 %1286
    %1288 = vrot.lane.b32.xlu0 %v1263, 16
    %v1289 = vpop.permute.xlu0 %1288
    %v1292 = vsel %vm511, %v878, %v1287
    %v1293 = vsel %vm511, %v883, %v1289
    %1294 = vrot.lane.b32.xlu0 %v507, 64
    %v1295 = vpop.permute.xlu0 %1294
    %1296 = vrot.lane.b32.xlu0 %v508, 64
    %v1297 = vpop.permute.xlu0 %1296
    %v1300 = vadd.f32 %v1292, %v1295
    %v1301 = vadd.f32 %v1293, %v1297
    %v1302 = vadd.f32 %v1282, %v1300
    %v1303 = vadd.f32 %v1283, %v1301
    %v1304 = vmax.f32 %v1302, 0.0
    %v1305 = vmax.f32 %v1303, 0.0
    %v1306 = vsel %vm297, %v1304, 0.0
    %1307 = vadd.xlane.f32.xlu0 %v1306
    %v1308 = vpop.xlane.xlu0 %1307
    %v1309 = vsel %vm297, %v1305, 0.0
    %1310 = vadd.xlane.f32.xlu0 %v1309
    %v1311 = vpop.xlane.xlu0 %1310
    %v1312 = vrcp.pop 32.0
    %v1313 = vmul.f32 %v1308, %v1312
    %v1314 = vmul.f32 %v1311, %v1312
    %v1315 = vsub.f32 %v1304, %v1313
    %v1316 = vsub.f32 %v1305, %v1314
    %v1317 = vmul.f32 %v1315, %v1315
    %v1318 = vmul.f32 %v1316, %v1316
    %v1319 = vsel %vm297, %v1317, 0.0
    %1320 = vadd.xlane.f32.xlu0 %v1319
    %v1321 = vpop.xlane.xlu0 %1320
    %v1322 = vsel %vm297, %v1318, 0.0
    %1323 = vadd.xlane.f32.xlu0 %v1322
    %v1324 = vpop.xlane.xlu0 %1323
    %v1325 = vmul.f32 %v1321, %v1312
    %v1326 = vmul.f32 %v1324, %v1312
    %v1327 = vadd.f32 %v1325, 1e-05
    %v1328 = vadd.f32 %v1326, 1e-05
    %v1329 = vrsqrt.pop %v1327
    %v1330 = vrsqrt.pop %v1328
    %v1331 = vmul.f32 %v1315, %v1329
    %v1332 = vmul.f32 %v1316, %v1330
    %v1333 = vld [vmem:[%s10] sm:$0x1]
    %v1335 = vlaneseq
    %v1336 = vshrl.u32 %v1335, 7
    %v1337 = vsub.s32 0, %v1336
    %v1338 = vrot.slane %v1333, %v1337
    %v1340 = vmul.f32 %v1331, %v1338
    %v1341 = vmul.f32 %v1332, %v1338
    %v1342 = vld [vmem:[%s11] sm:$0x1]
    %v1344 = vlaneseq
    %v1345 = vshrl.u32 %v1344, 7
    %v1346 = vsub.s32 0, %v1345
    %v1347 = vrot.slane %v1342, %v1346
    %v1349 = vadd.f32 %v1340, %v1347
    %v1350 = vadd.f32 %v1341, %v1347
    %v1352 = vsel %vm511, %v397, 0
    %v1355 = vsel %vm511, %v398, 0
    %v1358 = vsel %vm511, %v509, 0
    %v1361 = vsel %vm511, %v510, 0
    %1363 = vmatprep.subr.mxu0 0.0
    %1364 = vmatpush1.xpose.msra.mxu0 0.0
    %1365 = vmatprep.subr.mxu0 0.0
    %1366 = vmatpush1.xpose.msra.mxu0 0.0
    %1367 = vmatprep.subr.mxu0 0.0
    %1368 = vmatpush1.xpose.msra.mxu0 0.0
    %1369 = vmatprep.subr.mxu0 0.0
    %1370 = vmatpush1.xpose.msra.mxu0 0.0
    %1371 = vmatprep.subr.mxu0 0.0
    %1372 = vmatpush1.xpose.msra.mxu0 0.0
    %1373 = vmatprep.subr.mxu0 0.0
    %1374 = vmatpush1.xpose.msra.mxu0 0.0
    %1375 = vmatprep.subr.mxu0 0.0
    %1376 = vmatpush1.xpose.msra.mxu0 0.0
    %1377 = vmatprep.subr.mxu0 0.0
    %1378 = vmatpush1.xpose.msra.mxu0 0.0
    %1379 = vmatprep.subr.mxu0 0.0
    %1380 = vmatpush1.xpose.msra.mxu0 0.0
    %1381 = vmatprep.subr.mxu0 0.0
    %1382 = vmatpush1.xpose.msra.mxu0 0.0
    %1383 = vmatprep.subr.mxu0 0.0
    %1384 = vmatpush1.xpose.msra.mxu0 0.0
    %1385 = vmatprep.subr.mxu0 0.0
    %1386 = vmatpush1.xpose.msra.mxu0 0.0
    %1387 = vmatprep.subr.mxu0 0.0
    %1388 = vmatpush1.xpose.msra.mxu0 0.0
    %1389 = vmatprep.subr.mxu0 0.0
    %1390 = vmatpush1.xpose.msra.mxu0 0.0
    %1391 = vmatprep.subr.mxu0 0.0
    %1392 = vmatpush1.xpose.msra.mxu0 %v1361
    %1393 = vmatprep.subr.mxu0 0.0
    %1394 = vmatpush1.xpose.msra.mxu0 %v1358
    %1395 = vmatprep.subr.mxu0 0.0
    %1396 = vmatpush2.xpose.msra.mxu0 0.0
    %1397 = vmatprep.subr.mxu0 0.0
    %1398 = vmatpush2.xpose.msra.mxu0 0.0
    %1399 = vmatprep.subr.mxu0 0.0
    %1400 = vmatpush2.xpose.msra.mxu0 0.0
    %1401 = vmatprep.subr.mxu0 0.0
    %1402 = vmatpush2.xpose.msra.mxu0 0.0
    %1403 = vmatprep.subr.mxu0 0.0
    %1404 = vmatpush2.xpose.msra.mxu0 0.0
    %1405 = vmatprep.subr.mxu0 0.0
    %1406 = vmatpush2.xpose.msra.mxu0 0.0
    %1407 = vmatprep.subr.mxu0 0.0
    %1408 = vmatpush2.xpose.msra.mxu0 0.0
    %1409 = vmatprep.subr.mxu0 0.0
    %1410 = vmatpush2.xpose.msra.mxu0 0.0
    %1411 = vmatprep.subr.mxu0 0.0
    %1412 = vmatpush2.xpose.msra.mxu0 0.0
    %1413 = vmatprep.subr.mxu0 0.0
    %1414 = vmatpush2.xpose.msra.mxu0 0.0
    %1415 = vmatprep.subr.mxu0 0.0
    %1416 = vmatpush2.xpose.msra.mxu0 0.0
    %1417 = vmatprep.subr.mxu0 0.0
    %1418 = vmatpush2.xpose.msra.mxu0 0.0
    %1419 = vmatprep.subr.mxu0 0.0
    %1420 = vmatpush2.xpose.msra.mxu0 0.0
    %1421 = vmatprep.subr.mxu0 0.0
    %1422 = vmatpush2.xpose.msra.mxu0 0.0
    %1423 = vmatprep.subr.mxu0 0.0
    %1424 = vmatpush2.xpose.msra.mxu0 0.0
    %1425 = vmatprep.subr.mxu0 0.0
    %1426 = vmatpush2.xpose.msra.mxu0 0.0
    %1427 = vmatprep.mubr.f32.mxu0 0.0
    %1428 = vmatmul.mubr.f32.gmra.mxu0 %v1352
    %v1429 = vpop.f32.mrf.mxu0
    %v1430 = vadd.f32 0.0, %v1429
    %v1431 = vpop.f32.mrf.mxu0
    %1432 = vmatprep.mubr.f32.mxu0 0.0
    %1433 = vmatmul.mubr.f32.gmra.mxu0 %v1355
    %v1434 = vpop.f32.mrf.mxu0
    %v1435 = vadd.f32 0.0, %v1434
    %v1436 = vpop.f32.mrf.mxu0
    %1437 = vdwg.mxu0
    %1438 = vmatprep.subr.mxu0 0.0
    %1439 = vmatpush1.xpose.msra.mxu0 0.0
    %1440 = vmatprep.subr.mxu0 0.0
    %1441 = vmatpush1.xpose.msra.mxu0 0.0
    %1442 = vmatprep.subr.mxu0 0.0
    %1443 = vmatpush1.xpose.msra.mxu0 0.0
    %1444 = vmatprep.subr.mxu0 0.0
    %1445 = vmatpush1.xpose.msra.mxu0 0.0
    %1446 = vmatprep.subr.mxu0 0.0
    %1447 = vmatpush1.xpose.msra.mxu0 0.0
    %1448 = vmatprep.subr.mxu0 0.0
    %1449 = vmatpush1.xpose.msra.mxu0 0.0
    %1450 = vmatprep.subr.mxu0 0.0
    %1451 = vmatpush1.xpose.msra.mxu0 0.0
    %1452 = vmatprep.subr.mxu0 0.0
    %1453 = vmatpush1.xpose.msra.mxu0 0.0
    %1454 = vmatprep.subr.mxu0 0.0
    %1455 = vmatpush1.xpose.msra.mxu0 0.0
    %1456 = vmatprep.subr.mxu0 0.0
    %1457 = vmatpush1.xpose.msra.mxu0 0.0
    %1458 = vmatprep.subr.mxu0 0.0
    %1459 = vmatpush1.xpose.msra.mxu0 0.0
    %1460 = vmatprep.subr.mxu0 0.0
    %1461 = vmatpush1.xpose.msra.mxu0 0.0
    %1462 = vmatprep.subr.mxu0 0.0
    %1463 = vmatpush1.xpose.msra.mxu0 0.0
    %1464 = vmatprep.subr.mxu0 0.0
    %1465 = vmatpush1.xpose.msra.mxu0 0.0
    %1466 = vmatprep.subr.mxu0 0.0
    %1467 = vmatpush1.xpose.msra.mxu0 %v1355
    %1468 = vmatprep.subr.mxu0 0.0
    %1469 = vmatpush1.xpose.msra.mxu0 %v1352
    %1470 = vmatprep.subr.mxu0 0.0
    %1471 = vmatpush2.xpose.msra.mxu0 0.0
    %1472 = vmatprep.subr.mxu0 0.0
    %1473 = vmatpush2.xpose.msra.mxu0 0.0
    %1474 = vmatprep.subr.mxu0 0.0
    %1475 = vmatpush2.xpose.msra.mxu0 0.0
    %1476 = vmatprep.subr.mxu0 0.0
    %1477 = vmatpush2.xpose.msra.mxu0 0.0
    %1478 = vmatprep.subr.mxu0 0.0
    %1479 = vmatpush2.xpose.msra.mxu0 0.0
    %1480 = vmatprep.subr.mxu0 0.0
    %1481 = vmatpush2.xpose.msra.mxu0 0.0
    %1482 = vmatprep.subr.mxu0 0.0
    %1483 = vmatpush2.xpose.msra.mxu0 0.0
    %1484 = vmatprep.subr.mxu0 0.0
    %1485 = vmatpush2.xpose.msra.mxu0 0.0
    %1486 = vmatprep.subr.mxu0 0.0
    %1487 = vmatpush2.xpose.msra.mxu0 0.0
    %1488 = vmatprep.subr.mxu0 0.0
    %1489 = vmatpush2.xpose.msra.mxu0 0.0
    %1490 = vmatprep.subr.mxu0 0.0
    %1491 = vmatpush2.xpose.msra.mxu0 0.0
    %1492 = vmatprep.subr.mxu0 0.0
    %1493 = vmatpush2.xpose.msra.mxu0 0.0
    %1494 = vmatprep.subr.mxu0 0.0
    %1495 = vmatpush2.xpose.msra.mxu0 0.0
    %1496 = vmatprep.subr.mxu0 0.0
    %1497 = vmatpush2.xpose.msra.mxu0 0.0
    %1498 = vmatprep.subr.mxu0 0.0
    %1499 = vmatpush2.xpose.msra.mxu0 0.0
    %1500 = vmatprep.subr.mxu0 0.0
    %1501 = vmatpush2.xpose.msra.mxu0 0.0
    %1502 = vmatprep.mubr.f32.mxu0 0.0
    %1503 = vmatmul.mubr.f32.gmra.mxu0 %v1358
    %v1504 = vpop.f32.mrf.mxu0
    %v1505 = vadd.f32 0.0, %v1504
    %v1506 = vpop.f32.mrf.mxu0
    %1507 = vmatprep.mubr.f32.mxu0 0.0
    %1508 = vmatmul.mubr.f32.gmra.mxu0 %v1361
    %v1509 = vpop.f32.mrf.mxu0
    %v1510 = vadd.f32 0.0, %v1509
    %v1511 = vpop.f32.mrf.mxu0
    %1512 = vdwg.mxu0
    %v1513 = vsel %vm511, %v1430, -inf
    %1514 = vmax.xlane.f32.xlu0 %v1513
    %v1515 = vpop.xlane.xlu0 %1514
    %v1516 = vsel %vm511, %v1435, -inf
    %1517 = vmax.xlane.f32.xlu0 %v1516
    %v1518 = vpop.xlane.xlu0 %1517
    %v1519 = vsub.f32 %v1430, %v1515
    %v1520 = vsub.f32 %v1435, %v1518
    %v1521 = vmul.f32 %v1519, 1.442695
    %v1522 = vpow.pop %v1521
    %v1523 = vmul.f32 %v1520, 1.442695
    %v1524 = vpow.pop %v1523
    %v1525 = vsel %vm511, %v1522, 0.0
    %1526 = vadd.xlane.f32.xlu0 %v1525
    %v1527 = vpop.xlane.xlu0 %1526
    %v1528 = vsel %vm511, %v1524, 0.0
    %1529 = vadd.xlane.f32.xlu0 %v1528
    %v1530 = vpop.xlane.xlu0 %1529
    %v1531 = vrcp.pop %v1527
    %v1532 = vrcp.pop %v1530
    %v1533 = vmul.f32 %v1522, %v1531
    %v1534 = vmul.f32 %v1524, %v1532
    %v1535 = vsel %vm511, %v1505, -inf
    %1536 = vmax.xlane.f32.xlu0 %v1535
    %v1537 = vpop.xlane.xlu0 %1536
    %v1538 = vsel %vm511, %v1510, -inf
    %1539 = vmax.xlane.f32.xlu0 %v1538
    %v1540 = vpop.xlane.xlu0 %1539
    %v1541 = vsub.f32 %v1505, %v1537
    %v1542 = vsub.f32 %v1510, %v1540
    %v1543 = vmul.f32 %v1541, 1.442695
    %v1544 = vpow.pop %v1543
    %v1545 = vmul.f32 %v1542, 1.442695
    %v1546 = vpow.pop %v1545
    %v1547 = vsel %vm511, %v1544, 0.0
    %1548 = vadd.xlane.f32.xlu0 %v1547
    %v1549 = vpop.xlane.xlu0 %1548
    %v1550 = vsel %vm511, %v1546, 0.0
    %1551 = vadd.xlane.f32.xlu0 %v1550
    %v1552 = vpop.xlane.xlu0 %1551
    %v1553 = vrcp.pop %v1549
    %v1554 = vrcp.pop %v1552
    %v1555 = vmul.f32 %v1544, %v1553
    %v1556 = vmul.f32 %v1546, %v1554
    %1557 = vrot.lane.b32.xlu0 %v509, 96
    %v1558 = vpop.permute.xlu0 %1557
    %1559 = vrot.lane.b32.xlu0 %v510, 96
    %v1560 = vpop.permute.xlu0 %1559
    %v1564 = vsel %vm511, %v1533, 0
    %v1567 = vsel %vm511, %v1534, 0
    %1569 = vmatprep.subr.mxu0 0.0
    %1570 = vmatpush1.msra.mxu0 0.0
    %1571 = vmatprep.subr.mxu0 0.0
    %1572 = vmatpush1.msra.mxu0 0.0
    %1573 = vmatprep.subr.mxu0 0.0
    %1574 = vmatpush1.msra.mxu0 0.0
    %1575 = vmatprep.subr.mxu0 0.0
    %1576 = vmatpush1.msra.mxu0 0.0
    %1577 = vmatprep.subr.mxu0 0.0
    %1578 = vmatpush1.msra.mxu0 0.0
    %1579 = vmatprep.subr.mxu0 0.0
    %1580 = vmatpush1.msra.mxu0 0.0
    %1581 = vmatprep.subr.mxu0 0.0
    %1582 = vmatpush1.msra.mxu0 0.0
    %1583 = vmatprep.subr.mxu0 0.0
    %1584 = vmatpush1.msra.mxu0 0.0
    %1585 = vmatprep.subr.mxu0 0.0
    %1586 = vmatpush1.msra.mxu0 0.0
    %1587 = vmatprep.subr.mxu0 0.0
    %1588 = vmatpush1.msra.mxu0 0.0
    %1589 = vmatprep.subr.mxu0 0.0
    %1590 = vmatpush1.msra.mxu0 0.0
    %1591 = vmatprep.subr.mxu0 0.0
    %1592 = vmatpush1.msra.mxu0 0.0
    %1593 = vmatprep.subr.mxu0 0.0
    %1594 = vmatpush1.msra.mxu0 0.0
    %1595 = vmatprep.subr.mxu0 0.0
    %1596 = vmatpush1.msra.mxu0 0.0
    %1597 = vmatprep.subr.mxu0 0.0
    %1598 = vmatpush1.msra.mxu0 %v1560
    %1599 = vmatprep.subr.mxu0 0.0
    %1600 = vmatpush1.msra.mxu0 %v1558
    %1601 = vmatprep.subr.mxu0 0.0
    %1602 = vmatpush2.msra.mxu0 0.0
    %1603 = vmatprep.subr.mxu0 0.0
    %1604 = vmatpush2.msra.mxu0 0.0
    %1605 = vmatprep.subr.mxu0 0.0
    %1606 = vmatpush2.msra.mxu0 0.0
    %1607 = vmatprep.subr.mxu0 0.0
    %1608 = vmatpush2.msra.mxu0 0.0
    %1609 = vmatprep.subr.mxu0 0.0
    %1610 = vmatpush2.msra.mxu0 0.0
    %1611 = vmatprep.subr.mxu0 0.0
    %1612 = vmatpush2.msra.mxu0 0.0
    %1613 = vmatprep.subr.mxu0 0.0
    %1614 = vmatpush2.msra.mxu0 0.0
    %1615 = vmatprep.subr.mxu0 0.0
    %1616 = vmatpush2.msra.mxu0 0.0
    %1617 = vmatprep.subr.mxu0 0.0
    %1618 = vmatpush2.msra.mxu0 0.0
    %1619 = vmatprep.subr.mxu0 0.0
    %1620 = vmatpush2.msra.mxu0 0.0
    %1621 = vmatprep.subr.mxu0 0.0
    %1622 = vmatpush2.msra.mxu0 0.0
    %1623 = vmatprep.subr.mxu0 0.0
    %1624 = vmatpush2.msra.mxu0 0.0
    %1625 = vmatprep.subr.mxu0 0.0
    %1626 = vmatpush2.msra.mxu0 0.0
    %1627 = vmatprep.subr.mxu0 0.0
    %1628 = vmatpush2.msra.mxu0 0.0
    %1629 = vmatprep.subr.mxu0 0.0
    %1630 = vmatpush2.msra.mxu0 0.0
    %1631 = vmatprep.subr.mxu0 0.0
    %1632 = vmatpush2.msra.mxu0 0.0
    %1633 = vmatprep.mubr.f32.mxu0 0.0
    %1634 = vmatmul.mubr.f32.gmra.mxu0 %v1564
    %v1635 = vpop.f32.mrf.mxu0
    %v1636 = vadd.f32 0.0, %v1635
    %v1637 = vpop.f32.mrf.mxu0
    %1638 = vmatprep.mubr.f32.mxu0 0.0
    %1639 = vmatmul.mubr.f32.gmra.mxu0 %v1567
    %v1640 = vpop.f32.mrf.mxu0
    %v1641 = vadd.f32 0.0, %v1640
    %v1642 = vpop.f32.mrf.mxu0
    %1643 = vdwg.mxu0
    %v1645 = vsel %vm511, %v1555, 0
    %v1648 = vsel %vm511, %v1556, 0
    %1650 = vmatprep.subr.mxu0 0.0
    %1651 = vmatpush1.msra.mxu0 0.0
    %1652 = vmatprep.subr.mxu0 0.0
    %1653 = vmatpush1.msra.mxu0 0.0
    %1654 = vmatprep.subr.mxu0 0.0
    %1655 = vmatpush1.msra.mxu0 0.0
    %1656 = vmatprep.subr.mxu0 0.0
    %1657 = vmatpush1.msra.mxu0 0.0
    %1658 = vmatprep.subr.mxu0 0.0
    %1659 = vmatpush1.msra.mxu0 0.0
    %1660 = vmatprep.subr.mxu0 0.0
    %1661 = vmatpush1.msra.mxu0 0.0
    %1662 = vmatprep.subr.mxu0 0.0
    %1663 = vmatpush1.msra.mxu0 0.0
    %1664 = vmatprep.subr.mxu0 0.0
    %1665 = vmatpush1.msra.mxu0 0.0
    %1666 = vmatprep.subr.mxu0 0.0
    %1667 = vmatpush1.msra.mxu0 0.0
    %1668 = vmatprep.subr.mxu0 0.0
    %1669 = vmatpush1.msra.mxu0 0.0
    %1670 = vmatprep.subr.mxu0 0.0
    %1671 = vmatpush1.msra.mxu0 0.0
    %1672 = vmatprep.subr.mxu0 0.0
    %1673 = vmatpush1.msra.mxu0 0.0
    %1674 = vmatprep.subr.mxu0 0.0
    %1675 = vmatpush1.msra.mxu0 0.0
    %1676 = vmatprep.subr.mxu0 0.0
    %1677 = vmatpush1.msra.mxu0 0.0
    %1678 = vmatprep.subr.mxu0 0.0
    %1679 = vmatpush1.msra.mxu0 %v398
    %1680 = vmatprep.subr.mxu0 0.0
    %1681 = vmatpush1.msra.mxu0 %v397
    %1682 = vmatprep.subr.mxu0 0.0
    %1683 = vmatpush2.msra.mxu0 0.0
    %1684 = vmatprep.subr.mxu0 0.0
    %1685 = vmatpush2.msra.mxu0 0.0
    %1686 = vmatprep.subr.mxu0 0.0
    %1687 = vmatpush2.msra.mxu0 0.0
    %1688 = vmatprep.subr.mxu0 0.0
    %1689 = vmatpush2.msra.mxu0 0.0
    %1690 = vmatprep.subr.mxu0 0.0
    %1691 = vmatpush2.msra.mxu0 0.0
    %1692 = vmatprep.subr.mxu0 0.0
    %1693 = vmatpush2.msra.mxu0 0.0
    %1694 = vmatprep.subr.mxu0 0.0
    %1695 = vmatpush2.msra.mxu0 0.0
    %1696 = vmatprep.subr.mxu0 0.0
    %1697 = vmatpush2.msra.mxu0 0.0
    %1698 = vmatprep.subr.mxu0 0.0
    %1699 = vmatpush2.msra.mxu0 0.0
    %1700 = vmatprep.subr.mxu0 0.0
    %1701 = vmatpush2.msra.mxu0 0.0
    %1702 = vmatprep.subr.mxu0 0.0
    %1703 = vmatpush2.msra.mxu0 0.0
    %1704 = vmatprep.subr.mxu0 0.0
    %1705 = vmatpush2.msra.mxu0 0.0
    %1706 = vmatprep.subr.mxu0 0.0
    %1707 = vmatpush2.msra.mxu0 0.0
    %1708 = vmatprep.subr.mxu0 0.0
    %1709 = vmatpush2.msra.mxu0 0.0
    %1710 = vmatprep.subr.mxu0 0.0
    %1711 = vmatpush2.msra.mxu0 0.0
    %1712 = vmatprep.subr.mxu0 0.0
    %1713 = vmatpush2.msra.mxu0 0.0
    %1714 = vmatprep.mubr.f32.mxu0 0.0
    %1715 = vmatmul.mubr.f32.gmra.mxu0 %v1645
    %v1716 = vpop.f32.mrf.mxu0
    %v1717 = vadd.f32 0.0, %v1716
    %v1718 = vpop.f32.mrf.mxu0
    %1719 = vmatprep.mubr.f32.mxu0 0.0
    %1720 = vmatmul.mubr.f32.gmra.mxu0 %v1648
    %v1721 = vpop.f32.mrf.mxu0
    %v1722 = vadd.f32 0.0, %v1721
    %v1723 = vpop.f32.mrf.mxu0
    %1724 = vdwg.mxu0
    %1725 = vrot.lane.b32.xlu0 %v397, 112
    %v1726 = vpop.permute.xlu0 %1725
    %1727 = vrot.lane.b32.xlu0 %v398, 112
    %v1728 = vpop.permute.xlu0 %1727
    %1729 = vrot.lane.b32.xlu0 %v509, 112
    %v1730 = vpop.permute.xlu0 %1729
    %1731 = vrot.lane.b32.xlu0 %v510, 112
    %v1732 = vpop.permute.xlu0 %1731
    %v1733 = vsel %vm511, %v1726, 0
    %v1735 = vsel %vm511, %v1728, 0
    %v1737 = vsel %vm511, %v1730, 0
    %v1739 = vsel %vm511, %v1732, 0
    %1741 = vmatprep.subr.mxu0 0.0
    %1742 = vmatpush1.xpose.msra.mxu0 0.0
    %1743 = vmatprep.subr.mxu0 0.0
    %1744 = vmatpush1.xpose.msra.mxu0 0.0
    %1745 = vmatprep.subr.mxu0 0.0
    %1746 = vmatpush1.xpose.msra.mxu0 0.0
    %1747 = vmatprep.subr.mxu0 0.0
    %1748 = vmatpush1.xpose.msra.mxu0 0.0
    %1749 = vmatprep.subr.mxu0 0.0
    %1750 = vmatpush1.xpose.msra.mxu0 0.0
    %1751 = vmatprep.subr.mxu0 0.0
    %1752 = vmatpush1.xpose.msra.mxu0 0.0
    %1753 = vmatprep.subr.mxu0 0.0
    %1754 = vmatpush1.xpose.msra.mxu0 0.0
    %1755 = vmatprep.subr.mxu0 0.0
    %1756 = vmatpush1.xpose.msra.mxu0 0.0
    %1757 = vmatprep.subr.mxu0 0.0
    %1758 = vmatpush1.xpose.msra.mxu0 0.0
    %1759 = vmatprep.subr.mxu0 0.0
    %1760 = vmatpush1.xpose.msra.mxu0 0.0
    %1761 = vmatprep.subr.mxu0 0.0
    %1762 = vmatpush1.xpose.msra.mxu0 0.0
    %1763 = vmatprep.subr.mxu0 0.0
    %1764 = vmatpush1.xpose.msra.mxu0 0.0
    %1765 = vmatprep.subr.mxu0 0.0
    %1766 = vmatpush1.xpose.msra.mxu0 0.0
    %1767 = vmatprep.subr.mxu0 0.0
    %1768 = vmatpush1.xpose.msra.mxu0 0.0
    %1769 = vmatprep.subr.mxu0 0.0
    %1770 = vmatpush1.xpose.msra.mxu0 %v1739
    %1771 = vmatprep.subr.mxu0 0.0
    %1772 = vmatpush1.xpose.msra.mxu0 %v1737
    %1773 = vmatprep.subr.mxu0 0.0
    %1774 = vmatpush2.xpose.msra.mxu0 0.0
    %1775 = vmatprep.subr.mxu0 0.0
    %1776 = vmatpush2.xpose.msra.mxu0 0.0
    %1777 = vmatprep.subr.mxu0 0.0
    %1778 = vmatpush2.xpose.msra.mxu0 0.0
    %1779 = vmatprep.subr.mxu0 0.0
    %1780 = vmatpush2.xpose.msra.mxu0 0.0
    %1781 = vmatprep.subr.mxu0 0.0
    %1782 = vmatpush2.xpose.msra.mxu0 0.0
    %1783 = vmatprep.subr.mxu0 0.0
    %1784 = vmatpush2.xpose.msra.mxu0 0.0
    %1785 = vmatprep.subr.mxu0 0.0
    %1786 = vmatpush2.xpose.msra.mxu0 0.0
    %1787 = vmatprep.subr.mxu0 0.0
    %1788 = vmatpush2.xpose.msra.mxu0 0.0
    %1789 = vmatprep.subr.mxu0 0.0
    %1790 = vmatpush2.xpose.msra.mxu0 0.0
    %1791 = vmatprep.subr.mxu0 0.0
    %1792 = vmatpush2.xpose.msra.mxu0 0.0
    %1793 = vmatprep.subr.mxu0 0.0
    %1794 = vmatpush2.xpose.msra.mxu0 0.0
    %1795 = vmatprep.subr.mxu0 0.0
    %1796 = vmatpush2.xpose.msra.mxu0 0.0
    %1797 = vmatprep.subr.mxu0 0.0
    %1798 = vmatpush2.xpose.msra.mxu0 0.0
    %1799 = vmatprep.subr.mxu0 0.0
    %1800 = vmatpush2.xpose.msra.mxu0 0.0
    %1801 = vmatprep.subr.mxu0 0.0
    %1802 = vmatpush2.xpose.msra.mxu0 0.0
    %1803 = vmatprep.subr.mxu0 0.0
    %1804 = vmatpush2.xpose.msra.mxu0 0.0
    %1805 = vmatprep.mubr.f32.mxu0 0.0
    %1806 = vmatmul.mubr.f32.gmra.mxu0 %v1733
    %v1807 = vpop.f32.mrf.mxu0
    %v1808 = vadd.f32 0.0, %v1807
    %v1809 = vpop.f32.mrf.mxu0
    %1810 = vmatprep.mubr.f32.mxu0 0.0
    %1811 = vmatmul.mubr.f32.gmra.mxu0 %v1735
    %v1812 = vpop.f32.mrf.mxu0
    %v1813 = vadd.f32 0.0, %v1812
    %v1814 = vpop.f32.mrf.mxu0
    %1815 = vdwg.mxu0
    %1816 = vmatprep.subr.mxu0 0.0
    %1817 = vmatpush1.xpose.msra.mxu0 0.0
    %1818 = vmatprep.subr.mxu0 0.0
    %1819 = vmatpush1.xpose.msra.mxu0 0.0
    %1820 = vmatprep.subr.mxu0 0.0
    %1821 = vmatpush1.xpose.msra.mxu0 0.0
    %1822 = vmatprep.subr.mxu0 0.0
    %1823 = vmatpush1.xpose.msra.mxu0 0.0
    %1824 = vmatprep.subr.mxu0 0.0
    %1825 = vmatpush1.xpose.msra.mxu0 0.0
    %1826 = vmatprep.subr.mxu0 0.0
    %1827 = vmatpush1.xpose.msra.mxu0 0.0
    %1828 = vmatprep.subr.mxu0 0.0
    %1829 = vmatpush1.xpose.msra.mxu0 0.0
    %1830 = vmatprep.subr.mxu0 0.0
    %1831 = vmatpush1.xpose.msra.mxu0 0.0
    %1832 = vmatprep.subr.mxu0 0.0
    %1833 = vmatpush1.xpose.msra.mxu0 0.0
    %1834 = vmatprep.subr.mxu0 0.0
    %1835 = vmatpush1.xpose.msra.mxu0 0.0
    %1836 = vmatprep.subr.mxu0 0.0
    %1837 = vmatpush1.xpose.msra.mxu0 0.0
    %1838 = vmatprep.subr.mxu0 0.0
    %1839 = vmatpush1.xpose.msra.mxu0 0.0
    %1840 = vmatprep.subr.mxu0 0.0
    %1841 = vmatpush1.xpose.msra.mxu0 0.0
    %1842 = vmatprep.subr.mxu0 0.0
    %1843 = vmatpush1.xpose.msra.mxu0 0.0
    %1844 = vmatprep.subr.mxu0 0.0
    %1845 = vmatpush1.xpose.msra.mxu0 %v1735
    %1846 = vmatprep.subr.mxu0 0.0
    %1847 = vmatpush1.xpose.msra.mxu0 %v1733
    %1848 = vmatprep.subr.mxu0 0.0
    %1849 = vmatpush2.xpose.msra.mxu0 0.0
    %1850 = vmatprep.subr.mxu0 0.0
    %1851 = vmatpush2.xpose.msra.mxu0 0.0
    %1852 = vmatprep.subr.mxu0 0.0
    %1853 = vmatpush2.xpose.msra.mxu0 0.0
    %1854 = vmatprep.subr.mxu0 0.0
    %1855 = vmatpush2.xpose.msra.mxu0 0.0
    %1856 = vmatprep.subr.mxu0 0.0
    %1857 = vmatpush2.xpose.msra.mxu0 0.0
    %1858 = vmatprep.subr.mxu0 0.0
    %1859 = vmatpush2.xpose.msra.mxu0 0.0
    %1860 = vmatprep.subr.mxu0 0.0
    %1861 = vmatpush2.xpose.msra.mxu0 0.0
    %1862 = vmatprep.subr.mxu0 0.0
    %1863 = vmatpush2.xpose.msra.mxu0 0.0
    %1864 = vmatprep.subr.mxu0 0.0
    %1865 = vmatpush2.xpose.msra.mxu0 0.0
    %1866 = vmatprep.subr.mxu0 0.0
    %1867 = vmatpush2.xpose.msra.mxu0 0.0
    %1868 = vmatprep.subr.mxu0 0.0
    %1869 = vmatpush2.xpose.msra.mxu0 0.0
    %1870 = vmatprep.subr.mxu0 0.0
    %1871 = vmatpush2.xpose.msra.mxu0 0.0
    %1872 = vmatprep.subr.mxu0 0.0
    %1873 = vmatpush2.xpose.msra.mxu0 0.0
    %1874 = vmatprep.subr.mxu0 0.0
    %1875 = vmatpush2.xpose.msra.mxu0 0.0
    %1876 = vmatprep.subr.mxu0 0.0
    %1877 = vmatpush2.xpose.msra.mxu0 0.0
    %1878 = vmatprep.subr.mxu0 0.0
    %1879 = vmatpush2.xpose.msra.mxu0 0.0
    %1880 = vmatprep.mubr.f32.mxu0 0.0
    %1881 = vmatmul.mubr.f32.gmra.mxu0 %v1737
    %v1882 = vpop.f32.mrf.mxu0
    %v1883 = vadd.f32 0.0, %v1882
    %v1884 = vpop.f32.mrf.mxu0
    %1885 = vmatprep.mubr.f32.mxu0 0.0
    %1886 = vmatmul.mubr.f32.gmra.mxu0 %v1739
    %v1887 = vpop.f32.mrf.mxu0
    %v1888 = vadd.f32 0.0, %v1887
    %v1889 = vpop.f32.mrf.mxu0
    %1890 = vdwg.mxu0
    %v1891 = vsel %vm511, %v1808, -inf
    %1892 = vmax.xlane.f32.xlu0 %v1891
    %v1893 = vpop.xlane.xlu0 %1892
    %v1894 = vsel %vm511, %v1813, -inf
    %1895 = vmax.xlane.f32.xlu0 %v1894
    %v1896 = vpop.xlane.xlu0 %1895
    %v1897 = vsub.f32 %v1808, %v1893
    %v1898 = vsub.f32 %v1813, %v1896
    %v1899 = vmul.f32 %v1897, 1.442695
    %v1900 = vpow.pop %v1899
    %v1901 = vmul.f32 %v1898, 1.442695
    %v1902 = vpow.pop %v1901
    %v1903 = vsel %vm511, %v1900, 0.0
    %1904 = vadd.xlane.f32.xlu0 %v1903
    %v1905 = vpop.xlane.xlu0 %1904
    %v1906 = vsel %vm511, %v1902, 0.0
    %1907 = vadd.xlane.f32.xlu0 %v1906
    %v1908 = vpop.xlane.xlu0 %1907
    %v1909 = vrcp.pop %v1905
    %v1910 = vrcp.pop %v1908
    %v1911 = vmul.f32 %v1900, %v1909
    %v1912 = vmul.f32 %v1902, %v1910
    %v1913 = vsel %vm511, %v1883, -inf
    %1914 = vmax.xlane.f32.xlu0 %v1913
    %v1915 = vpop.xlane.xlu0 %1914
    %v1916 = vsel %vm511, %v1888, -inf
    %1917 = vmax.xlane.f32.xlu0 %v1916
    %v1918 = vpop.xlane.xlu0 %1917
    %v1919 = vsub.f32 %v1883, %v1915
    %v1920 = vsub.f32 %v1888, %v1918
    %v1921 = vmul.f32 %v1919, 1.442695
    %v1922 = vpow.pop %v1921
    %v1923 = vmul.f32 %v1920, 1.442695
    %v1924 = vpow.pop %v1923
    %v1925 = vsel %vm511, %v1922, 0.0
    %1926 = vadd.xlane.f32.xlu0 %v1925
    %v1927 = vpop.xlane.xlu0 %1926
    %v1928 = vsel %vm511, %v1924, 0.0
    %1929 = vadd.xlane.f32.xlu0 %v1928
    %v1930 = vpop.xlane.xlu0 %1929
    %v1931 = vrcp.pop %v1927
    %v1932 = vrcp.pop %v1930
    %v1933 = vmul.f32 %v1922, %v1931
    %v1934 = vmul.f32 %v1924, %v1932
    %1935 = vrot.lane.b32.xlu0 %v509, 80
    %v1936 = vpop.permute.xlu0 %1935
    %1937 = vrot.lane.b32.xlu0 %v510, 80
    %v1938 = vpop.permute.xlu0 %1937
    %v1942 = vsel %vm511, %v1911, 0
    %v1945 = vsel %vm511, %v1912, 0
    %1947 = vmatprep.subr.mxu0 0.0
    %1948 = vmatpush1.msra.mxu0 0.0
    %1949 = vmatprep.subr.mxu0 0.0
    %1950 = vmatpush1.msra.mxu0 0.0
    %1951 = vmatprep.subr.mxu0 0.0
    %1952 = vmatpush1.msra.mxu0 0.0
    %1953 = vmatprep.subr.mxu0 0.0
    %1954 = vmatpush1.msra.mxu0 0.0
    %1955 = vmatprep.subr.mxu0 0.0
    %1956 = vmatpush1.msra.mxu0 0.0
    %1957 = vmatprep.subr.mxu0 0.0
    %1958 = vmatpush1.msra.mxu0 0.0
    %1959 = vmatprep.subr.mxu0 0.0
    %1960 = vmatpush1.msra.mxu0 0.0
    %1961 = vmatprep.subr.mxu0 0.0
    %1962 = vmatpush1.msra.mxu0 0.0
    %1963 = vmatprep.subr.mxu0 0.0
    %1964 = vmatpush1.msra.mxu0 0.0
    %1965 = vmatprep.subr.mxu0 0.0
    %1966 = vmatpush1.msra.mxu0 0.0
    %1967 = vmatprep.subr.mxu0 0.0
    %1968 = vmatpush1.msra.mxu0 0.0
    %1969 = vmatprep.subr.mxu0 0.0
    %1970 = vmatpush1.msra.mxu0 0.0
    %1971 = vmatprep.subr.mxu0 0.0
    %1972 = vmatpush1.msra.mxu0 0.0
    %1973 = vmatprep.subr.mxu0 0.0
    %1974 = vmatpush1.msra.mxu0 0.0
    %1975 = vmatprep.subr.mxu0 0.0
    %1976 = vmatpush1.msra.mxu0 %v1938
    %1977 = vmatprep.subr.mxu0 0.0
    %1978 = vmatpush1.msra.mxu0 %v1936
    %1979 = vmatprep.subr.mxu0 0.0
    %1980 = vmatpush2.msra.mxu0 0.0
    %1981 = vmatprep.subr.mxu0 0.0
    %1982 = vmatpush2.msra.mxu0 0.0
    %1983 = vmatprep.subr.mxu0 0.0
    %1984 = vmatpush2.msra.mxu0 0.0
    %1985 = vmatprep.subr.mxu0 0.0
    %1986 = vmatpush2.msra.mxu0 0.0
    %1987 = vmatprep.subr.mxu0 0.0
    %1988 = vmatpush2.msra.mxu0 0.0
    %1989 = vmatprep.subr.mxu0 0.0
    %1990 = vmatpush2.msra.mxu0 0.0
    %1991 = vmatprep.subr.mxu0 0.0
    %1992 = vmatpush2.msra.mxu0 0.0
    %1993 = vmatprep.subr.mxu0 0.0
    %1994 = vmatpush2.msra.mxu0 0.0
    %1995 = vmatprep.subr.mxu0 0.0
    %1996 = vmatpush2.msra.mxu0 0.0
    %1997 = vmatprep.subr.mxu0 0.0
    %1998 = vmatpush2.msra.mxu0 0.0
    %1999 = vmatprep.subr.mxu0 0.0
    %2000 = vmatpush2.msra.mxu0 0.0
    %2001 = vmatprep.subr.mxu0 0.0
    %2002 = vmatpush2.msra.mxu0 0.0
    %2003 = vmatprep.subr.mxu0 0.0
    %2004 = vmatpush2.msra.mxu0 0.0
    %2005 = vmatprep.subr.mxu0 0.0
    %2006 = vmatpush2.msra.mxu0 0.0
    %2007 = vmatprep.subr.mxu0 0.0
    %2008 = vmatpush2.msra.mxu0 0.0
    %2009 = vmatprep.subr.mxu0 0.0
    %2010 = vmatpush2.msra.mxu0 0.0
    %2011 = vmatprep.mubr.f32.mxu0 0.0
    %2012 = vmatmul.mubr.f32.gmra.mxu0 %v1942
    %v2013 = vpop.f32.mrf.mxu0
    %v2014 = vadd.f32 0.0, %v2013
    %v2015 = vpop.f32.mrf.mxu0
    %2016 = vmatprep.mubr.f32.mxu0 0.0
    %2017 = vmatmul.mubr.f32.gmra.mxu0 %v1945
    %v2018 = vpop.f32.mrf.mxu0
    %v2019 = vadd.f32 0.0, %v2018
    %v2020 = vpop.f32.mrf.mxu0
    %2021 = vdwg.mxu0
    %v2025 = vsel %vm511, %v1933, 0
    %v2028 = vsel %vm511, %v1934, 0
    %2030 = vmatprep.subr.mxu0 0.0
    %2031 = vmatpush1.msra.mxu0 0.0
    %2032 = vmatprep.subr.mxu0 0.0
    %2033 = vmatpush1.msra.mxu0 0.0
    %2034 = vmatprep.subr.mxu0 0.0
    %2035 = vmatpush1.msra.mxu0 0.0
    %2036 = vmatprep.subr.mxu0 0.0
    %2037 = vmatpush1.msra.mxu0 0.0
    %2038 = vmatprep.subr.mxu0 0.0
    %2039 = vmatpush1.msra.mxu0 0.0
    %2040 = vmatprep.subr.mxu0 0.0
    %2041 = vmatpush1.msra.mxu0 0.0
    %2042 = vmatprep.subr.mxu0 0.0
    %2043 = vmatpush1.msra.mxu0 0.0
    %2044 = vmatprep.subr.mxu0 0.0
    %2045 = vmatpush1.msra.mxu0 0.0
    %2046 = vmatprep.subr.mxu0 0.0
    %2047 = vmatpush1.msra.mxu0 0.0
    %2048 = vmatprep.subr.mxu0 0.0
    %2049 = vmatpush1.msra.mxu0 0.0
    %2050 = vmatprep.subr.mxu0 0.0
    %2051 = vmatpush1.msra.mxu0 0.0
    %2052 = vmatprep.subr.mxu0 0.0
    %2053 = vmatpush1.msra.mxu0 0.0
    %2054 = vmatprep.subr.mxu0 0.0
    %2055 = vmatpush1.msra.mxu0 0.0
    %2056 = vmatprep.subr.mxu0 0.0
    %2057 = vmatpush1.msra.mxu0 0.0
    %2058 = vmatprep.subr.mxu0 0.0
    %2059 = vmatpush1.msra.mxu0 %v1728
    %2060 = vmatprep.subr.mxu0 0.0
    %2061 = vmatpush1.msra.mxu0 %v1726
    %2062 = vmatprep.subr.mxu0 0.0
    %2063 = vmatpush2.msra.mxu0 0.0
    %2064 = vmatprep.subr.mxu0 0.0
    %2065 = vmatpush2.msra.mxu0 0.0
    %2066 = vmatprep.subr.mxu0 0.0
    %2067 = vmatpush2.msra.mxu0 0.0
    %2068 = vmatprep.subr.mxu0 0.0
    %2069 = vmatpush2.msra.mxu0 0.0
    %2070 = vmatprep.subr.mxu0 0.0
    %2071 = vmatpush2.msra.mxu0 0.0
    %2072 = vmatprep.subr.mxu0 0.0
    %2073 = vmatpush2.msra.mxu0 0.0
    %2074 = vmatprep.subr.mxu0 0.0
    %2075 = vmatpush2.msra.mxu0 0.0
    %2076 = vmatprep.subr.mxu0 0.0
    %2077 = vmatpush2.msra.mxu0 0.0
    %2078 = vmatprep.subr.mxu0 0.0
    %2079 = vmatpush2.msra.mxu0 0.0
    %2080 = vmatprep.subr.mxu0 0.0
    %2081 = vmatpush2.msra.mxu0 0.0
    %2082 = vmatprep.subr.mxu0 0.0
    %2083 = vmatpush2.msra.mxu0 0.0
    %2084 = vmatprep.subr.mxu0 0.0
    %2085 = vmatpush2.msra.mxu0 0.0
    %2086 = vmatprep.subr.mxu0 0.0
    %2087 = vmatpush2.msra.mxu0 0.0
    %2088 = vmatprep.subr.mxu0 0.0
    %2089 = vmatpush2.msra.mxu0 0.0
    %2090 = vmatprep.subr.mxu0 0.0
    %2091 = vmatpush2.msra.mxu0 0.0
    %2092 = vmatprep.subr.mxu0 0.0
    %2093 = vmatpush2.msra.mxu0 0.0
    %2094 = vmatprep.mubr.f32.mxu0 0.0
    %2095 = vmatmul.mubr.f32.gmra.mxu0 %v2025
    %v2096 = vpop.f32.mrf.mxu0
    %v2097 = vadd.f32 0.0, %v2096
    %v2098 = vpop.f32.mrf.mxu0
    %2099 = vmatprep.mubr.f32.mxu0 0.0
    %2100 = vmatmul.mubr.f32.gmra.mxu0 %v2028
    %v2101 = vpop.f32.mrf.mxu0
    %v2102 = vadd.f32 0.0, %v2101
    %v2103 = vpop.f32.mrf.mxu0
    %2104 = vdwg.mxu0
    %2107 = vrot.lane.b32.xlu0 %v2014, 16
    %v2108 = vpop.permute.xlu0 %2107
    %2109 = vrot.lane.b32.xlu0 %v2019, 16
    %v2110 = vpop.permute.xlu0 %2109
    %v2113 = vsel %vm511, %v1636, %v2108
    %v2114 = vsel %vm511, %v1641, %v2110
    %2115 = vrot.lane.b32.xlu0 %v397, 96
    %v2116 = vpop.permute.xlu0 %2115
    %2117 = vrot.lane.b32.xlu0 %v398, 96
    %v2118 = vpop.permute.xlu0 %2117
    %v2121 = vadd.f32 %v2113, %v2116
    %v2122 = vadd.f32 %v2114, %v2118
    %2125 = vrot.lane.b32.xlu0 %v2097, 16
    %v2126 = vpop.permute.xlu0 %2125
    %2127 = vrot.lane.b32.xlu0 %v2102, 16
    %v2128 = vpop.permute.xlu0 %2127
    %v2131 = vsel %vm511, %v1717, %v2126
    %v2132 = vsel %vm511, %v1722, %v2128
    %2133 = vrot.lane.b32.xlu0 %v509, 64
    %v2134 = vpop.permute.xlu0 %2133
    %2135 = vrot.lane.b32.xlu0 %v510, 64
    %v2136 = vpop.permute.xlu0 %2135
    %v2139 = vadd.f32 %v2131, %v2134
    %v2140 = vadd.f32 %v2132, %v2136
    %v2141 = vadd.f32 %v2121, %v2139
    %v2142 = vadd.f32 %v2122, %v2140
    %v2143 = vmax.f32 %v2141, 0.0
    %v2144 = vmax.f32 %v2142, 0.0
    %v2145 = vsel %vm297, %v2143, 0.0
    %2146 = vadd.xlane.f32.xlu0 %v2145
    %v2147 = vpop.xlane.xlu0 %2146
    %v2148 = vsel %vm297, %v2144, 0.0
    %2149 = vadd.xlane.f32.xlu0 %v2148
    %v2150 = vpop.xlane.xlu0 %2149
    %v2151 = vmul.f32 %v2147, %v1312
    %v2152 = vmul.f32 %v2150, %v1312
    %v2153 = vsub.f32 %v2143, %v2151
    %v2154 = vsub.f32 %v2144, %v2152
    %v2155 = vmul.f32 %v2153, %v2153
    %v2156 = vmul.f32 %v2154, %v2154
    %v2157 = vsel %vm297, %v2155, 0.0
    %2158 = vadd.xlane.f32.xlu0 %v2157
    %v2159 = vpop.xlane.xlu0 %2158
    %v2160 = vsel %vm297, %v2156, 0.0
    %2161 = vadd.xlane.f32.xlu0 %v2160
    %v2162 = vpop.xlane.xlu0 %2161
    %v2163 = vmul.f32 %v2159, %v1312
    %v2164 = vmul.f32 %v2162, %v1312
    %v2165 = vadd.f32 %v2163, 1e-05
    %v2166 = vadd.f32 %v2164, 1e-05
    %v2167 = vrsqrt.pop %v2165
    %v2168 = vrsqrt.pop %v2166
    %v2169 = vmul.f32 %v2153, %v2167
    %v2170 = vmul.f32 %v2154, %v2168
    %v2171 = vmul.f32 %v2169, %v1338
    %v2172 = vmul.f32 %v2170, %v1338
    %v2173 = vadd.f32 %v2171, %v1347
    %v2174 = vadd.f32 %v2172, %v1347
    %v2175 = vlaneseq
    %v2176 = vshrl.u32 %v2175, 7
    %v2177 = vadd.s32 %v2176, 8
    %vm2178 = vcmp.eq.s32.totalorder %v2176, 0
    %vm2179 = vcmp.eq.s32.totalorder %v2177, 0
    %v2180 = vsel %vm2178, %v1349, 0.0
    %v2181 = vsel %vm2179, %v1350, 0.0
    %v2182 = vsel %vm2178, %v2173, 0.0
    %v2183 = vsel %vm2179, %v2174, 0.0
    %vm2184 = vcmp.eq.s32.totalorder %v2176, 1
    %vm2185 = vcmp.eq.s32.totalorder %v2177, 1
    %v2186 = vsel %vm2184, %v1349, 0.0
    %v2187 = vsel %vm2185, %v1350, 0.0
    %v2188 = vsel %vm2184, %v2173, 0.0
    %v2189 = vsel %vm2185, %v2174, 0.0
    %vm2190 = vcmp.eq.s32.totalorder %v2176, 2
    %vm2191 = vcmp.eq.s32.totalorder %v2177, 2
    %v2192 = vsel %vm2190, %v1349, 0.0
    %v2193 = vsel %vm2191, %v1350, 0.0
    %v2194 = vsel %vm2190, %v2173, 0.0
    %v2195 = vsel %vm2191, %v2174, 0.0
    %vm2196 = vcmp.eq.s32.totalorder %v2176, 3
    %vm2197 = vcmp.eq.s32.totalorder %v2177, 3
    %v2198 = vsel %vm2196, %v1349, 0.0
    %v2199 = vsel %vm2197, %v1350, 0.0
    %v2200 = vsel %vm2196, %v2173, 0.0
    %v2201 = vsel %vm2197, %v2174, 0.0
    %vm2202 = vcmp.eq.s32.totalorder %v2176, 4
    %vm2203 = vcmp.eq.s32.totalorder %v2177, 4
    %v2204 = vsel %vm2202, %v1349, 0.0
    %v2205 = vsel %vm2203, %v1350, 0.0
    %v2206 = vsel %vm2202, %v2173, 0.0
    %v2207 = vsel %vm2203, %v2174, 0.0
    %vm2208 = vcmp.eq.s32.totalorder %v2176, 5
    %vm2209 = vcmp.eq.s32.totalorder %v2177, 5
    %v2210 = vsel %vm2208, %v1349, 0.0
    %v2211 = vsel %vm2209, %v1350, 0.0
    %v2212 = vsel %vm2208, %v2173, 0.0
    %v2213 = vsel %vm2209, %v2174, 0.0
    %vm2214 = vcmp.eq.s32.totalorder %v2176, 6
    %vm2215 = vcmp.eq.s32.totalorder %v2177, 6
    %v2216 = vsel %vm2214, %v1349, 0.0
    %v2217 = vsel %vm2215, %v1350, 0.0
    %v2218 = vsel %vm2214, %v2173, 0.0
    %v2219 = vsel %vm2215, %v2174, 0.0
    %vm2220 = vcmp.eq.s32.totalorder %v2176, 7
    %vm2221 = vcmp.eq.s32.totalorder %v2177, 7
    %v2222 = vsel %vm2220, %v1349, 0.0
    %v2223 = vsel %vm2221, %v1350, 0.0
    %v2224 = vsel %vm2220, %v2173, 0.0
    %v2225 = vsel %vm2221, %v2174, 0.0
    %vm2226 = vcmp.eq.s32.totalorder %v2176, 8
    %vm2227 = vcmp.eq.s32.totalorder %v2177, 8
    %v2228 = vsel %vm2226, %v1349, 0.0
    %v2229 = vsel %vm2227, %v1350, 0.0
    %v2230 = vsel %vm2226, %v2173, 0.0
    %v2231 = vsel %vm2227, %v2174, 0.0
    %vm2232 = vcmp.eq.s32.totalorder %v2176, 9
    %vm2233 = vcmp.eq.s32.totalorder %v2177, 9
    %v2234 = vsel %vm2232, %v1349, 0.0
    %v2235 = vsel %vm2233, %v1350, 0.0
    %v2236 = vsel %vm2232, %v2173, 0.0
    %v2237 = vsel %vm2233, %v2174, 0.0
    %vm2238 = vcmp.eq.s32.totalorder %v2176, 10
    %vm2239 = vcmp.eq.s32.totalorder %v2177, 10
    %v2240 = vsel %vm2238, %v1349, 0.0
    %v2241 = vsel %vm2239, %v1350, 0.0
    %v2242 = vsel %vm2238, %v2173, 0.0
    %v2243 = vsel %vm2239, %v2174, 0.0
    %vm2244 = vcmp.eq.s32.totalorder %v2176, 11
    %vm2245 = vcmp.eq.s32.totalorder %v2177, 11
    %v2246 = vsel %vm2244, %v1349, 0.0
    %v2247 = vsel %vm2245, %v1350, 0.0
    %v2248 = vsel %vm2244, %v2173, 0.0
    %v2249 = vsel %vm2245, %v2174, 0.0
    %vm2250 = vcmp.eq.s32.totalorder %v2176, 12
    %vm2251 = vcmp.eq.s32.totalorder %v2177, 12
    %v2252 = vsel %vm2250, %v1349, 0.0
    %v2253 = vsel %vm2251, %v1350, 0.0
    %v2254 = vsel %vm2250, %v2173, 0.0
    %v2255 = vsel %vm2251, %v2174, 0.0
    %vm2256 = vcmp.eq.s32.totalorder %v2176, 13
    %vm2257 = vcmp.eq.s32.totalorder %v2177, 13
    %v2258 = vsel %vm2256, %v1349, 0.0
    %v2259 = vsel %vm2257, %v1350, 0.0
    %v2260 = vsel %vm2256, %v2173, 0.0
    %v2261 = vsel %vm2257, %v2174, 0.0
    %vm2262 = vcmp.eq.s32.totalorder %v2176, 14
    %vm2263 = vcmp.eq.s32.totalorder %v2177, 14
    %v2264 = vsel %vm2262, %v1349, 0.0
    %v2265 = vsel %vm2263, %v1350, 0.0
    %v2266 = vsel %vm2262, %v2173, 0.0
    %v2267 = vsel %vm2263, %v2174, 0.0
    %vm2268 = vcmp.eq.s32.totalorder %v2176, 15
    %vm2269 = vcmp.eq.s32.totalorder %v2177, 15
    %v2270 = vsel %vm2268, %v1349, 0.0
    %v2271 = vsel %vm2269, %v1350, 0.0
    %v2272 = vsel %vm2268, %v2173, 0.0
    %v2273 = vsel %vm2269, %v2174, 0.0
    %2278 = vrot.lane.b32.xlu0 %v2186, 32
    %v2279 = vpop.permute.xlu0 %2278
    %2280 = vrot.lane.b32.xlu0 %v2187, 32
    %v2281 = vpop.permute.xlu0 %2280
    %2282 = vrot.lane.b32.xlu0 %v2188, 32
    %v2283 = vpop.permute.xlu0 %2282
    %2284 = vrot.lane.b32.xlu0 %v2189, 32
    %v2285 = vpop.permute.xlu0 %2284
    %2294 = vrot.lane.b32.xlu0 %v2192, 64
    %v2295 = vpop.permute.xlu0 %2294
    %2296 = vrot.lane.b32.xlu0 %v2193, 64
    %v2297 = vpop.permute.xlu0 %2296
    %2298 = vrot.lane.b32.xlu0 %v2194, 64
    %v2299 = vpop.permute.xlu0 %2298
    %2300 = vrot.lane.b32.xlu0 %v2195, 64
    %v2301 = vpop.permute.xlu0 %2300
    %2310 = vrot.lane.b32.xlu0 %v2198, 96
    %v2311 = vpop.permute.xlu0 %2310
    %2312 = vrot.lane.b32.xlu0 %v2199, 96
    %v2313 = vpop.permute.xlu0 %2312
    %2314 = vrot.lane.b32.xlu0 %v2200, 96
    %v2315 = vpop.permute.xlu0 %2314
    %2316 = vrot.lane.b32.xlu0 %v2201, 96
    %v2317 = vpop.permute.xlu0 %2316
    %2326 = vrot.lane.b32.xlu0 %v2210, 32
    %v2327 = vpop.permute.xlu0 %2326
    %2328 = vrot.lane.b32.xlu0 %v2211, 32
    %v2329 = vpop.permute.xlu0 %2328
    %2330 = vrot.lane.b32.xlu0 %v2212, 32
    %v2331 = vpop.permute.xlu0 %2330
    %2332 = vrot.lane.b32.xlu0 %v2213, 32
    %v2333 = vpop.permute.xlu0 %2332
    %2342 = vrot.lane.b32.xlu0 %v2216, 64
    %v2343 = vpop.permute.xlu0 %2342
    %2344 = vrot.lane.b32.xlu0 %v2217, 64
    %v2345 = vpop.permute.xlu0 %2344
    %2346 = vrot.lane.b32.xlu0 %v2218, 64
    %v2347 = vpop.permute.xlu0 %2346
    %2348 = vrot.lane.b32.xlu0 %v2219, 64
    %v2349 = vpop.permute.xlu0 %2348
    %2358 = vrot.lane.b32.xlu0 %v2222, 96
    %v2359 = vpop.permute.xlu0 %2358
    %2360 = vrot.lane.b32.xlu0 %v2223, 96
    %v2361 = vpop.permute.xlu0 %2360
    %2362 = vrot.lane.b32.xlu0 %v2224, 96
    %v2363 = vpop.permute.xlu0 %2362
    %2364 = vrot.lane.b32.xlu0 %v2225, 96
    %v2365 = vpop.permute.xlu0 %2364
    %2374 = vrot.lane.b32.xlu0 %v2234, 32
    %v2375 = vpop.permute.xlu0 %2374
    %2376 = vrot.lane.b32.xlu0 %v2235, 32
    %v2377 = vpop.permute.xlu0 %2376
    %2378 = vrot.lane.b32.xlu0 %v2236, 32
    %v2379 = vpop.permute.xlu0 %2378
    %2380 = vrot.lane.b32.xlu0 %v2237, 32
    %v2381 = vpop.permute.xlu0 %2380
    %2390 = vrot.lane.b32.xlu0 %v2240, 64
    %v2391 = vpop.permute.xlu0 %2390
    %2392 = vrot.lane.b32.xlu0 %v2241, 64
    %v2393 = vpop.permute.xlu0 %2392
    %2394 = vrot.lane.b32.xlu0 %v2242, 64
    %v2395 = vpop.permute.xlu0 %2394
    %2396 = vrot.lane.b32.xlu0 %v2243, 64
    %v2397 = vpop.permute.xlu0 %2396
    %2406 = vrot.lane.b32.xlu0 %v2246, 96
    %v2407 = vpop.permute.xlu0 %2406
    %2408 = vrot.lane.b32.xlu0 %v2247, 96
    %v2409 = vpop.permute.xlu0 %2408
    %2410 = vrot.lane.b32.xlu0 %v2248, 96
    %v2411 = vpop.permute.xlu0 %2410
    %2412 = vrot.lane.b32.xlu0 %v2249, 96
    %v2413 = vpop.permute.xlu0 %2412
    %2422 = vrot.lane.b32.xlu0 %v2258, 32
    %v2423 = vpop.permute.xlu0 %2422
    %2424 = vrot.lane.b32.xlu0 %v2259, 32
    %v2425 = vpop.permute.xlu0 %2424
    %2426 = vrot.lane.b32.xlu0 %v2260, 32
    %v2427 = vpop.permute.xlu0 %2426
    %2428 = vrot.lane.b32.xlu0 %v2261, 32
    %v2429 = vpop.permute.xlu0 %2428
    %2438 = vrot.lane.b32.xlu0 %v2264, 64
    %v2439 = vpop.permute.xlu0 %2438
    %2440 = vrot.lane.b32.xlu0 %v2265, 64
    %v2441 = vpop.permute.xlu0 %2440
    %2442 = vrot.lane.b32.xlu0 %v2266, 64
    %v2443 = vpop.permute.xlu0 %2442
    %2444 = vrot.lane.b32.xlu0 %v2267, 64
    %v2445 = vpop.permute.xlu0 %2444
    %2454 = vrot.lane.b32.xlu0 %v2270, 96
    %v2455 = vpop.permute.xlu0 %2454
    %2456 = vrot.lane.b32.xlu0 %v2271, 96
    %v2457 = vpop.permute.xlu0 %2456
    %2458 = vrot.lane.b32.xlu0 %v2272, 96
    %v2459 = vpop.permute.xlu0 %2458
    %2460 = vrot.lane.b32.xlu0 %v2273, 96
    %v2461 = vpop.permute.xlu0 %2460
    %v2466 = vsel %vm297, %v2180, %v2279
    %v2467 = vsel %vm297, %v2181, %v2281
    %v2468 = vsel %vm297, %v2182, %v2283
    %v2469 = vsel %vm297, %v2183, %v2285
    %vm2470 = vcmask 523264
    %v2471 = vsel %vm2470, %v2466, %v2295
    %v2472 = vsel %vm2470, %v2467, %v2297
    %v2473 = vsel %vm2470, %v2468, %v2299
    %v2474 = vsel %vm2470, %v2469, %v2301
    %vm2475 = vcmask 785408
    %v2476 = vsel %vm2475, %v2471, %v2311
    %v2477 = vsel %vm2475, %v2472, %v2313
    %v2478 = vsel %vm2475, %v2473, %v2315
    %v2479 = vsel %vm2475, %v2474, %v2317
    %v2480 = vsel %vm297, %v2204, %v2327
    %v2481 = vsel %vm297, %v2205, %v2329
    %v2482 = vsel %vm297, %v2206, %v2331
    %v2483 = vsel %vm297, %v2207, %v2333
    %v2484 = vsel %vm2470, %v2480, %v2343
    %v2485 = vsel %vm2470, %v2481, %v2345
    %v2486 = vsel %vm2470, %v2482, %v2347
    %v2487 = vsel %vm2470, %v2483, %v2349
    %v2488 = vsel %vm2475, %v2484, %v2359
    %v2489 = vsel %vm2475, %v2485, %v2361
    %v2490 = vsel %vm2475, %v2486, %v2363
    %v2491 = vsel %vm2475, %v2487, %v2365
    %v2492 = vsel %vm297, %v2228, %v2375
    %v2493 = vsel %vm297, %v2229, %v2377
    %v2494 = vsel %vm297, %v2230, %v2379
    %v2495 = vsel %vm297, %v2231, %v2381
    %v2496 = vsel %vm2470, %v2492, %v2391
    %v2497 = vsel %vm2470, %v2493, %v2393
    %v2498 = vsel %vm2470, %v2494, %v2395
    %v2499 = vsel %vm2470, %v2495, %v2397
    %v2500 = vsel %vm2475, %v2496, %v2407
    %v2501 = vsel %vm2475, %v2497, %v2409
    %v2502 = vsel %vm2475, %v2498, %v2411
    %v2503 = vsel %vm2475, %v2499, %v2413
    %v2504 = vsel %vm297, %v2252, %v2423
    %v2505 = vsel %vm297, %v2253, %v2425
    %v2506 = vsel %vm297, %v2254, %v2427
    %v2507 = vsel %vm297, %v2255, %v2429
    %v2508 = vsel %vm2470, %v2504, %v2439
    %v2509 = vsel %vm2470, %v2505, %v2441
    %v2510 = vsel %vm2470, %v2506, %v2443
    %v2511 = vsel %vm2470, %v2507, %v2445
    %v2512 = vsel %vm2475, %v2508, %v2455
    %v2513 = vsel %vm2475, %v2509, %v2457
    %v2514 = vsel %vm2475, %v2510, %v2459
    %v2515 = vsel %vm2475, %v2511, %v2461
    %v2516 = vlaneseq
    %v2517 = vand.u32 %v2516, 127
    %v2518 = vmul.u32 %v2176, 16
    %vm2519 = vcmp.ge.s32.totalorder %v2517, %v2518
    %v2520 = vadd.s32 %v2176, 1
    %v2521 = vmul.u32 %v2520, 16
    %vm2522 = vcmp.lt.s32.totalorder %v2517, %v2521
    %vm2523 = vmand %vm2519, %vm2522
    %v2524 = vsel %vm2523, 1.0, 0.0
    %v2526 = vsel %vm297, %v2524, 0
    %2528 = vmatprep.subr.mxu0 0.0
    %2529 = vmatpush1.msra.mxu0 0.0
    %2530 = vmatprep.subr.mxu0 0.0
    %2531 = vmatpush1.msra.mxu0 0.0
    %2532 = vmatprep.subr.mxu0 0.0
    %2533 = vmatpush1.msra.mxu0 0.0
    %2534 = vmatprep.subr.mxu0 0.0
    %2535 = vmatpush1.msra.mxu0 0.0
    %2536 = vmatprep.subr.mxu0 0.0
    %2537 = vmatpush1.msra.mxu0 0.0
    %2538 = vmatprep.subr.mxu0 0.0
    %2539 = vmatpush1.msra.mxu0 0.0
    %2540 = vmatprep.subr.mxu0 0.0
    %2541 = vmatpush1.msra.mxu0 0.0
    %2542 = vmatprep.subr.mxu0 0.0
    %2543 = vmatpush1.msra.mxu0 0.0
    %2544 = vmatprep.subr.mxu0 0.0
    %2545 = vmatpush1.msra.mxu0 0.0
    %2546 = vmatprep.subr.mxu0 0.0
    %2547 = vmatpush1.msra.mxu0 0.0
    %2548 = vmatprep.subr.mxu0 0.0
    %2549 = vmatpush1.msra.mxu0 0.0
    %2550 = vmatprep.subr.mxu0 0.0
    %2551 = vmatpush1.msra.mxu0 0.0
    %2552 = vmatprep.subr.mxu0 %v2491
    %2553 = vmatpush1.msra.mxu0 %v2479
    %2554 = vmatprep.subr.mxu0 %v2490
    %2555 = vmatpush1.msra.mxu0 %v2478
    %2556 = vmatprep.subr.mxu0 %v2489
    %2557 = vmatpush1.msra.mxu0 %v2477
    %2558 = vmatprep.subr.mxu0 %v2488
    %2559 = vmatpush1.msra.mxu0 %v2476
    %2560 = vmatprep.subr.mxu0 0.0
    %2561 = vmatpush2.msra.mxu0 0.0
    %2562 = vmatprep.subr.mxu0 0.0
    %2563 = vmatpush2.msra.mxu0 0.0
    %2564 = vmatprep.subr.mxu0 0.0
    %2565 = vmatpush2.msra.mxu0 0.0
    %2566 = vmatprep.subr.mxu0 0.0
    %2567 = vmatpush2.msra.mxu0 0.0
    %2568 = vmatprep.subr.mxu0 0.0
    %2569 = vmatpush2.msra.mxu0 0.0
    %2570 = vmatprep.subr.mxu0 0.0
    %2571 = vmatpush2.msra.mxu0 0.0
    %2572 = vmatprep.subr.mxu0 0.0
    %2573 = vmatpush2.msra.mxu0 0.0
    %2574 = vmatprep.subr.mxu0 0.0
    %2575 = vmatpush2.msra.mxu0 0.0
    %2576 = vmatprep.subr.mxu0 0.0
    %2577 = vmatpush2.msra.mxu0 0.0
    %2578 = vmatprep.subr.mxu0 0.0
    %2579 = vmatpush2.msra.mxu0 0.0
    %2580 = vmatprep.subr.mxu0 0.0
    %2581 = vmatpush2.msra.mxu0 0.0
    %2582 = vmatprep.subr.mxu0 0.0
    %2583 = vmatpush2.msra.mxu0 0.0
    %2584 = vmatprep.subr.mxu0 0.0
    %2585 = vmatpush2.msra.mxu0 0.0
    %2586 = vmatprep.subr.mxu0 0.0
    %2587 = vmatpush2.msra.mxu0 0.0
    %2588 = vmatprep.subr.mxu0 0.0
    %2589 = vmatpush2.msra.mxu0 0.0
    %2590 = vmatprep.subr.mxu0 0.0
    %2591 = vmatpush2.msra.mxu0 0.0
    %2592 = vmatprep.mubr.f32.mxu0 0.0
    %2593 = vmatmul.mubr.f32.gmra.mxu0 %v2526
    %v2594 = vpop.f32.mrf.mxu0
    %v2595 = vadd.f32 0.0, %v2594
    %v2596 = vpop.f32.mrf.mxu0
    %v2597 = vadd.f32 0.0, %v2596
    %2598 = vdwg.mxu0
    %2599 = vmatprep.subr.mxu0 0.0
    %2600 = vmatpush1.msra.mxu0 0.0
    %2601 = vmatprep.subr.mxu0 0.0
    %2602 = vmatpush1.msra.mxu0 0.0
    %2603 = vmatprep.subr.mxu0 0.0
    %2604 = vmatpush1.msra.mxu0 0.0
    %2605 = vmatprep.subr.mxu0 0.0
    %2606 = vmatpush1.msra.mxu0 0.0
    %2607 = vmatprep.subr.mxu0 0.0
    %2608 = vmatpush1.msra.mxu0 0.0
    %2609 = vmatprep.subr.mxu0 0.0
    %2610 = vmatpush1.msra.mxu0 0.0
    %2611 = vmatprep.subr.mxu0 0.0
    %2612 = vmatpush1.msra.mxu0 0.0
    %2613 = vmatprep.subr.mxu0 0.0
    %2614 = vmatpush1.msra.mxu0 0.0
    %2615 = vmatprep.subr.mxu0 0.0
    %2616 = vmatpush1.msra.mxu0 0.0
    %2617 = vmatprep.subr.mxu0 0.0
    %2618 = vmatpush1.msra.mxu0 0.0
    %2619 = vmatprep.subr.mxu0 0.0
    %2620 = vmatpush1.msra.mxu0 0.0
    %2621 = vmatprep.subr.mxu0 0.0
    %2622 = vmatpush1.msra.mxu0 0.0
    %2623 = vmatprep.subr.mxu0 %v2515
    %2624 = vmatpush1.msra.mxu0 %v2503
    %2625 = vmatprep.subr.mxu0 %v2514
    %2626 = vmatpush1.msra.mxu0 %v2502
    %2627 = vmatprep.subr.mxu0 %v2513
    %2628 = vmatpush1.msra.mxu0 %v2501
    %2629 = vmatprep.subr.mxu0 %v2512
    %2630 = vmatpush1.msra.mxu0 %v2500
    %2631 = vmatprep.subr.mxu0 0.0
    %2632 = vmatpush2.msra.mxu0 0.0
    %2633 = vmatprep.subr.mxu0 0.0
    %2634 = vmatpush2.msra.mxu0 0.0
    %2635 = vmatprep.subr.mxu0 0.0
    %2636 = vmatpush2.msra.mxu0 0.0
    %2637 = vmatprep.subr.mxu0 0.0
    %2638 = vmatpush2.msra.mxu0 0.0
    %2639 = vmatprep.subr.mxu0 0.0
    %2640 = vmatpush2.msra.mxu0 0.0
    %2641 = vmatprep.subr.mxu0 0.0
    %2642 = vmatpush2.msra.mxu0 0.0
    %2643 = vmatprep.subr.mxu0 0.0
    %2644 = vmatpush2.msra.mxu0 0.0
    %2645 = vmatprep.subr.mxu0 0.0
    %2646 = vmatpush2.msra.mxu0 0.0
    %2647 = vmatprep.subr.mxu0 0.0
    %2648 = vmatpush2.msra.mxu0 0.0
    %2649 = vmatprep.subr.mxu0 0.0
    %2650 = vmatpush2.msra.mxu0 0.0
    %2651 = vmatprep.subr.mxu0 0.0
    %2652 = vmatpush2.msra.mxu0 0.0
    %2653 = vmatprep.subr.mxu0 0.0
    %2654 = vmatpush2.msra.mxu0 0.0
    %2655 = vmatprep.subr.mxu0 0.0
    %2656 = vmatpush2.msra.mxu0 0.0
    %2657 = vmatprep.subr.mxu0 0.0
    %2658 = vmatpush2.msra.mxu0 0.0
    %2659 = vmatprep.subr.mxu0 0.0
    %2660 = vmatpush2.msra.mxu0 0.0
    %2661 = vmatprep.subr.mxu0 0.0
    %2662 = vmatpush2.msra.mxu0 0.0
    %2663 = vmatprep.mubr.f32.mxu0 0.0
    %2664 = vmatmul.mubr.f32.gmra.mxu0 %v2526
    %v2665 = vpop.f32.mrf.mxu0
    %v2666 = vadd.f32 0.0, %v2665
    %v2667 = vpop.f32.mrf.mxu0
    %v2668 = vadd.f32 0.0, %v2667
    %2669 = vdwg.mxu0
    %v2670 = vld [vmem:[%s12] sm:$0xff]
    %v2671 = vld [vmem:[%s12 + $0x8] sm:$0xff]
    %v2672 = vld [vmem:[%s12 + $0x10] sm:$0xff]
    %v2673 = vld [vmem:[%s12 + $0x18] sm:$0xff]
    %v2674 = vld [vmem:[%s12 + $0x20] sm:$0xff]
    %v2675 = vld [vmem:[%s12 + $0x28] sm:$0xff]
    %v2676 = vld [vmem:[%s12 + $0x30] sm:$0xff]
    %v2677 = vld [vmem:[%s12 + $0x38] sm:$0xff]
    %v2678 = vld [vmem:[%s12 + $0x40] sm:$0xff]
    %v2679 = vld [vmem:[%s12 + $0x48] sm:$0xff]
    %v2680 = vld [vmem:[%s12 + $0x50] sm:$0xff]
    %v2681 = vld [vmem:[%s12 + $0x58] sm:$0xff]
    %v2682 = vld [vmem:[%s12 + $0x60] sm:$0xff]
    %v2683 = vld [vmem:[%s12 + $0x68] sm:$0xff]
    %v2684 = vld [vmem:[%s12 + $0x70] sm:$0xff]
    %v2685 = vld [vmem:[%s12 + $0x78] sm:$0xff]
    %v2686 = vld [vmem:[%s12 + $0x80] sm:$0xff]
    %v2687 = vld [vmem:[%s12 + $0x88] sm:$0xff]
    %v2688 = vld [vmem:[%s12 + $0x90] sm:$0xff]
    %v2689 = vld [vmem:[%s12 + $0x98] sm:$0xff]
    %v2690 = vld [vmem:[%s12 + $0xa0] sm:$0xff]
    %v2691 = vld [vmem:[%s12 + $0xa8] sm:$0xff]
    %v2692 = vld [vmem:[%s12 + $0xb0] sm:$0xff]
    %v2693 = vld [vmem:[%s12 + $0xb8] sm:$0xff]
    %v2694 = vld [vmem:[%s12 + $0xc0] sm:$0xff]
    %v2695 = vld [vmem:[%s12 + $0xc8] sm:$0xff]
    %v2696 = vld [vmem:[%s12 + $0xd0] sm:$0xff]
    %v2697 = vld [vmem:[%s12 + $0xd8] sm:$0xff]
    %v2698 = vld [vmem:[%s12 + $0xe0] sm:$0xff]
    %v2699 = vld [vmem:[%s12 + $0xe8] sm:$0xff]
    %v2700 = vld [vmem:[%s12 + $0xf0] sm:$0xff]
    %v2701 = vld [vmem:[%s12 + $0xf8] sm:$0xff]
    %v2702 = vld [vmem:[%s12 + $0x100] sm:$0xff]
    %v2703 = vld [vmem:[%s12 + $0x108] sm:$0xff]
    %v2704 = vld [vmem:[%s12 + $0x110] sm:$0xff]
    %v2705 = vld [vmem:[%s12 + $0x118] sm:$0xff]
    %v2706 = vld [vmem:[%s12 + $0x120] sm:$0xff]
    %v2707 = vld [vmem:[%s12 + $0x128] sm:$0xff]
    %v2708 = vld [vmem:[%s12 + $0x130] sm:$0xff]
    %v2709 = vld [vmem:[%s12 + $0x138] sm:$0xff]
    %v2710 = vld [vmem:[%s12 + $0x140] sm:$0xff]
    %v2711 = vld [vmem:[%s12 + $0x148] sm:$0xff]
    %v2712 = vld [vmem:[%s12 + $0x150] sm:$0xff]
    %v2713 = vld [vmem:[%s12 + $0x158] sm:$0xff]
    %v2714 = vld [vmem:[%s12 + $0x160] sm:$0xff]
    %v2715 = vld [vmem:[%s12 + $0x168] sm:$0xff]
    %v2716 = vld [vmem:[%s12 + $0x170] sm:$0xff]
    %v2717 = vld [vmem:[%s12 + $0x178] sm:$0xff]
    %v2718 = vld [vmem:[%s12 + $0x180] sm:$0xff]
    %v2719 = vld [vmem:[%s12 + $0x188] sm:$0xff]
    %v2720 = vld [vmem:[%s12 + $0x190] sm:$0xff]
    %v2721 = vld [vmem:[%s12 + $0x198] sm:$0xff]
    %v2722 = vld [vmem:[%s12 + $0x1a0] sm:$0xff]
    %v2723 = vld [vmem:[%s12 + $0x1a8] sm:$0xff]
    %v2724 = vld [vmem:[%s12 + $0x1b0] sm:$0xff]
    %v2725 = vld [vmem:[%s12 + $0x1b8] sm:$0xff]
    %v2726 = vld [vmem:[%s12 + $0x1c0] sm:$0xff]
    %v2727 = vld [vmem:[%s12 + $0x1c8] sm:$0xff]
    %v2728 = vld [vmem:[%s12 + $0x1d0] sm:$0xff]
    %v2729 = vld [vmem:[%s12 + $0x1d8] sm:$0xff]
    %v2730 = vld [vmem:[%s12 + $0x1e0] sm:$0xff]
    %v2731 = vld [vmem:[%s12 + $0x1e8] sm:$0xff]
    %v2732 = vld [vmem:[%s12 + $0x1f0] sm:$0xff]
    %v2733 = vld [vmem:[%s12 + $0x1f8] sm:$0xff]
    %v2734 = vld [vmem:[%s13] sm:$0x1]
    %v2736 = vlaneseq
    %v2737 = vshrl.u32 %v2736, 7
    %v2738 = vsub.s32 0, %v2737
    %v2739 = vrot.slane %v2734, %v2738
    %2741 = vmatprep.subr.mxu0 0.0
    %2742 = vmatpush1.msra.mxu0 %v2685
    %2743 = vmatprep.subr.mxu0 0.0
    %2744 = vmatpush1.msra.mxu0 %v2684
    %2745 = vmatprep.subr.mxu0 0.0
    %2746 = vmatpush1.msra.mxu0 %v2683
    %2747 = vmatprep.subr.mxu0 0.0
    %2748 = vmatpush1.msra.mxu0 %v2682
    %2749 = vmatprep.subr.mxu0 0.0
    %2750 = vmatpush1.msra.mxu0 %v2681
    %2751 = vmatprep.subr.mxu0 0.0
    %2752 = vmatpush1.msra.mxu0 %v2680
    %2753 = vmatprep.subr.mxu0 0.0
    %2754 = vmatpush1.msra.mxu0 %v2679
    %2755 = vmatprep.subr.mxu0 0.0
    %2756 = vmatpush1.msra.mxu0 %v2678
    %2757 = vmatprep.subr.mxu0 0.0
    %2758 = vmatpush1.msra.mxu0 %v2677
    %2759 = vmatprep.subr.mxu0 0.0
    %2760 = vmatpush1.msra.mxu0 %v2676
    %2761 = vmatprep.subr.mxu0 0.0
    %2762 = vmatpush1.msra.mxu0 %v2675
    %2763 = vmatprep.subr.mxu0 0.0
    %2764 = vmatpush1.msra.mxu0 %v2674
    %2765 = vmatprep.subr.mxu0 0.0
    %2766 = vmatpush1.msra.mxu0 %v2673
    %2767 = vmatprep.subr.mxu0 0.0
    %2768 = vmatpush1.msra.mxu0 %v2672
    %2769 = vmatprep.subr.mxu0 0.0
    %2770 = vmatpush1.msra.mxu0 %v2671
    %2771 = vmatprep.subr.mxu0 0.0
    %2772 = vmatpush1.msra.mxu0 %v2670
    %2773 = vmatprep.subr.mxu0 0.0
    %2774 = vmatpush2.msra.mxu0 %v2701
    %2775 = vmatprep.subr.mxu0 0.0
    %2776 = vmatpush2.msra.mxu0 %v2700
    %2777 = vmatprep.subr.mxu0 0.0
    %2778 = vmatpush2.msra.mxu0 %v2699
    %2779 = vmatprep.subr.mxu0 0.0
    %2780 = vmatpush2.msra.mxu0 %v2698
    %2781 = vmatprep.subr.mxu0 0.0
    %2782 = vmatpush2.msra.mxu0 %v2697
    %2783 = vmatprep.subr.mxu0 0.0
    %2784 = vmatpush2.msra.mxu0 %v2696
    %2785 = vmatprep.subr.mxu0 0.0
    %2786 = vmatpush2.msra.mxu0 %v2695
    %2787 = vmatprep.subr.mxu0 0.0
    %2788 = vmatpush2.msra.mxu0 %v2694
    %2789 = vmatprep.subr.mxu0 0.0
    %2790 = vmatpush2.msra.mxu0 %v2693
    %2791 = vmatprep.subr.mxu0 0.0
    %2792 = vmatpush2.msra.mxu0 %v2692
    %2793 = vmatprep.subr.mxu0 0.0
    %2794 = vmatpush2.msra.mxu0 %v2691
    %2795 = vmatprep.subr.mxu0 0.0
    %2796 = vmatpush2.msra.mxu0 %v2690
    %2797 = vmatprep.subr.mxu0 0.0
    %2798 = vmatpush2.msra.mxu0 %v2689
    %2799 = vmatprep.subr.mxu0 0.0
    %2800 = vmatpush2.msra.mxu0 %v2688
    %2801 = vmatprep.subr.mxu0 0.0
    %2802 = vmatpush2.msra.mxu0 %v2687
    %2803 = vmatprep.subr.mxu0 0.0
    %2804 = vmatpush2.msra.mxu0 %v2686
    %2805 = vmatprep.mubr.f32.mxu0 %v2597
    %2806 = vmatmul.mubr.f32.gmra.mxu0 %v2595
    %v2807 = vpop.f32.mrf.mxu0
    %v2808 = vadd.f32 %v2739, %v2807
    %v2809 = vpop.f32.mrf.mxu0
    %2810 = vdwg.mxu0
    %2811 = vmatprep.subr.mxu0 0.0
    %2812 = vmatpush1.msra.mxu0 %v2717
    %2813 = vmatprep.subr.mxu0 0.0
    %2814 = vmatpush1.msra.mxu0 %v2716
    %2815 = vmatprep.subr.mxu0 0.0
    %2816 = vmatpush1.msra.mxu0 %v2715
    %2817 = vmatprep.subr.mxu0 0.0
    %2818 = vmatpush1.msra.mxu0 %v2714
    %2819 = vmatprep.subr.mxu0 0.0
    %2820 = vmatpush1.msra.mxu0 %v2713
    %2821 = vmatprep.subr.mxu0 0.0
    %2822 = vmatpush1.msra.mxu0 %v2712
    %2823 = vmatprep.subr.mxu0 0.0
    %2824 = vmatpush1.msra.mxu0 %v2711
    %2825 = vmatprep.subr.mxu0 0.0
    %2826 = vmatpush1.msra.mxu0 %v2710
    %2827 = vmatprep.subr.mxu0 0.0
    %2828 = vmatpush1.msra.mxu0 %v2709
    %2829 = vmatprep.subr.mxu0 0.0
    %2830 = vmatpush1.msra.mxu0 %v2708
    %2831 = vmatprep.subr.mxu0 0.0
    %2832 = vmatpush1.msra.mxu0 %v2707
    %2833 = vmatprep.subr.mxu0 0.0
    %2834 = vmatpush1.msra.mxu0 %v2706
    %2835 = vmatprep.subr.mxu0 0.0
    %2836 = vmatpush1.msra.mxu0 %v2705
    %2837 = vmatprep.subr.mxu0 0.0
    %2838 = vmatpush1.msra.mxu0 %v2704
    %2839 = vmatprep.subr.mxu0 0.0
    %2840 = vmatpush1.msra.mxu0 %v2703
    %2841 = vmatprep.subr.mxu0 0.0
    %2842 = vmatpush1.msra.mxu0 %v2702
    %2843 = vmatprep.subr.mxu0 0.0
    %2844 = vmatpush2.msra.mxu0 %v2733
    %2845 = vmatprep.subr.mxu0 0.0
    %2846 = vmatpush2.msra.mxu0 %v2732
    %2847 = vmatprep.subr.mxu0 0.0
    %2848 = vmatpush2.msra.mxu0 %v2731
    %2849 = vmatprep.subr.mxu0 0.0
    %2850 = vmatpush2.msra.mxu0 %v2730
    %2851 = vmatprep.subr.mxu0 0.0
    %2852 = vmatpush2.msra.mxu0 %v2729
    %2853 = vmatprep.subr.mxu0 0.0
    %2854 = vmatpush2.msra.mxu0 %v2728
    %2855 = vmatprep.subr.mxu0 0.0
    %2856 = vmatpush2.msra.mxu0 %v2727
    %2857 = vmatprep.subr.mxu0 0.0
    %2858 = vmatpush2.msra.mxu0 %v2726
    %2859 = vmatprep.subr.mxu0 0.0
    %2860 = vmatpush2.msra.mxu0 %v2725
    %2861 = vmatprep.subr.mxu0 0.0
    %2862 = vmatpush2.msra.mxu0 %v2724
    %2863 = vmatprep.subr.mxu0 0.0
    %2864 = vmatpush2.msra.mxu0 %v2723
    %2865 = vmatprep.subr.mxu0 0.0
    %2866 = vmatpush2.msra.mxu0 %v2722
    %2867 = vmatprep.subr.mxu0 0.0
    %2868 = vmatpush2.msra.mxu0 %v2721
    %2869 = vmatprep.subr.mxu0 0.0
    %2870 = vmatpush2.msra.mxu0 %v2720
    %2871 = vmatprep.subr.mxu0 0.0
    %2872 = vmatpush2.msra.mxu0 %v2719
    %2873 = vmatprep.subr.mxu0 0.0
    %2874 = vmatpush2.msra.mxu0 %v2718
    %2875 = vmatprep.mubr.f32.mxu0 %v2668
    %2876 = vmatmul.mubr.f32.gmra.mxu0 %v2666
    %v2877 = vpop.f32.mrf.mxu0
    %v2878 = vadd.f32 %v2808, %v2877
    %v2879 = vpop.f32.mrf.mxu0
    %2880 = vdwg.mxu0
    %v2881 = vmax.f32 %v2878, 0.0
    %v2882 = vld [vmem:[%s14] sm:$0xff]
    %v2883 = vld [vmem:[%s14 + $0x8] sm:$0xff]
    %v2884 = vld [vmem:[%s14 + $0x10] sm:$0xff]
    %v2885 = vld [vmem:[%s14 + $0x18] sm:$0xff]
    %v2886 = vld [vmem:[%s15] sm:$0x1]
    %v2888 = vlaneseq
    %v2889 = vshrl.u32 %v2888, 7
    %v2890 = vsub.s32 0, %v2889
    %v2891 = vrot.slane %v2886, %v2890
    %v2894 = vsel %vm297, %v2881, 0
    %2896 = vmatprep.subr.mxu0 0.0
    %2897 = vmatpush1.msra.mxu0 0.0
    %2898 = vmatprep.subr.mxu0 0.0
    %2899 = vmatpush1.msra.mxu0 0.0
    %2900 = vmatprep.subr.mxu0 0.0
    %2901 = vmatpush1.msra.mxu0 0.0
    %2902 = vmatprep.subr.mxu0 0.0
    %2903 = vmatpush1.msra.mxu0 0.0
    %2904 = vmatprep.subr.mxu0 0.0
    %2905 = vmatpush1.msra.mxu0 0.0
    %2906 = vmatprep.subr.mxu0 0.0
    %2907 = vmatpush1.msra.mxu0 0.0
    %2908 = vmatprep.subr.mxu0 0.0
    %2909 = vmatpush1.msra.mxu0 0.0
    %2910 = vmatprep.subr.mxu0 0.0
    %2911 = vmatpush1.msra.mxu0 0.0
    %2912 = vmatprep.subr.mxu0 0.0
    %2913 = vmatpush1.msra.mxu0 0.0
    %2914 = vmatprep.subr.mxu0 0.0
    %2915 = vmatpush1.msra.mxu0 0.0
    %2916 = vmatprep.subr.mxu0 0.0
    %2917 = vmatpush1.msra.mxu0 0.0
    %2918 = vmatprep.subr.mxu0 0.0
    %2919 = vmatpush1.msra.mxu0 0.0
    %2920 = vmatprep.subr.mxu0 0.0
    %2921 = vmatpush1.msra.mxu0 %v2885
    %2922 = vmatprep.subr.mxu0 0.0
    %2923 = vmatpush1.msra.mxu0 %v2884
    %2924 = vmatprep.subr.mxu0 0.0
    %2925 = vmatpush1.msra.mxu0 %v2883
    %2926 = vmatprep.subr.mxu0 0.0
    %2927 = vmatpush1.msra.mxu0 %v2882
    %2928 = vmatprep.subr.mxu0 0.0
    %2929 = vmatpush2.msra.mxu0 0.0
    %2930 = vmatprep.subr.mxu0 0.0
    %2931 = vmatpush2.msra.mxu0 0.0
    %2932 = vmatprep.subr.mxu0 0.0
    %2933 = vmatpush2.msra.mxu0 0.0
    %2934 = vmatprep.subr.mxu0 0.0
    %2935 = vmatpush2.msra.mxu0 0.0
    %2936 = vmatprep.subr.mxu0 0.0
    %2937 = vmatpush2.msra.mxu0 0.0
    %2938 = vmatprep.subr.mxu0 0.0
    %2939 = vmatpush2.msra.mxu0 0.0
    %2940 = vmatprep.subr.mxu0 0.0
    %2941 = vmatpush2.msra.mxu0 0.0
    %2942 = vmatprep.subr.mxu0 0.0
    %2943 = vmatpush2.msra.mxu0 0.0
    %2944 = vmatprep.subr.mxu0 0.0
    %2945 = vmatpush2.msra.mxu0 0.0
    %2946 = vmatprep.subr.mxu0 0.0
    %2947 = vmatpush2.msra.mxu0 0.0
    %2948 = vmatprep.subr.mxu0 0.0
    %2949 = vmatpush2.msra.mxu0 0.0
    %2950 = vmatprep.subr.mxu0 0.0
    %2951 = vmatpush2.msra.mxu0 0.0
    %2952 = vmatprep.subr.mxu0 0.0
    %2953 = vmatpush2.msra.mxu0 0.0
    %2954 = vmatprep.subr.mxu0 0.0
    %2955 = vmatpush2.msra.mxu0 0.0
    %2956 = vmatprep.subr.mxu0 0.0
    %2957 = vmatpush2.msra.mxu0 0.0
    %2958 = vmatprep.subr.mxu0 0.0
    %2959 = vmatpush2.msra.mxu0 0.0
    %2960 = vmatprep.mubr.f32.mxu0 0.0
    %2961 = vmatmul.mubr.f32.gmra.mxu0 %v2894
    %v2962 = vpop.f32.mrf.mxu0
    %v2963 = vadd.f32 %v2891, %v2962
    %v2964 = vpop.f32.mrf.mxu0
    %2965 = vdwg.mxu0
    %vm2966 = vcmask 9216
    %v2967 = vsel %vm2966, %v2963, -inf
    %2968 = vmax.xlane.f32.xlu0 %v2967
    %v2969 = vpop.xlane.xlu0 %2968
    %v2970 = vsub.f32 %v2963, %v2969
    %v2971 = vmul.f32 %v2970, 1.442695
    %v2972 = vpow.pop %v2971
    %v2973 = vsel %vm2966, %v2972, 0.0
    %2974 = vadd.xlane.f32.xlu0 %v2973
    %v2975 = vpop.xlane.xlu0 %2974
    %v2976 = vlog2.pop %v2975
    %v2977 = vmul.f32 %v2976, 0.6931472
    %v2978 = vadd.f32 %v2969, %v2977
    %v2979 = vsub.f32 %v2963, %v2978
    %2980 = vst.msk [vmem:[#allocation2] sm:$0x3] %vm2966, %v2979
    // Predicated region
    $region66: #{meth_spect_integrator.1} parent=1 // pred_check
      _
    $region67: #{meth_spect_integrator.1} parent=1 // pred_check_branch
      %2982 = sbr.rel (0) target = $region69
    $region68: #{meth_spect_integrator.1} parent=1 // pred_region
      %s2984 = ssub.s32 32, 32
      %2985 = vsyncadd [#allocation3], %s2984
      %s2987 = sshll.u32 [#allocation2], 4
      %s2988 = int_to_ptr.vmem [resolvable:$true] %s2987
      %2990 = dma.vmem_to_hbm [thread:$0]  %s2988, 32, %s16, [#allocation3]
    $region69: #{meth_spect_integrator.1} parent=1 // pred_fallthru
      _
    // Predicated region
    $region70: #{meth_spect_integrator.1} parent=1 // pred_check
      _
    $region71: #{meth_spect_integrator.1} parent=1 // pred_check_branch
      %2992 = sbr.rel (0) target = $region73
    $region72: #{meth_spect_integrator.1} parent=1 // pred_region
      %2993 = dma.done [#allocation3], 32
    $region73: #{meth_spect_integrator.1} parent=1 // pred_fallthru
      _
    %2994 = vsyncpa [#allocation3], 1

</llo_original>
